<compile_context>
chip_gen: v7x
topology: tpu7x:2x2x1
jax: 0.10.0
libtpu: 0.0.40
codegen_flags: <defaults>
</compile_context>

<pallas_src>
import functools

import jax
import jax.numpy as jnp
from jax import lax
from jax.experimental import pallas as pl
from jax.experimental.pallas import tpu as pltpu


# ----------------------- 1. fused WordRep + BiGRU encoder -------------------- #

def _encoder_kernel(idsf_ref, idsb_ref, tab_ref, winf_ref, winb_ref, bin_ref,
                    whh_ref, bhh_ref, out_ref, gx_ref, *, t_len, batch, hidden,
                    vocab):
    m = t_len * batch
    h2 = 2 * hidden

    # --- embedding gather as a one-hot MXU matmul on the VMEM-resident table ---
    tab = tab_ref[...]                                            # (V, E_pad)
    iota_v = lax.broadcasted_iota(jnp.int32, (m, vocab), 1)
    onehot_f = (idsf_ref[...] == iota_v).astype(jnp.float32)      # (M, V)
    onehot_b = (idsb_ref[...] == iota_v).astype(jnp.float32)      # time-reversed ids
    x_f = jnp.dot(onehot_f, tab, preferred_element_type=jnp.float32)   # (M, E_pad)
    x_b = jnp.dot(onehot_b, tab, preferred_element_type=jnp.float32)

    # --- input projections for BOTH directions, hoisted out of the recurrence ---
    # Gate layout along the 3*2H = 384 lane axis: [r_f|r_b | z_f|z_b | n_f|n_b];
    # every gate block is 128-lane aligned.  The bwd rows are already
    # time-reversed (row s holds input time T-1-s), so the serial loop below
    # reads a single row per step for both directions.
    gx_ref[...] = (jnp.dot(x_f, winf_ref[...], preferred_element_type=jnp.float32)
                   + jnp.dot(x_b, winb_ref[...], preferred_element_type=jnp.float32)
                   + bin_ref[...])                                # (M, 3*2H)

    # --- fused fwd+bwd GRU recurrence: one (B,2H)x(2H,3*2H) matmul per step ---
    whh = whh_ref[...]
    bhh = bhh_ref[...]
    h_cat = jnp.zeros((batch, h2), jnp.float32)                   # [h_fwd | h_bwd]
    for s in range(t_len):                                        # static unroll (T small)
        gx_s = gx_ref[s * batch:(s + 1) * batch, :]               # (B, 384)
        gh = jnp.dot(h_cat, whh, preferred_element_type=jnp.float32) + bhh
        r = jax.nn.sigmoid(gx_s[:, 0:h2] + gh[:, 0:h2])
        z = jax.nn.sigmoid(gx_s[:, h2:2 * h2] + gh[:, h2:2 * h2])
        n = jnp.tanh(gx_s[:, 2 * h2:3 * h2] + r * gh[:, 2 * h2:3 * h2])
        h_cat = (1.0 - z) * n + z * h_cat
        # fwd half belongs to time s, bwd half to time t_len-1-s.
        out_ref[s, :, 0:hidden] = h_cat[:, 0:hidden]
        out_ref[t_len - 1 - s, :, hidden:h2] = h_cat[:, hidden:h2]


def encode(token_ids, table_pad, win_f, win_b, b_in, w_hh, b_hh):
    """token_ids:(B,T) int32 -> (T, B, 2H) f32 bidirectional GRU features."""
    b, t_len = token_ids.shape
    vocab, e_pad = table_pad.shape
    h2 = w_hh.shape[0]
    hidden = h2 // 2
    m = t_len * b
    g3 = 3 * h2

    # Time-major flattened token ids; the bwd copy is pre-reversed in time so
    # the recurrence needs no in-loop reversal (tiny int ops, done once in XLA).
    ids_f = token_ids.T.reshape(m, 1).astype(jnp.int32)
    ids_b = token_ids[:, ::-1].T.reshape(m, 1).astype(jnp.int32)

    const2 = lambda i: (0, 0)
    flops = (2 * (2 * m * vocab * e_pad) + 2 * (2 * m * e_pad * g3)
             + t_len * 2 * b * h2 * g3)
    bytes_accessed = 4 * (2 * m + vocab * e_pad + 2 * e_pad * g3 + h2 * g3
                          + 2 * g3 + t_len * b * h2)
    return pl.pallas_call(
        functools.partial(_encoder_kernel, t_len=t_len, batch=b, hidden=hidden,
                          vocab=vocab),
        out_shape=jax.ShapeDtypeStruct((t_len, b, h2), jnp.float32),
        grid_spec=pltpu.PrefetchScalarGridSpec(
            num_scalar_prefetch=0,
            grid=(1,),                                  # whole stage in one step
            in_specs=[
                pl.BlockSpec((m, 1), const2),           # fwd token ids
                pl.BlockSpec((m, 1), const2),           # bwd (time-reversed) ids
                pl.BlockSpec((vocab, e_pad), const2),   # embedding table (VMEM-resident)
                pl.BlockSpec((e_pad, g3), const2),      # fused input weights (fwd cols)
                pl.BlockSpec((e_pad, g3), const2),      # fused input weights (bwd cols)
                pl.BlockSpec((1, g3), const2),          # fused input bias
                pl.BlockSpec((h2, g3), const2),         # fused recurrent weights
                pl.BlockSpec((1, g3), const2),          # fused recurrent bias
            ],
            out_specs=pl.BlockSpec((t_len, b, h2), lambda i: (0, 0, 0)),
            scratch_shapes=[pltpu.VMEM((m, g3), jnp.float32)],  # hoisted gx
        ),
        compiler_params=pltpu.CompilerParams(dimension_semantics=("arbitrary",)),
        cost_estimate=pl.CostEstimate(flops=flops,
                                      transcendentals=3 * t_len * b * h2,
                                      bytes_accessed=bytes_accessed),
    )(ids_f, ids_b, table_pad, win_f, win_b, b_in, w_hh, b_hh)


# ---------------- 2. OutputLayer (attention + logits + focal loss) ----------- #

def _output_kernel(x_ref, u_ref, fw_ref, fb_ref, tgt_ref, y_ref, loss_ref, *,
                   batch, f_alpha, f_gamma, inv_count):
    x = x_ref[...]                                   # (T, B, D) native GRU layout
    u = u_ref[...]                                   # (Y, D)
    fw = fw_ref[...]                                 # (Y, D)
    fb = fb_ref[...]                                 # (Y, 1)
    total = jnp.zeros((1, 1), jnp.float32)
    for bi in range(batch):                          # static unroll (B tiny)
        x_b = x[:, bi, :]                            # (T, D)
        # att = U @ x^T (contract over D; no materialized transpose)
        att = lax.dot_general(u, x_b, (((1,), (1,)), ((), ())),
                              preferred_element_type=jnp.float32)        # (Y, T)
        att = att - jnp.max(att, axis=1, keepdims=True)
        p = jnp.exp(att)
        alpha_w = p / jnp.sum(p, axis=1, keepdims=True)                  # softmax over T
        mvec = jnp.dot(alpha_w, x_b, preferred_element_type=jnp.float32)  # (Y, D)
        y = jnp.sum(fw * mvec, axis=1, keepdims=True) + fb               # (Y, 1)
        y_ref[bi] = y

        # FocalLoss on BCE-with-logits (reduce=True -> mean over B*Y).
        t_b = tgt_ref[:, bi:bi + 1]                                       # (Y, 1)
        bce = jnp.maximum(y, 0.0) - y * t_b + jnp.log(1.0 + jnp.exp(-jnp.abs(y)))
        pt = jnp.exp(-bce)
        focal = f_alpha * (1.0 - pt) ** f_gamma * bce
        total = total + jnp.sum(focal, axis=0, keepdims=True)
    loss_ref[...] = total * inv_count


def output_layer(x_tbd, u_w, final_w, final_b, target, *, f_alpha, f_gamma):
    t_len, b, d = x_tbd.shape
    y_dim = u_w.shape[0]
    fb_col = final_b.reshape(y_dim, 1)
    tgt_yb = target.T.astype(jnp.float32)            # (Y, B)
    inv_count = 1.0 / float(b * y_dim)

    logits3, loss = pl.pallas_call(
        functools.partial(_output_kernel, batch=b, f_alpha=f_alpha,
                          f_gamma=f_gamma, inv_count=inv_count),
        out_shape=(jax.ShapeDtypeStruct((b, y_dim, 1), jnp.float32),
                   jax.ShapeDtypeStruct((1, 1), jnp.float32)),
        cost_estimate=pl.CostEstimate(
            flops=4 * b * y_dim * t_len * d,
            transcendentals=2 * b * y_dim * (t_len + 2),
            bytes_accessed=4 * (t_len * b * d + 2 * y_dim * d + 3 * b * y_dim)),
    )(x_tbd, u_w, final_w, fb_col, tgt_yb)
    return logits3.reshape(b, y_dim), loss[0, 0]


# ----------------------- weight packing (one-time, host/XLA) ----------------- #

def pack_gru_params(wih_f, whh_f, bih_f, bhh_f, wih_b, whh_b, bih_b, bhh_b,
                    e_pad):
    """Pack PyTorch-layout GRU weights into the fused, gate-aligned layout:
    3*2H lanes = [r_f|r_b | z_f|z_b | n_f|n_b], each gate block 128-aligned."""
    h = whh_f.shape[1]
    e = wih_f.shape[1]
    h2 = 2 * h
    g3 = 3 * h2
    win_f = jnp.zeros((e_pad, g3), jnp.float32)
    win_b = jnp.zeros((e_pad, g3), jnp.float32)
    w_hh = jnp.zeros((h2, g3), jnp.float32)
    b_in = jnp.zeros((1, g3), jnp.float32)
    b_hh = jnp.zeros((1, g3), jnp.float32)
    for g in range(3):
        rows = slice(g * h, (g + 1) * h)          # gate rows in torch layout
        cf = slice(g * h2, g * h2 + h)            # fwd lanes of gate g
        cb = slice(g * h2 + h, (g + 1) * h2)      # bwd lanes of gate g
        win_f = win_f.at[:e, cf].set(wih_f[rows, :].T)
        win_b = win_b.at[:e, cb].set(wih_b[rows, :].T)
        w_hh = w_hh.at[0:h, cf].set(whh_f[rows, :].T)
        w_hh = w_hh.at[h:h2, cb].set(whh_b[rows, :].T)
        b_in = b_in.at[0, cf].set(bih_f[rows])
        b_in = b_in.at[0, cb].set(bih_b[rows])
        b_hh = b_hh.at[0, cf].set(bhh_f[rows])
        b_hh = b_hh.at[0, cb].set(bhh_b[rows])
    return win_f, win_b, b_in, w_hh, b_hh


# ------------------------------ full forward -------------------------------- #

def rnn_model_forward(token_ids, target, params, *, f_alpha=1.0, f_gamma=2):
    """Eval-mode RNNmodel forward: returns (logits, focal_loss)."""
    h = encode(token_ids, params["table_pad"], params["win_f"], params["win_b"],
               params["b_in"], params["w_hh"], params["b_hh"])     # (T, B, 2H)
    return output_layer(h, params["u_w"], params["final_w"], params["final_b"],
                        target, f_alpha=f_alpha, f_gamma=f_gamma)


# --------------------------- pure-JAX reference ------------------------------ #

def _ref_forward(token_ids, target, raw):
    emb = raw["embed"][token_ids]                    # (B, T, E)
    hdim = raw["whh_f"].shape[1]

    def gru_dir(wih, whh, bih, bhh, reverse):
        x_tbe = jnp.transpose(emb, (1, 0, 2))
        if reverse:
            x_tbe = x_tbe[::-1]

        def step(h, x_t):
            gx = x_t @ wih.T + bih
            gh = h @ whh.T + bhh
            r = jax.nn.sigmoid(gx[:, :hdim] + gh[:, :hdim])
            z = jax.nn.sigmoid(gx[:, hdim:2 * hdim] + gh[:, hdim:2 * hdim])
            n = jnp.tanh(gx[:, 2 * hdim:] + r * gh[:, 2 * hdim:])
            h_new = (1.0 - z) * n + z * h
            return h_new, h_new

        h0 = jnp.zeros((x_tbe.shape[1], hdim), jnp.float32)
        _, hs = lax.scan(step, h0, x_tbe)
        if reverse:
            hs = hs[::-1]
        return jnp.transpose(hs, (1, 0, 2))          # (B, T, H)

    hf = gru_dir(raw["wih_f"], raw["whh_f"], raw["bih_f"], raw["bhh_f"], False)
    hb = gru_dir(raw["wih_b"], raw["whh_b"], raw["bih_b"], raw["bhh_b"], True)
    x = jnp.concatenate([hf, hb], axis=-1)           # (B, T, 2H)

    att = jnp.einsum("yd,btd->byt", raw["u_w"], x)
    alpha = jax.nn.softmax(att, axis=2)
    m = jnp.einsum("byt,btd->byd", alpha, x)
    y = jnp.sum(raw["final_w"][None] * m, axis=2) + raw["final_b"][None]

    bce = jnp.maximum(y, 0.0) - y * target + jnp.log(1.0 + jnp.exp(-jnp.abs(y)))
    pt = jnp.exp(-bce)
    focal = raw["f_alpha"] * (1.0 - pt) ** raw["f_gamma"] * bce
    return y, jnp.mean(focal)


# ----------------------------------- main ------------------------------------ #

if __name__ == "__main__":
    batch, seq_len = 2, 16
    vocab, embed_size = 50, 100        # GRU input size is hard-coded to 100
    nhid, Y = 64, 16                   # bidirectional -> OutputLayer input = 128
    f_alpha, f_gamma = 1.0, 2          # FocalLoss defaults
    E_PAD = 128                        # embedding feature axis padded to 128 lanes

    key = jax.random.PRNGKey(0)
    k_emb, k_gf, k_gb, k_u, k_fw, k_fb, k_ids, k_tgt = jax.random.split(key, 8)

    embed_tbl = 0.1 * jax.random.normal(k_emb, (vocab, embed_size), jnp.float32)
    embed_tbl = embed_tbl.at[0].set(0.0)             # nn.Embedding(padding_idx=0)

    def gru_weights(k):
        k1, k2, k3, k4 = jax.random.split(k, 4)
        s = nhid ** -0.5
        wih = s * jax.random.normal(k1, (3 * nhid, embed_size), jnp.float32)
        whh = s * jax.random.normal(k2, (3 * nhid, nhid), jnp.float32)
        bih = s * jax.random.normal(k3, (3 * nhid,), jnp.float32)
        bhh = s * jax.random.normal(k4, (3 * nhid,), jnp.float32)
        return wih, whh, bih, bhh

    wih_f, whh_f, bih_f, bhh_f = gru_weights(k_gf)
    wih_b, whh_b, bih_b, bhh_b = gru_weights(k_gb)

    d_out = 2 * nhid
    u_w = 0.1 * jax.random.normal(k_u, (Y, d_out), jnp.float32)
    final_w = 0.1 * jax.random.normal(k_fw, (Y, d_out), jnp.float32)
    final_b = 0.05 * jax.random.normal(k_fb, (Y,), jnp.float32)

    token_ids = jax.random.randint(k_ids, (batch, seq_len), 0, vocab, dtype=jnp.int32)
    target = jax.random.bernoulli(k_tgt, 0.3, (batch, Y)).astype(jnp.float32)

    # Kernel-side layouts: embedding table zero-padded 100->128 lanes; GRU
    # weights packed into the fused, gate-aligned [r|z|n] x [fwd|bwd] layout.
    table_pad = jnp.zeros((vocab, E_PAD), jnp.float32).at[:, :embed_size].set(embed_tbl)
    win_f, win_b, b_in, w_hh, b_hh = pack_gru_params(
        wih_f, whh_f, bih_f, bhh_f, wih_b, whh_b, bih_b, bhh_b, E_PAD)

    params = {
        "table_pad": table_pad,
        "win_f": win_f, "win_b": win_b, "b_in": b_in,
        "w_hh": w_hh, "b_hh": b_hh,
        "u_w": u_w, "final_w": final_w, "final_b": final_b,
    }
    raw = {
        "embed": embed_tbl,
        "wih_f": wih_f, "whh_f": whh_f, "bih_f": bih_f, "bhh_f": bhh_f,
        "wih_b": wih_b, "whh_b": whh_b, "bih_b": bih_b, "bhh_b": bhh_b,
        "u_w": u_w, "final_w": final_w, "final_b": final_b,
        "f_alpha": f_alpha, "f_gamma": f_gamma,
    }

    logits, loss = rnn_model_forward(token_ids, target, params,
                                     f_alpha=f_alpha, f_gamma=f_gamma)
    logits = jax.block_until_ready(logits)
    loss = jax.block_until_ready(loss)

    ref_logits, ref_loss = _ref_forward(token_ids, target, raw)
    assert logits.shape == (batch, Y), (logits.shape, (batch, Y))
    assert jnp.allclose(logits, ref_logits, atol=2e-3, rtol=2e-3), \
        float(jnp.max(jnp.abs(logits - ref_logits)))
    assert jnp.allclose(loss, ref_loss, atol=2e-3, rtol=2e-3), \
        (float(loss), float(ref_loss))

    print("KERNEL_OK")
</pallas_src>

<mosaic_0001>
module attributes {stable_mosaic.version = 11 : i64} {
  func.func @_encoder_kernel(%arg0: i32, %arg1: memref<32x1xi32, #tpu.memory_space<vmem>>, %arg2: memref<32x1xi32, #tpu.memory_space<vmem>>, %arg3: memref<50x128xf32, #tpu.memory_space<vmem>>, %arg4: memref<128x384xf32, #tpu.memory_space<vmem>>, %arg5: memref<128x384xf32, #tpu.memory_space<vmem>>, %arg6: memref<1x384xf32, #tpu.memory_space<vmem>>, %arg7: memref<128x384xf32, #tpu.memory_space<vmem>>, %arg8: memref<1x384xf32, #tpu.memory_space<vmem>>, %arg9: memref<16x2x128xf32, #tpu.memory_space<vmem>>, %arg10: memref<32x384xf32, #tpu.memory_space<vmem>>) attributes {dimension_semantics = [#tpu.dimension_semantics<arbitrary>], iteration_bounds = array<i64: 1>, scalar_prefetch = 0 : i64, scratch_operands = 1 : i64, tpu.core_type = #tpu.core_type<tc>, window_params = [{pipeline_mode = #tpu.pipeline_mode<synchronous>, transform_indices = @transform_0, window_bounds = array<i64: 32, 1>}, {pipeline_mode = #tpu.pipeline_mode<synchronous>, transform_indices = @transform_1, window_bounds = array<i64: 32, 1>}, {pipeline_mode = #tpu.pipeline_mode<synchronous>, transform_indices = @transform_2, window_bounds = array<i64: 50, 128>}, {pipeline_mode = #tpu.pipeline_mode<synchronous>, transform_indices = @transform_3, window_bounds = array<i64: 128, 384>}, {pipeline_mode = #tpu.pipeline_mode<synchronous>, transform_indices = @transform_4, window_bounds = array<i64: 128, 384>}, {pipeline_mode = #tpu.pipeline_mode<synchronous>, transform_indices = @transform_5, window_bounds = array<i64: 1, 384>}, {pipeline_mode = #tpu.pipeline_mode<synchronous>, transform_indices = @transform_6, window_bounds = array<i64: 128, 384>}, {pipeline_mode = #tpu.pipeline_mode<synchronous>, transform_indices = @transform_7, window_bounds = array<i64: 1, 384>}, {pipeline_mode = #tpu.pipeline_mode<synchronous>, transform_indices = @transform_8, window_bounds = array<i64: 16, 2, 128>}]} {
    %c0 = arith.constant 0 : index
    %c0_0 = arith.constant 0 : index
    %0 = vector.load %arg3[%c0, %c0_0] : memref<50x128xf32, #tpu.memory_space<vmem>>, vector<50x128xf32>
    %1 = tpu.iota {dimensions = array<i32: 1>} : vector<32x50xi32>
    %c0_1 = arith.constant 0 : index
    %c0_2 = arith.constant 0 : index
    %2 = vector.load %arg1[%c0_1, %c0_2] : memref<32x1xi32, #tpu.memory_space<vmem>>, vector<32x1xi32>
    %3 = vector.broadcast %2 : vector<32x1xi32> to vector<32x50xi32>
    %4 = arith.cmpi eq, %3, %1 : vector<32x50xi32>
    %5 = arith.extui %4 : vector<32x50xi1> to vector<32x50xi32>
    %6 = arith.sitofp %5 : vector<32x50xi32> to vector<32x50xf32>
    %c0_3 = arith.constant 0 : index
    %c0_4 = arith.constant 0 : index
    %7 = vector.load %arg2[%c0_3, %c0_4] : memref<32x1xi32, #tpu.memory_space<vmem>>, vector<32x1xi32>
    %8 = vector.broadcast %7 : vector<32x1xi32> to vector<32x50xi32>
    %9 = arith.cmpi eq, %8, %1 : vector<32x50xi32>
    %10 = arith.extui %9 : vector<32x50xi1> to vector<32x50xi32>
    %11 = arith.sitofp %10 : vector<32x50xi32> to vector<32x50xf32>
    %cst = arith.constant dense<0.000000e+00> : vector<32x128xf32>
    %12 = tpu.matmul %6, %0, %cst {dimension_numbers = #tpu.dot_dimension_numbers<[1], [0], [0], [1], [0, 0, 1, 1], [], []>} : vector<32x50xf32>, vector<50x128xf32>, vector<32x128xf32> -> vector<32x128xf32>
    %cst_5 = arith.constant dense<0.000000e+00> : vector<32x128xf32>
    %13 = tpu.matmul %11, %0, %cst_5 {dimension_numbers = #tpu.dot_dimension_numbers<[1], [0], [0], [1], [0, 0, 1, 1], [], []>} : vector<32x50xf32>, vector<50x128xf32>, vector<32x128xf32> -> vector<32x128xf32>
    %c0_6 = arith.constant 0 : index
    %c0_7 = arith.constant 0 : index
    %14 = vector.load %arg4[%c0_6, %c0_7] : memref<128x384xf32, #tpu.memory_space<vmem>>, vector<128x384xf32>
    %cst_8 = arith.constant dense<0.000000e+00> : vector<32x384xf32>
    %15 = tpu.matmul %12, %14, %cst_8 {dimension_numbers = #tpu.dot_dimension_numbers<[1], [0], [0], [1], [0, 0, 1, 1], [], []>} : vector<32x128xf32>, vector<128x384xf32>, vector<32x384xf32> -> vector<32x384xf32>
    %c0_9 = arith.constant 0 : index
    %c0_10 = arith.constant 0 : index
    %16 = vector.load %arg5[%c0_9, %c0_10] : memref<128x384xf32, #tpu.memory_space<vmem>>, vector<128x384xf32>
    %cst_11 = arith.constant dense<0.000000e+00> : vector<32x384xf32>
    %17 = tpu.matmul %13, %16, %cst_11 {dimension_numbers = #tpu.dot_dimension_numbers<[1], [0], [0], [1], [0, 0, 1, 1], [], []>} : vector<32x128xf32>, vector<128x384xf32>, vector<32x384xf32> -> vector<32x384xf32>
    %18 = arith.addf %15, %17 : vector<32x384xf32>
    %c0_12 = arith.constant 0 : index
    %c0_13 = arith.constant 0 : index
    %19 = vector.load %arg6[%c0_12, %c0_13] : memref<1x384xf32, #tpu.memory_space<vmem>>, vector<1x384xf32>
    %20 = vector.broadcast %19 : vector<1x384xf32> to vector<32x384xf32>
    %21 = arith.addf %18, %20 : vector<32x384xf32>
    %c0_14 = arith.constant 0 : index
    %c0_15 = arith.constant 0 : index
    %22 = vector.load %arg10[%c0_14, %c0_15] : memref<32x384xf32, #tpu.memory_space<vmem>>, vector<32x384xf32>
    tpu.vector_store %arg10[%c0_14, %c0_15], %21 {strides = array<i32>} : memref<32x384xf32, #tpu.memory_space<vmem>>, vector<32x384xf32>,
    %c0_16 = arith.constant 0 : index
    %c0_17 = arith.constant 0 : index
    %23 = vector.load %arg7[%c0_16, %c0_17] : memref<128x384xf32, #tpu.memory_space<vmem>>, vector<128x384xf32>
    %c0_18 = arith.constant 0 : index
    %c0_19 = arith.constant 0 : index
    %24 = vector.load %arg8[%c0_18, %c0_19] : memref<1x384xf32, #tpu.memory_space<vmem>>, vector<1x384xf32>
    %cst_20 = arith.constant 0.000000e+00 : f32
    %25 = vector.broadcast %cst_20 : f32 to vector<2x128xf32>
    %c0_21 = arith.constant 0 : index
    %c0_22 = arith.constant 0 : index
    %26 = vector.load %arg10[%c0_21, %c0_22] : memref<32x384xf32, #tpu.memory_space<vmem>>, vector<2x384xf32>
    %cst_23 = arith.constant dense<0.000000e+00> : vector<2x384xf32>
    %27 = tpu.matmul %25, %23, %cst_23 {dimension_numbers = #tpu.dot_dimension_numbers<[1], [0], [0], [1], [0, 0, 1, 1], [], []>} : vector<2x128xf32>, vector<128x384xf32>, vector<2x384xf32> -> vector<2x384xf32>
    %28 = vector.broadcast %24 : vector<1x384xf32> to vector<2x384xf32>
    %29 = arith.addf %27, %28 : vector<2x384xf32>
    %30 = vector.extract_strided_slice %26 {offsets = [0, 0], sizes = [2, 128], strides = [1, 1]} : vector<2x384xf32> to vector<2x128xf32>
    %31 = vector.extract_strided_slice %29 {offsets = [0, 0], sizes = [2, 128], strides = [1, 1]} : vector<2x384xf32> to vector<2x128xf32>
    %32 = arith.addf %30, %31 : vector<2x128xf32>
    %33 = arith.negf %32 : vector<2x128xf32>
    %34 = math.exp %33 : vector<2x128xf32>
    %cst_24 = arith.constant 1.000000e+00 : f32
    %35 = vector.broadcast %cst_24 : f32 to vector<2x128xf32>
    %36 = arith.addf %35, %34 : vector<2x128xf32>
    %37 = arith.divf %35, %36 : vector<2x128xf32>
    %38 = vector.extract_strided_slice %26 {offsets = [0, 128], sizes = [2, 128], strides = [1, 1]} : vector<2x384xf32> to vector<2x128xf32>
    %39 = vector.extract_strided_slice %29 {offsets = [0, 128], sizes = [2, 128], strides = [1, 1]} : vector<2x384xf32> to vector<2x128xf32>
    %40 = arith.addf %38, %39 : vector<2x128xf32>
    %41 = arith.negf %40 : vector<2x128xf32>
    %42 = math.exp %41 : vector<2x128xf32>
    %cst_25 = arith.constant 1.000000e+00 : f32
    %43 = vector.broadcast %cst_25 : f32 to vector<2x128xf32>
    %44 = arith.addf %43, %42 : vector<2x128xf32>
    %45 = arith.divf %43, %44 : vector<2x128xf32>
    %46 = vector.extract_strided_slice %26 {offsets = [0, 256], sizes = [2, 128], strides = [1, 1]} : vector<2x384xf32> to vector<2x128xf32>
    %47 = vector.extract_strided_slice %29 {offsets = [0, 256], sizes = [2, 128], strides = [1, 1]} : vector<2x384xf32> to vector<2x128xf32>
    %48 = arith.mulf %37, %47 : vector<2x128xf32>
    %49 = arith.addf %46, %48 : vector<2x128xf32>
    %50 = math.tanh %49 : vector<2x128xf32>
    %cst_26 = arith.constant 1.000000e+00 : f32
    %51 = vector.broadcast %cst_26 : f32 to vector<2x128xf32>
    %52 = arith.subf %51, %45 : vector<2x128xf32>
    %53 = arith.mulf %52, %50 : vector<2x128xf32>
    %54 = arith.mulf %45, %25 : vector<2x128xf32>
    %55 = arith.addf %53, %54 : vector<2x128xf32>
    %56 = vector.extract_strided_slice %55 {offsets = [0, 0], sizes = [2, 64], strides = [1, 1]} : vector<2x128xf32> to vector<2x64xf32>
    %c0_27 = arith.constant 0 : index
    %c0_28 = arith.constant 0 : index
    %c0_29 = arith.constant 0 : index
    %57 = vector.load %arg9[%c0_27, %c0_28, %c0_29] : memref<16x2x128xf32, #tpu.memory_space<vmem>>, vector<1x2x64xf32>
    %58 = vector.shape_cast %57 : vector<1x2x64xf32> to vector<2x64xf32>
    %59 = vector.shape_cast %56 : vector<2x64xf32> to vector<1x2x64xf32>
    tpu.vector_store %arg9[%c0_27, %c0_28, %c0_29], %59 {strides = array<i32>} : memref<16x2x128xf32, #tpu.memory_space<vmem>>, vector<1x2x64xf32>,
    %60 = vector.extract_strided_slice %55 {offsets = [0, 64], sizes = [2, 64], strides = [1, 1]} : vector<2x128xf32> to vector<2x64xf32>
    %c15 = arith.constant 15 : index
    %c0_30 = arith.constant 0 : index
    %c64 = arith.constant 64 : index
    %61 = vector.load %arg9[%c15, %c0_30, %c64] : memref<16x2x128xf32, #tpu.memory_space<vmem>>, vector<1x2x64xf32>
    %62 = vector.shape_cast %61 : vector<1x2x64xf32> to vector<2x64xf32>
    %63 = vector.shape_cast %60 : vector<2x64xf32> to vector<1x2x64xf32>
    tpu.vector_store %arg9[%c15, %c0_30, %c64], %63 {strides = array<i32>} : memref<16x2x128xf32, #tpu.memory_space<vmem>>, vector<1x2x64xf32>,
    %c2 = arith.constant 2 : index
    %c0_31 = arith.constant 0 : index
    %64 = vector.load %arg10[%c2, %c0_31] : memref<32x384xf32, #tpu.memory_space<vmem>>, vector<2x384xf32>
    %cst_32 = arith.constant dense<0.000000e+00> : vector<2x384xf32>
    %65 = tpu.matmul %55, %23, %cst_32 {dimension_numbers = #tpu.dot_dimension_numbers<[1], [0], [0], [1], [0, 0, 1, 1], [], []>} : vector<2x128xf32>, vector<128x384xf32>, vector<2x384xf32> -> vector<2x384xf32>
    %66 = vector.broadcast %24 : vector<1x384xf32> to vector<2x384xf32>
    %67 = arith.addf %65, %66 : vector<2x384xf32>
    %68 = vector.extract_strided_slice %64 {offsets = [0, 0], sizes = [2, 128], strides = [1, 1]} : vector<2x384xf32> to vector<2x128xf32>
    %69 = vector.extract_strided_slice %67 {offsets = [0, 0], sizes = [2, 128], strides = [1, 1]} : vector<2x384xf32> to vector<2x128xf32>
    %70 = arith.addf %68, %69 : vector<2x128xf32>
    %71 = arith.negf %70 : vector<2x128xf32>
    %72 = math.exp %71 : vector<2x128xf32>
    %cst_33 = arith.constant 1.000000e+00 : f32
    %73 = vector.broadcast %cst_33 : f32 to vector<2x128xf32>
    %74 = arith.addf %73, %72 : vector<2x128xf32>
    %75 = arith.divf %73, %74 : vector<2x128xf32>
    %76 = vector.extract_strided_slice %64 {offsets = [0, 128], sizes = [2, 128], strides = [1, 1]} : vector<2x384xf32> to vector<2x128xf32>
    %77 = vector.extract_strided_slice %67 {offsets = [0, 128], sizes = [2, 128], strides = [1, 1]} : vector<2x384xf32> to vector<2x128xf32>
    %78 = arith.addf %76, %77 : vector<2x128xf32>
    %79 = arith.negf %78 : vector<2x128xf32>
    %80 = math.exp %79 : vector<2x128xf32>
    %cst_34 = arith.constant 1.000000e+00 : f32
    %81 = vector.broadcast %cst_34 : f32 to vector<2x128xf32>
    %82 = arith.addf %81, %80 : vector<2x128xf32>
    %83 = arith.divf %81, %82 : vector<2x128xf32>
    %84 = vector.extract_strided_slice %64 {offsets = [0, 256], sizes = [2, 128], strides = [1, 1]} : vector<2x384xf32> to vector<2x128xf32>
    %85 = vector.extract_strided_slice %67 {offsets = [0, 256], sizes = [2, 128], strides = [1, 1]} : vector<2x384xf32> to vector<2x128xf32>
    %86 = arith.mulf %75, %85 : vector<2x128xf32>
    %87 = arith.addf %84, %86 : vector<2x128xf32>
    %88 = math.tanh %87 : vector<2x128xf32>
    %cst_35 = arith.constant 1.000000e+00 : f32
    %89 = vector.broadcast %cst_35 : f32 to vector<2x128xf32>
    %90 = arith.subf %89, %83 : vector<2x128xf32>
    %91 = arith.mulf %90, %88 : vector<2x128xf32>
    %92 = arith.mulf %83, %55 : vector<2x128xf32>
    %93 = arith.addf %91, %92 : vector<2x128xf32>
    %94 = vector.extract_strided_slice %93 {offsets = [0, 0], sizes = [2, 64], strides = [1, 1]} : vector<2x128xf32> to vector<2x64xf32>
    %c1 = arith.constant 1 : index
    %c0_36 = arith.constant 0 : index
    %c0_37 = arith.constant 0 : index
    %95 = vector.load %arg9[%c1, %c0_36, %c0_37] : memref<16x2x128xf32, #tpu.memory_space<vmem>>, vector<1x2x64xf32>
    %96 = vector.shape_cast %95 : vector<1x2x64xf32> to vector<2x64xf32>
    %97 = vector.shape_cast %94 : vector<2x64xf32> to vector<1x2x64xf32>
    tpu.vector_store %arg9[%c1, %c0_36, %c0_37], %97 {strides = array<i32>} : memref<16x2x128xf32, #tpu.memory_space<vmem>>, vector<1x2x64xf32>,
    %98 = vector.extract_strided_slice %93 {offsets = [0, 64], sizes = [2, 64], strides = [1, 1]} : vector<2x128xf32> to vector<2x64xf32>
    %c14 = arith.constant 14 : index
    %c0_38 = arith.constant 0 : index
    %c64_39 = arith.constant 64 : index
    %99 = vector.load %arg9[%c14, %c0_38, %c64_39] : memref<16x2x128xf32, #tpu.memory_space<vmem>>, vector<1x2x64xf32>
    %100 = vector.shape_cast %99 : vector<1x2x64xf32> to vector<2x64xf32>
    %101 = vector.shape_cast %98 : vector<2x64xf32> to vector<1x2x64xf32>
    tpu.vector_store %arg9[%c14, %c0_38, %c64_39], %101 {strides = array<i32>} : memref<16x2x128xf32, #tpu.memory_space<vmem>>, vector<1x2x64xf32>,
    %c4 = arith.constant 4 : index
    %c0_40 = arith.constant 0 : index
    %102 = vector.load %arg10[%c4, %c0_40] : memref<32x384xf32, #tpu.memory_space<vmem>>, vector<2x384xf32>
    %cst_41 = arith.constant dense<0.000000e+00> : vector<2x384xf32>
    %103 = tpu.matmul %93, %23, %cst_41 {dimension_numbers = #tpu.dot_dimension_numbers<[1], [0], [0], [1], [0, 0, 1, 1], [], []>} : vector<2x128xf32>, vector<128x384xf32>, vector<2x384xf32> -> vector<2x384xf32>
    %104 = vector.broadcast %24 : vector<1x384xf32> to vector<2x384xf32>
    %105 = arith.addf %103, %104 : vector<2x384xf32>
    %106 = vector.extract_strided_slice %102 {offsets = [0, 0], sizes = [2, 128], strides = [1, 1]} : vector<2x384xf32> to vector<2x128xf32>
    %107 = vector.extract_strided_slice %105 {offsets = [0, 0], sizes = [2, 128], strides = [1, 1]} : vector<2x384xf32> to vector<2x128xf32>
    %108 = arith.addf %106, %107 : vector<2x128xf32>
    %109 = arith.negf %108 : vector<2x128xf32>
    %110 = math.exp %109 : vector<2x128xf32>
    %cst_42 = arith.constant 1.000000e+00 : f32
    %111 = vector.broadcast %cst_42 : f32 to vector<2x128xf32>
    %112 = arith.addf %111, %110 : vector<2x128xf32>
    %113 = arith.divf %111, %112 : vector<2x128xf32>
    %114 = vector.extract_strided_slice %102 {offsets = [0, 128], sizes = [2, 128], strides = [1, 1]} : vector<2x384xf32> to vector<2x128xf32>
    %115 = vector.extract_strided_slice %105 {offsets = [0, 128], sizes = [2, 128], strides = [1, 1]} : vector<2x384xf32> to vector<2x128xf32>
    %116 = arith.addf %114, %115 : vector<2x128xf32>
    %117 = arith.negf %116 : vector<2x128xf32>
    %118 = math.exp %117 : vector<2x128xf32>
    %cst_43 = arith.constant 1.000000e+00 : f32
    %119 = vector.broadcast %cst_43 : f32 to vector<2x128xf32>
    %120 = arith.addf %119, %118 : vector<2x128xf32>
    %121 = arith.divf %119, %120 : vector<2x128xf32>
    %122 = vector.extract_strided_slice %102 {offsets = [0, 256], sizes = [2, 128], strides = [1, 1]} : vector<2x384xf32> to vector<2x128xf32>
    %123 = vector.extract_strided_slice %105 {offsets = [0, 256], sizes = [2, 128], strides = [1, 1]} : vector<2x384xf32> to vector<2x128xf32>
    %124 = arith.mulf %113, %123 : vector<2x128xf32>
    %125 = arith.addf %122, %124 : vector<2x128xf32>
    %126 = math.tanh %125 : vector<2x128xf32>
    %cst_44 = arith.constant 1.000000e+00 : f32
    %127 = vector.broadcast %cst_44 : f32 to vector<2x128xf32>
    %128 = arith.subf %127, %121 : vector<2x128xf32>
    %129 = arith.mulf %128, %126 : vector<2x128xf32>
    %130 = arith.mulf %121, %93 : vector<2x128xf32>
    %131 = arith.addf %129, %130 : vector<2x128xf32>
    %132 = vector.extract_strided_slice %131 {offsets = [0, 0], sizes = [2, 64], strides = [1, 1]} : vector<2x128xf32> to vector<2x64xf32>
    %c2_45 = arith.constant 2 : index
    %c0_46 = arith.constant 0 : index
    %c0_47 = arith.constant 0 : index
    %133 = vector.load %arg9[%c2_45, %c0_46, %c0_47] : memref<16x2x128xf32, #tpu.memory_space<vmem>>, vector<1x2x64xf32>
    %134 = vector.shape_cast %133 : vector<1x2x64xf32> to vector<2x64xf32>
    %135 = vector.shape_cast %132 : vector<2x64xf32> to vector<1x2x64xf32>
    tpu.vector_store %arg9[%c2_45, %c0_46, %c0_47], %135 {strides = array<i32>} : memref<16x2x128xf32, #tpu.memory_space<vmem>>, vector<1x2x64xf32>,
    %136 = vector.extract_strided_slice %131 {offsets = [0, 64], sizes = [2, 64], strides = [1, 1]} : vector<2x128xf32> to vector<2x64xf32>
    %c13 = arith.constant 13 : index
    %c0_48 = arith.constant 0 : index
    %c64_49 = arith.constant 64 : index
    %137 = vector.load %arg9[%c13, %c0_48, %c64_49] : memref<16x2x128xf32, #tpu.memory_space<vmem>>, vector<1x2x64xf32>
    %138 = vector.shape_cast %137 : vector<1x2x64xf32> to vector<2x64xf32>
    %139 = vector.shape_cast %136 : vector<2x64xf32> to vector<1x2x64xf32>
    tpu.vector_store %arg9[%c13, %c0_48, %c64_49], %139 {strides = array<i32>} : memref<16x2x128xf32, #tpu.memory_space<vmem>>, vector<1x2x64xf32>,
    %c6 = arith.constant 6 : index
    %c0_50 = arith.constant 0 : index
    %140 = vector.load %arg10[%c6, %c0_50] : memref<32x384xf32, #tpu.memory_space<vmem>>, vector<2x384xf32>
    %cst_51 = arith.constant dense<0.000000e+00> : vector<2x384xf32>
    %141 = tpu.matmul %131, %23, %cst_51 {dimension_numbers = #tpu.dot_dimension_numbers<[1], [0], [0], [1], [0, 0, 1, 1], [], []>} : vector<2x128xf32>, vector<128x384xf32>, vector<2x384xf32> -> vector<2x384xf32>
    %142 = vector.broadcast %24 : vector<1x384xf32> to vector<2x384xf32>
    %143 = arith.addf %141, %142 : vector<2x384xf32>
    %144 = vector.extract_strided_slice %140 {offsets = [0, 0], sizes = [2, 128], strides = [1, 1]} : vector<2x384xf32> to vector<2x128xf32>
    %145 = vector.extract_strided_slice %143 {offsets = [0, 0], sizes = [2, 128], strides = [1, 1]} : vector<2x384xf32> to vector<2x128xf32>
    %146 = arith.addf %144, %145 : vector<2x128xf32>
    %147 = arith.negf %146 : vector<2x128xf32>
    %148 = math.exp %147 : vector<2x128xf32>
    %cst_52 = arith.constant 1.000000e+00 : f32
    %149 = vector.broadcast %cst_52 : f32 to vector<2x128xf32>
    %150 = arith.addf %149, %148 : vector<2x128xf32>
    %151 = arith.divf %149, %150 : vector<2x128xf32>
    %152 = vector.extract_strided_slice %140 {offsets = [0, 128], sizes = [2, 128], strides = [1, 1]} : vector<2x384xf32> to vector<2x128xf32>
    %153 = vector.extract_strided_slice %143 {offsets = [0, 128], sizes = [2, 128], strides = [1, 1]} : vector<2x384xf32> to vector<2x128xf32>
    %154 = arith.addf %152, %153 : vector<2x128xf32>
    %155 = arith.negf %154 : vector<2x128xf32>
    %156 = math.exp %155 : vector<2x128xf32>
    %cst_53 = arith.constant 1.000000e+00 : f32
    %157 = vector.broadcast %cst_53 : f32 to vector<2x128xf32>
    %158 = arith.addf %157, %156 : vector<2x128xf32>
    %159 = arith.divf %157, %158 : vector<2x128xf32>
    %160 = vector.extract_strided_slice %140 {offsets = [0, 256], sizes = [2, 128], strides = [1, 1]} : vector<2x384xf32> to vector<2x128xf32>
    %161 = vector.extract_strided_slice %143 {offsets = [0, 256], sizes = [2, 128], strides = [1, 1]} : vector<2x384xf32> to vector<2x128xf32>
    %162 = arith.mulf %151, %161 : vector<2x128xf32>
    %163 = arith.addf %160, %162 : vector<2x128xf32>
    %164 = math.tanh %163 : vector<2x128xf32>
    %cst_54 = arith.constant 1.000000e+00 : f32
    %165 = vector.broadcast %cst_54 : f32 to vector<2x128xf32>
    %166 = arith.subf %165, %159 : vector<2x128xf32>
    %167 = arith.mulf %166, %164 : vector<2x128xf32>
    %168 = arith.mulf %159, %131 : vector<2x128xf32>
    %169 = arith.addf %167, %168 : vector<2x128xf32>
    %170 = vector.extract_strided_slice %169 {offsets = [0, 0], sizes = [2, 64], strides = [1, 1]} : vector<2x128xf32> to vector<2x64xf32>
    %c3 = arith.constant 3 : index
    %c0_55 = arith.constant 0 : index
    %c0_56 = arith.constant 0 : index
    %171 = vector.load %arg9[%c3, %c0_55, %c0_56] : memref<16x2x128xf32, #tpu.memory_space<vmem>>, vector<1x2x64xf32>
    %172 = vector.shape_cast %171 : vector<1x2x64xf32> to vector<2x64xf32>
    %173 = vector.shape_cast %170 : vector<2x64xf32> to vector<1x2x64xf32>
    tpu.vector_store %arg9[%c3, %c0_55, %c0_56], %173 {strides = array<i32>} : memref<16x2x128xf32, #tpu.memory_space<vmem>>, vector<1x2x64xf32>,
    %174 = vector.extract_strided_slice %169 {offsets = [0, 64], sizes = [2, 64], strides = [1, 1]} : vector<2x128xf32> to vector<2x64xf32>
    %c12 = arith.constant 12 : index
    %c0_57 = arith.constant 0 : index
    %c64_58 = arith.constant 64 : index
    %175 = vector.load %arg9[%c12, %c0_57, %c64_58] : memref<16x2x128xf32, #tpu.memory_space<vmem>>, vector<1x2x64xf32>
    %176 = vector.shape_cast %175 : vector<1x2x64xf32> to vector<2x64xf32>
    %177 = vector.shape_cast %174 : vector<2x64xf32> to vector<1x2x64xf32>
    tpu.vector_store %arg9[%c12, %c0_57, %c64_58], %177 {strides = array<i32>} : memref<16x2x128xf32, #tpu.memory_space<vmem>>, vector<1x2x64xf32>,
    %c8 = arith.constant 8 : index
    %c0_59 = arith.constant 0 : index
    %178 = vector.load %arg10[%c8, %c0_59] : memref<32x384xf32, #tpu.memory_space<vmem>>, vector<2x384xf32>
    %cst_60 = arith.constant dense<0.000000e+00> : vector<2x384xf32>
    %179 = tpu.matmul %169, %23, %cst_60 {dimension_numbers = #tpu.dot_dimension_numbers<[1], [0], [0], [1], [0, 0, 1, 1], [], []>} : vector<2x128xf32>, vector<128x384xf32>, vector<2x384xf32> -> vector<2x384xf32>
    %180 = vector.broadcast %24 : vector<1x384xf32> to vector<2x384xf32>
    %181 = arith.addf %179, %180 : vector<2x384xf32>
    %182 = vector.extract_strided_slice %178 {offsets = [0, 0], sizes = [2, 128], strides = [1, 1]} : vector<2x384xf32> to vector<2x128xf32>
    %183 = vector.extract_strided_slice %181 {offsets = [0, 0], sizes = [2, 128], strides = [1, 1]} : vector<2x384xf32> to vector<2x128xf32>
    %184 = arith.addf %182, %183 : vector<2x128xf32>
    %185 = arith.negf %184 : vector<2x128xf32>
    %186 = math.exp %185 : vector<2x128xf32>
    %cst_61 = arith.constant 1.000000e+00 : f32
    %187 = vector.broadcast %cst_61 : f32 to vector<2x128xf32>
    %188 = arith.addf %187, %186 : vector<2x128xf32>
    %189 = arith.divf %187, %188 : vector<2x128xf32>
    %190 = vector.extract_strided_slice %178 {offsets = [0, 128], sizes = [2, 128], strides = [1, 1]} : vector<2x384xf32> to vector<2x128xf32>
    %191 = vector.extract_strided_slice %181 {offsets = [0, 128], sizes = [2, 128], strides = [1, 1]} : vector<2x384xf32> to vector<2x128xf32>
    %192 = arith.addf %190, %191 : vector<2x128xf32>
    %193 = arith.negf %192 : vector<2x128xf32>
    %194 = math.exp %193 : vector<2x128xf32>
    %cst_62 = arith.constant 1.000000e+00 : f32
    %195 = vector.broadcast %cst_62 : f32 to vector<2x128xf32>
    %196 = arith.addf %195, %194 : vector<2x128xf32>
    %197 = arith.divf %195, %196 : vector<2x128xf32>
    %198 = vector.extract_strided_slice %178 {offsets = [0, 256], sizes = [2, 128], strides = [1, 1]} : vector<2x384xf32> to vector<2x128xf32>
    %199 = vector.extract_strided_slice %181 {offsets = [0, 256], sizes = [2, 128], strides = [1, 1]} : vector<2x384xf32> to vector<2x128xf32>
    %200 = arith.mulf %189, %199 : vector<2x128xf32>
    %201 = arith.addf %198, %200 : vector<2x128xf32>
    %202 = math.tanh %201 : vector<2x128xf32>
    %cst_63 = arith.constant 1.000000e+00 : f32
    %203 = vector.broadcast %cst_63 : f32 to vector<2x128xf32>
    %204 = arith.subf %203, %197 : vector<2x128xf32>
    %205 = arith.mulf %204, %202 : vector<2x128xf32>
    %206 = arith.mulf %197, %169 : vector<2x128xf32>
    %207 = arith.addf %205, %206 : vector<2x128xf32>
    %208 = vector.extract_strided_slice %207 {offsets = [0, 0], sizes = [2, 64], strides = [1, 1]} : vector<2x128xf32> to vector<2x64xf32>
    %c4_64 = arith.constant 4 : index
    %c0_65 = arith.constant 0 : index
    %c0_66 = arith.constant 0 : index
    %209 = vector.load %arg9[%c4_64, %c0_65, %c0_66] : memref<16x2x128xf32, #tpu.memory_space<vmem>>, vector<1x2x64xf32>
    %210 = vector.shape_cast %209 : vector<1x2x64xf32> to vector<2x64xf32>
    %211 = vector.shape_cast %208 : vector<2x64xf32> to vector<1x2x64xf32>
    tpu.vector_store %arg9[%c4_64, %c0_65, %c0_66], %211 {strides = array<i32>} : memref<16x2x128xf32, #tpu.memory_space<vmem>>, vector<1x2x64xf32>,
    %212 = vector.extract_strided_slice %207 {offsets = [0, 64], sizes = [2, 64], strides = [1, 1]} : vector<2x128xf32> to vector<2x64xf32>
    %c11 = arith.constant 11 : index
    %c0_67 = arith.constant 0 : index
    %c64_68 = arith.constant 64 : index
    %213 = vector.load %arg9[%c11, %c0_67, %c64_68] : memref<16x2x128xf32, #tpu.memory_space<vmem>>, vector<1x2x64xf32>
    %214 = vector.shape_cast %213 : vector<1x2x64xf32> to vector<2x64xf32>
    %215 = vector.shape_cast %212 : vector<2x64xf32> to vector<1x2x64xf32>
    tpu.vector_store %arg9[%c11, %c0_67, %c64_68], %215 {strides = array<i32>} : memref<16x2x128xf32, #tpu.memory_space<vmem>>, vector<1x2x64xf32>,
    %c10 = arith.constant 10 : index
    %c0_69 = arith.constant 0 : index
    %216 = vector.load %arg10[%c10, %c0_69] : memref<32x384xf32, #tpu.memory_space<vmem>>, vector<2x384xf32>
    %cst_70 = arith.constant dense<0.000000e+00> : vector<2x384xf32>
    %217 = tpu.matmul %207, %23, %cst_70 {dimension_numbers = #tpu.dot_dimension_numbers<[1], [0], [0], [1], [0, 0, 1, 1], [], []>} : vector<2x128xf32>, vector<128x384xf32>, vector<2x384xf32> -> vector<2x384xf32>
    %218 = vector.broadcast %24 : vector<1x384xf32> to vector<2x384xf32>
    %219 = arith.addf %217, %218 : vector<2x384xf32>
    %220 = vector.extract_strided_slice %216 {offsets = [0, 0], sizes = [2, 128], strides = [1, 1]} : vector<2x384xf32> to vector<2x128xf32>
    %221 = vector.extract_strided_slice %219 {offsets = [0, 0], sizes = [2, 128], strides = [1, 1]} : vector<2x384xf32> to vector<2x128xf32>
    %222 = arith.addf %220, %221 : vector<2x128xf32>
    %223 = arith.negf %222 : vector<2x128xf32>
    %224 = math.exp %223 : vector<2x128xf32>
    %cst_71 = arith.constant 1.000000e+00 : f32
    %225 = vector.broadcast %cst_71 : f32 to vector<2x128xf32>
    %226 = arith.addf %225, %224 : vector<2x128xf32>
    %227 = arith.divf %225, %226 : vector<2x128xf32>
    %228 = vector.extract_strided_slice %216 {offsets = [0, 128], sizes = [2, 128], strides = [1, 1]} : vector<2x384xf32> to vector<2x128xf32>
    %229 = vector.extract_strided_slice %219 {offsets = [0, 128], sizes = [2, 128], strides = [1, 1]} : vector<2x384xf32> to vector<2x128xf32>
    %230 = arith.addf %228, %229 : vector<2x128xf32>
    %231 = arith.negf %230 : vector<2x128xf32>
    %232 = math.exp %231 : vector<2x128xf32>
    %cst_72 = arith.constant 1.000000e+00 : f32
    %233 = vector.broadcast %cst_72 : f32 to vector<2x128xf32>
    %234 = arith.addf %233, %232 : vector<2x128xf32>
    %235 = arith.divf %233, %234 : vector<2x128xf32>
    %236 = vector.extract_strided_slice %216 {offsets = [0, 256], sizes = [2, 128], strides = [1, 1]} : vector<2x384xf32> to vector<2x128xf32>
    %237 = vector.extract_strided_slice %219 {offsets = [0, 256], sizes = [2, 128], strides = [1, 1]} : vector<2x384xf32> to vector<2x128xf32>
    %238 = arith.mulf %227, %237 : vector<2x128xf32>
    %239 = arith.addf %236, %238 : vector<2x128xf32>
    %240 = math.tanh %239 : vector<2x128xf32>
    %cst_73 = arith.constant 1.000000e+00 : f32
    %241 = vector.broadcast %cst_73 : f32 to vector<2x128xf32>
    %242 = arith.subf %241, %235 : vector<2x128xf32>
    %243 = arith.mulf %242, %240 : vector<2x128xf32>
    %244 = arith.mulf %235, %207 : vector<2x128xf32>
    %245 = arith.addf %243, %244 : vector<2x128xf32>
    %246 = vector.extract_strided_slice %245 {offsets = [0, 0], sizes = [2, 64], strides = [1, 1]} : vector<2x128xf32> to vector<2x64xf32>
    %c5 = arith.constant 5 : index
    %c0_74 = arith.constant 0 : index
    %c0_75 = arith.constant 0 : index
    %247 = vector.load %arg9[%c5, %c0_74, %c0_75] : memref<16x2x128xf32, #tpu.memory_space<vmem>>, vector<1x2x64xf32>
    %248 = vector.shape_cast %247 : vector<1x2x64xf32> to vector<2x64xf32>
    %249 = vector.shape_cast %246 : vector<2x64xf32> to vector<1x2x64xf32>
    tpu.vector_store %arg9[%c5, %c0_74, %c0_75], %249 {strides = array<i32>} : memref<16x2x128xf32, #tpu.memory_space<vmem>>, vector<1x2x64xf32>,
    %250 = vector.extract_strided_slice %245 {offsets = [0, 64], sizes = [2, 64], strides = [1, 1]} : vector<2x128xf32> to vector<2x64xf32>
    %c10_76 = arith.constant 10 : index
    %c0_77 = arith.constant 0 : index
    %c64_78 = arith.constant 64 : index
    %251 = vector.load %arg9[%c10_76, %c0_77, %c64_78] : memref<16x2x128xf32, #tpu.memory_space<vmem>>, vector<1x2x64xf32>
    %252 = vector.shape_cast %251 : vector<1x2x64xf32> to vector<2x64xf32>
    %253 = vector.shape_cast %250 : vector<2x64xf32> to vector<1x2x64xf32>
    tpu.vector_store %arg9[%c10_76, %c0_77, %c64_78], %253 {strides = array<i32>} : memref<16x2x128xf32, #tpu.memory_space<vmem>>, vector<1x2x64xf32>,
    %c12_79 = arith.constant 12 : index
    %c0_80 = arith.constant 0 : index
    %254 = vector.load %arg10[%c12_79, %c0_80] : memref<32x384xf32, #tpu.memory_space<vmem>>, vector<2x384xf32>
    %cst_81 = arith.constant dense<0.000000e+00> : vector<2x384xf32>
    %255 = tpu.matmul %245, %23, %cst_81 {dimension_numbers = #tpu.dot_dimension_numbers<[1], [0], [0], [1], [0, 0, 1, 1], [], []>} : vector<2x128xf32>, vector<128x384xf32>, vector<2x384xf32> -> vector<2x384xf32>
    %256 = vector.broadcast %24 : vector<1x384xf32> to vector<2x384xf32>
    %257 = arith.addf %255, %256 : vector<2x384xf32>
    %258 = vector.extract_strided_slice %254 {offsets = [0, 0], sizes = [2, 128], strides = [1, 1]} : vector<2x384xf32> to vector<2x128xf32>
    %259 = vector.extract_strided_slice %257 {offsets = [0, 0], sizes = [2, 128], strides = [1, 1]} : vector<2x384xf32> to vector<2x128xf32>
    %260 = arith.addf %258, %259 : vector<2x128xf32>
    %261 = arith.negf %260 : vector<2x128xf32>
    %262 = math.exp %261 : vector<2x128xf32>
    %cst_82 = arith.constant 1.000000e+00 : f32
    %263 = vector.broadcast %cst_82 : f32 to vector<2x128xf32>
    %264 = arith.addf %263, %262 : vector<2x128xf32>
    %265 = arith.divf %263, %264 : vector<2x128xf32>
    %266 = vector.extract_strided_slice %254 {offsets = [0, 128], sizes = [2, 128], strides = [1, 1]} : vector<2x384xf32> to vector<2x128xf32>
    %267 = vector.extract_strided_slice %257 {offsets = [0, 128], sizes = [2, 128], strides = [1, 1]} : vector<2x384xf32> to vector<2x128xf32>
    %268 = arith.addf %266, %267 : vector<2x128xf32>
    %269 = arith.negf %268 : vector<2x128xf32>
    %270 = math.exp %269 : vector<2x128xf32>
    %cst_83 = arith.constant 1.000000e+00 : f32
    %271 = vector.broadcast %cst_83 : f32 to vector<2x128xf32>
    %272 = arith.addf %271, %270 : vector<2x128xf32>
    %273 = arith.divf %271, %272 : vector<2x128xf32>
    %274 = vector.extract_strided_slice %254 {offsets = [0, 256], sizes = [2, 128], strides = [1, 1]} : vector<2x384xf32> to vector<2x128xf32>
    %275 = vector.extract_strided_slice %257 {offsets = [0, 256], sizes = [2, 128], strides = [1, 1]} : vector<2x384xf32> to vector<2x128xf32>
    %276 = arith.mulf %265, %275 : vector<2x128xf32>
    %277 = arith.addf %274, %276 : vector<2x128xf32>
    %278 = math.tanh %277 : vector<2x128xf32>
    %cst_84 = arith.constant 1.000000e+00 : f32
    %279 = vector.broadcast %cst_84 : f32 to vector<2x128xf32>
    %280 = arith.subf %279, %273 : vector<2x128xf32>
    %281 = arith.mulf %280, %278 : vector<2x128xf32>
    %282 = arith.mulf %273, %245 : vector<2x128xf32>
    %283 = arith.addf %281, %282 : vector<2x128xf32>
    %284 = vector.extract_strided_slice %283 {offsets = [0, 0], sizes = [2, 64], strides = [1, 1]} : vector<2x128xf32> to vector<2x64xf32>
    %c6_85 = arith.constant 6 : index
    %c0_86 = arith.constant 0 : index
    %c0_87 = arith.constant 0 : index
    %285 = vector.load %arg9[%c6_85, %c0_86, %c0_87] : memref<16x2x128xf32, #tpu.memory_space<vmem>>, vector<1x2x64xf32>
    %286 = vector.shape_cast %285 : vector<1x2x64xf32> to vector<2x64xf32>
    %287 = vector.shape_cast %284 : vector<2x64xf32> to vector<1x2x64xf32>
    tpu.vector_store %arg9[%c6_85, %c0_86, %c0_87], %287 {strides = array<i32>} : memref<16x2x128xf32, #tpu.memory_space<vmem>>, vector<1x2x64xf32>,
    %288 = vector.extract_strided_slice %283 {offsets = [0, 64], sizes = [2, 64], strides = [1, 1]} : vector<2x128xf32> to vector<2x64xf32>
    %c9 = arith.constant 9 : index
    %c0_88 = arith.constant 0 : index
    %c64_89 = arith.constant 64 : index
    %289 = vector.load %arg9[%c9, %c0_88, %c64_89] : memref<16x2x128xf32, #tpu.memory_space<vmem>>, vector<1x2x64xf32>
    %290 = vector.shape_cast %289 : vector<1x2x64xf32> to vector<2x64xf32>
    %291 = vector.shape_cast %288 : vector<2x64xf32> to vector<1x2x64xf32>
    tpu.vector_store %arg9[%c9, %c0_88, %c64_89], %291 {strides = array<i32>} : memref<16x2x128xf32, #tpu.memory_space<vmem>>, vector<1x2x64xf32>,
    %c14_90 = arith.constant 14 : index
    %c0_91 = arith.constant 0 : index
    %292 = vector.load %arg10[%c14_90, %c0_91] : memref<32x384xf32, #tpu.memory_space<vmem>>, vector<2x384xf32>
    %cst_92 = arith.constant dense<0.000000e+00> : vector<2x384xf32>
    %293 = tpu.matmul %283, %23, %cst_92 {dimension_numbers = #tpu.dot_dimension_numbers<[1], [0], [0], [1], [0, 0, 1, 1], [], []>} : vector<2x128xf32>, vector<128x384xf32>, vector<2x384xf32> -> vector<2x384xf32>
    %294 = vector.broadcast %24 : vector<1x384xf32> to vector<2x384xf32>
    %295 = arith.addf %293, %294 : vector<2x384xf32>
    %296 = vector.extract_strided_slice %292 {offsets = [0, 0], sizes = [2, 128], strides = [1, 1]} : vector<2x384xf32> to vector<2x128xf32>
    %297 = vector.extract_strided_slice %295 {offsets = [0, 0], sizes = [2, 128], strides = [1, 1]} : vector<2x384xf32> to vector<2x128xf32>
    %298 = arith.addf %296, %297 : vector<2x128xf32>
    %299 = arith.negf %298 : vector<2x128xf32>
    %300 = math.exp %299 : vector<2x128xf32>
    %cst_93 = arith.constant 1.000000e+00 : f32
    %301 = vector.broadcast %cst_93 : f32 to vector<2x128xf32>
    %302 = arith.addf %301, %300 : vector<2x128xf32>
    %303 = arith.divf %301, %302 : vector<2x128xf32>
    %304 = vector.extract_strided_slice %292 {offsets = [0, 128], sizes = [2, 128], strides = [1, 1]} : vector<2x384xf32> to vector<2x128xf32>
    %305 = vector.extract_strided_slice %295 {offsets = [0, 128], sizes = [2, 128], strides = [1, 1]} : vector<2x384xf32> to vector<2x128xf32>
    %306 = arith.addf %304, %305 : vector<2x128xf32>
    %307 = arith.negf %306 : vector<2x128xf32>
    %308 = math.exp %307 : vector<2x128xf32>
    %cst_94 = arith.constant 1.000000e+00 : f32
    %309 = vector.broadcast %cst_94 : f32 to vector<2x128xf32>
    %310 = arith.addf %309, %308 : vector<2x128xf32>
    %311 = arith.divf %309, %310 : vector<2x128xf32>
    %312 = vector.extract_strided_slice %292 {offsets = [0, 256], sizes = [2, 128], strides = [1, 1]} : vector<2x384xf32> to vector<2x128xf32>
    %313 = vector.extract_strided_slice %295 {offsets = [0, 256], sizes = [2, 128], strides = [1, 1]} : vector<2x384xf32> to vector<2x128xf32>
    %314 = arith.mulf %303, %313 : vector<2x128xf32>
    %315 = arith.addf %312, %314 : vector<2x128xf32>
    %316 = math.tanh %315 : vector<2x128xf32>
    %cst_95 = arith.constant 1.000000e+00 : f32
    %317 = vector.broadcast %cst_95 : f32 to vector<2x128xf32>
    %318 = arith.subf %317, %311 : vector<2x128xf32>
    %319 = arith.mulf %318, %316 : vector<2x128xf32>
    %320 = arith.mulf %311, %283 : vector<2x128xf32>
    %321 = arith.addf %319, %320 : vector<2x128xf32>
    %322 = vector.extract_strided_slice %321 {offsets = [0, 0], sizes = [2, 64], strides = [1, 1]} : vector<2x128xf32> to vector<2x64xf32>
    %c7 = arith.constant 7 : index
    %c0_96 = arith.constant 0 : index
    %c0_97 = arith.constant 0 : index
    %323 = vector.load %arg9[%c7, %c0_96, %c0_97] : memref<16x2x128xf32, #tpu.memory_space<vmem>>, vector<1x2x64xf32>
    %324 = vector.shape_cast %323 : vector<1x2x64xf32> to vector<2x64xf32>
    %325 = vector.shape_cast %322 : vector<2x64xf32> to vector<1x2x64xf32>
    tpu.vector_store %arg9[%c7, %c0_96, %c0_97], %325 {strides = array<i32>} : memref<16x2x128xf32, #tpu.memory_space<vmem>>, vector<1x2x64xf32>,
    %326 = vector.extract_strided_slice %321 {offsets = [0, 64], sizes = [2, 64], strides = [1, 1]} : vector<2x128xf32> to vector<2x64xf32>
    %c8_98 = arith.constant 8 : index
    %c0_99 = arith.constant 0 : index
    %c64_100 = arith.constant 64 : index
    %327 = vector.load %arg9[%c8_98, %c0_99, %c64_100] : memref<16x2x128xf32, #tpu.memory_space<vmem>>, vector<1x2x64xf32>
    %328 = vector.shape_cast %327 : vector<1x2x64xf32> to vector<2x64xf32>
    %329 = vector.shape_cast %326 : vector<2x64xf32> to vector<1x2x64xf32>
    tpu.vector_store %arg9[%c8_98, %c0_99, %c64_100], %329 {strides = array<i32>} : memref<16x2x128xf32, #tpu.memory_space<vmem>>, vector<1x2x64xf32>,
    %c16 = arith.constant 16 : index
    %c0_101 = arith.constant 0 : index
    %330 = vector.load %arg10[%c16, %c0_101] : memref<32x384xf32, #tpu.memory_space<vmem>>, vector<2x384xf32>
    %cst_102 = arith.constant dense<0.000000e+00> : vector<2x384xf32>
    %331 = tpu.matmul %321, %23, %cst_102 {dimension_numbers = #tpu.dot_dimension_numbers<[1], [0], [0], [1], [0, 0, 1, 1], [], []>} : vector<2x128xf32>, vector<128x384xf32>, vector<2x384xf32> -> vector<2x384xf32>
    %332 = vector.broadcast %24 : vector<1x384xf32> to vector<2x384xf32>
    %333 = arith.addf %331, %332 : vector<2x384xf32>
    %334 = vector.extract_strided_slice %330 {offsets = [0, 0], sizes = [2, 128], strides = [1, 1]} : vector<2x384xf32> to vector<2x128xf32>
    %335 = vector.extract_strided_slice %333 {offsets = [0, 0], sizes = [2, 128], strides = [1, 1]} : vector<2x384xf32> to vector<2x128xf32>
    %336 = arith.addf %334, %335 : vector<2x128xf32>
    %337 = arith.negf %336 : vector<2x128xf32>
    %338 = math.exp %337 : vector<2x128xf32>
    %cst_103 = arith.constant 1.000000e+00 : f32
    %339 = vector.broadcast %cst_103 : f32 to vector<2x128xf32>
    %340 = arith.addf %339, %338 : vector<2x128xf32>
    %341 = arith.divf %339, %340 : vector<2x128xf32>
    %342 = vector.extract_strided_slice %330 {offsets = [0, 128], sizes = [2, 128], strides = [1, 1]} : vector<2x384xf32> to vector<2x128xf32>
    %343 = vector.extract_strided_slice %333 {offsets = [0, 128], sizes = [2, 128], strides = [1, 1]} : vector<2x384xf32> to vector<2x128xf32>
    %344 = arith.addf %342, %343 : vector<2x128xf32>
    %345 = arith.negf %344 : vector<2x128xf32>
    %346 = math.exp %345 : vector<2x128xf32>
    %cst_104 = arith.constant 1.000000e+00 : f32
    %347 = vector.broadcast %cst_104 : f32 to vector<2x128xf32>
    %348 = arith.addf %347, %346 : vector<2x128xf32>
    %349 = arith.divf %347, %348 : vector<2x128xf32>
    %350 = vector.extract_strided_slice %330 {offsets = [0, 256], sizes = [2, 128], strides = [1, 1]} : vector<2x384xf32> to vector<2x128xf32>
    %351 = vector.extract_strided_slice %333 {offsets = [0, 256], sizes = [2, 128], strides = [1, 1]} : vector<2x384xf32> to vector<2x128xf32>
    %352 = arith.mulf %341, %351 : vector<2x128xf32>
    %353 = arith.addf %350, %352 : vector<2x128xf32>
    %354 = math.tanh %353 : vector<2x128xf32>
    %cst_105 = arith.constant 1.000000e+00 : f32
    %355 = vector.broadcast %cst_105 : f32 to vector<2x128xf32>
    %356 = arith.subf %355, %349 : vector<2x128xf32>
    %357 = arith.mulf %356, %354 : vector<2x128xf32>
    %358 = arith.mulf %349, %321 : vector<2x128xf32>
    %359 = arith.addf %357, %358 : vector<2x128xf32>
    %360 = vector.extract_strided_slice %359 {offsets = [0, 0], sizes = [2, 64], strides = [1, 1]} : vector<2x128xf32> to vector<2x64xf32>
    %c8_106 = arith.constant 8 : index
    %c0_107 = arith.constant 0 : index
    %c0_108 = arith.constant 0 : index
    %361 = vector.load %arg9[%c8_106, %c0_107, %c0_108] : memref<16x2x128xf32, #tpu.memory_space<vmem>>, vector<1x2x64xf32>
    %362 = vector.shape_cast %361 : vector<1x2x64xf32> to vector<2x64xf32>
    %363 = vector.shape_cast %360 : vector<2x64xf32> to vector<1x2x64xf32>
    tpu.vector_store %arg9[%c8_106, %c0_107, %c0_108], %363 {strides = array<i32>} : memref<16x2x128xf32, #tpu.memory_space<vmem>>, vector<1x2x64xf32>,
    %364 = vector.extract_strided_slice %359 {offsets = [0, 64], sizes = [2, 64], strides = [1, 1]} : vector<2x128xf32> to vector<2x64xf32>
    %c7_109 = arith.constant 7 : index
    %c0_110 = arith.constant 0 : index
    %c64_111 = arith.constant 64 : index
    %365 = vector.load %arg9[%c7_109, %c0_110, %c64_111] : memref<16x2x128xf32, #tpu.memory_space<vmem>>, vector<1x2x64xf32>
    %366 = vector.shape_cast %365 : vector<1x2x64xf32> to vector<2x64xf32>
    %367 = vector.shape_cast %364 : vector<2x64xf32> to vector<1x2x64xf32>
    tpu.vector_store %arg9[%c7_109, %c0_110, %c64_111], %367 {strides = array<i32>} : memref<16x2x128xf32, #tpu.memory_space<vmem>>, vector<1x2x64xf32>,
    %c18 = arith.constant 18 : index
    %c0_112 = arith.constant 0 : index
    %368 = vector.load %arg10[%c18, %c0_112] : memref<32x384xf32, #tpu.memory_space<vmem>>, vector<2x384xf32>
    %cst_113 = arith.constant dense<0.000000e+00> : vector<2x384xf32>
    %369 = tpu.matmul %359, %23, %cst_113 {dimension_numbers = #tpu.dot_dimension_numbers<[1], [0], [0], [1], [0, 0, 1, 1], [], []>} : vector<2x128xf32>, vector<128x384xf32>, vector<2x384xf32> -> vector<2x384xf32>
    %370 = vector.broadcast %24 : vector<1x384xf32> to vector<2x384xf32>
    %371 = arith.addf %369, %370 : vector<2x384xf32>
    %372 = vector.extract_strided_slice %368 {offsets = [0, 0], sizes = [2, 128], strides = [1, 1]} : vector<2x384xf32> to vector<2x128xf32>
    %373 = vector.extract_strided_slice %371 {offsets = [0, 0], sizes = [2, 128], strides = [1, 1]} : vector<2x384xf32> to vector<2x128xf32>
    %374 = arith.addf %372, %373 : vector<2x128xf32>
    %375 = arith.negf %374 : vector<2x128xf32>
    %376 = math.exp %375 : vector<2x128xf32>
    %cst_114 = arith.constant 1.000000e+00 : f32
    %377 = vector.broadcast %cst_114 : f32 to vector<2x128xf32>
    %378 = arith.addf %377, %376 : vector<2x128xf32>
    %379 = arith.divf %377, %378 : vector<2x128xf32>
    %380 = vector.extract_strided_slice %368 {offsets = [0, 128], sizes = [2, 128], strides = [1, 1]} : vector<2x384xf32> to vector<2x128xf32>
    %381 = vector.extract_strided_slice %371 {offsets = [0, 128], sizes = [2, 128], strides = [1, 1]} : vector<2x384xf32> to vector<2x128xf32>
    %382 = arith.addf %380, %381 : vector<2x128xf32>
    %383 = arith.negf %382 : vector<2x128xf32>
    %384 = math.exp %383 : vector<2x128xf32>
    %cst_115 = arith.constant 1.000000e+00 : f32
    %385 = vector.broadcast %cst_115 : f32 to vector<2x128xf32>
    %386 = arith.addf %385, %384 : vector<2x128xf32>
    %387 = arith.divf %385, %386 : vector<2x128xf32>
    %388 = vector.extract_strided_slice %368 {offsets = [0, 256], sizes = [2, 128], strides = [1, 1]} : vector<2x384xf32> to vector<2x128xf32>
    %389 = vector.extract_strided_slice %371 {offsets = [0, 256], sizes = [2, 128], strides = [1, 1]} : vector<2x384xf32> to vector<2x128xf32>
    %390 = arith.mulf %379, %389 : vector<2x128xf32>
    %391 = arith.addf %388, %390 : vector<2x128xf32>
    %392 = math.tanh %391 : vector<2x128xf32>
    %cst_116 = arith.constant 1.000000e+00 : f32
    %393 = vector.broadcast %cst_116 : f32 to vector<2x128xf32>
    %394 = arith.subf %393, %387 : vector<2x128xf32>
    %395 = arith.mulf %394, %392 : vector<2x128xf32>
    %396 = arith.mulf %387, %359 : vector<2x128xf32>
    %397 = arith.addf %395, %396 : vector<2x128xf32>
    %398 = vector.extract_strided_slice %397 {offsets = [0, 0], sizes = [2, 64], strides = [1, 1]} : vector<2x128xf32> to vector<2x64xf32>
    %c9_117 = arith.constant 9 : index
    %c0_118 = arith.constant 0 : index
    %c0_119 = arith.constant 0 : index
    %399 = vector.load %arg9[%c9_117, %c0_118, %c0_119] : memref<16x2x128xf32, #tpu.memory_space<vmem>>, vector<1x2x64xf32>
    %400 = vector.shape_cast %399 : vector<1x2x64xf32> to vector<2x64xf32>
    %401 = vector.shape_cast %398 : vector<2x64xf32> to vector<1x2x64xf32>
    tpu.vector_store %arg9[%c9_117, %c0_118, %c0_119], %401 {strides = array<i32>} : memref<16x2x128xf32, #tpu.memory_space<vmem>>, vector<1x2x64xf32>,
    %402 = vector.extract_strided_slice %397 {offsets = [0, 64], sizes = [2, 64], strides = [1, 1]} : vector<2x128xf32> to vector<2x64xf32>
    %c6_120 = arith.constant 6 : index
    %c0_121 = arith.constant 0 : index
    %c64_122 = arith.constant 64 : index
    %403 = vector.load %arg9[%c6_120, %c0_121, %c64_122] : memref<16x2x128xf32, #tpu.memory_space<vmem>>, vector<1x2x64xf32>
    %404 = vector.shape_cast %403 : vector<1x2x64xf32> to vector<2x64xf32>
    %405 = vector.shape_cast %402 : vector<2x64xf32> to vector<1x2x64xf32>
    tpu.vector_store %arg9[%c6_120, %c0_121, %c64_122], %405 {strides = array<i32>} : memref<16x2x128xf32, #tpu.memory_space<vmem>>, vector<1x2x64xf32>,
    %c20 = arith.constant 20 : index
    %c0_123 = arith.constant 0 : index
    %406 = vector.load %arg10[%c20, %c0_123] : memref<32x384xf32, #tpu.memory_space<vmem>>, vector<2x384xf32>
    %cst_124 = arith.constant dense<0.000000e+00> : vector<2x384xf32>
    %407 = tpu.matmul %397, %23, %cst_124 {dimension_numbers = #tpu.dot_dimension_numbers<[1], [0], [0], [1], [0, 0, 1, 1], [], []>} : vector<2x128xf32>, vector<128x384xf32>, vector<2x384xf32> -> vector<2x384xf32>
    %408 = vector.broadcast %24 : vector<1x384xf32> to vector<2x384xf32>
    %409 = arith.addf %407, %408 : vector<2x384xf32>
    %410 = vector.extract_strided_slice %406 {offsets = [0, 0], sizes = [2, 128], strides = [1, 1]} : vector<2x384xf32> to vector<2x128xf32>
    %411 = vector.extract_strided_slice %409 {offsets = [0, 0], sizes = [2, 128], strides = [1, 1]} : vector<2x384xf32> to vector<2x128xf32>
    %412 = arith.addf %410, %411 : vector<2x128xf32>
    %413 = arith.negf %412 : vector<2x128xf32>
    %414 = math.exp %413 : vector<2x128xf32>
    %cst_125 = arith.constant 1.000000e+00 : f32
    %415 = vector.broadcast %cst_125 : f32 to vector<2x128xf32>
    %416 = arith.addf %415, %414 : vector<2x128xf32>
    %417 = arith.divf %415, %416 : vector<2x128xf32>
    %418 = vector.extract_strided_slice %406 {offsets = [0, 128], sizes = [2, 128], strides = [1, 1]} : vector<2x384xf32> to vector<2x128xf32>
    %419 = vector.extract_strided_slice %409 {offsets = [0, 128], sizes = [2, 128], strides = [1, 1]} : vector<2x384xf32> to vector<2x128xf32>
    %420 = arith.addf %418, %419 : vector<2x128xf32>
    %421 = arith.negf %420 : vector<2x128xf32>
    %422 = math.exp %421 : vector<2x128xf32>
    %cst_126 = arith.constant 1.000000e+00 : f32
    %423 = vector.broadcast %cst_126 : f32 to vector<2x128xf32>
    %424 = arith.addf %423, %422 : vector<2x128xf32>
    %425 = arith.divf %423, %424 : vector<2x128xf32>
    %426 = vector.extract_strided_slice %406 {offsets = [0, 256], sizes = [2, 128], strides = [1, 1]} : vector<2x384xf32> to vector<2x128xf32>
    %427 = vector.extract_strided_slice %409 {offsets = [0, 256], sizes = [2, 128], strides = [1, 1]} : vector<2x384xf32> to vector<2x128xf32>
    %428 = arith.mulf %417, %427 : vector<2x128xf32>
    %429 = arith.addf %426, %428 : vector<2x128xf32>
    %430 = math.tanh %429 : vector<2x128xf32>
    %cst_127 = arith.constant 1.000000e+00 : f32
    %431 = vector.broadcast %cst_127 : f32 to vector<2x128xf32>
    %432 = arith.subf %431, %425 : vector<2x128xf32>
    %433 = arith.mulf %432, %430 : vector<2x128xf32>
    %434 = arith.mulf %425, %397 : vector<2x128xf32>
    %435 = arith.addf %433, %434 : vector<2x128xf32>
    %436 = vector.extract_strided_slice %435 {offsets = [0, 0], sizes = [2, 64], strides = [1, 1]} : vector<2x128xf32> to vector<2x64xf32>
    %c10_128 = arith.constant 10 : index
    %c0_129 = arith.constant 0 : index
    %c0_130 = arith.constant 0 : index
    %437 = vector.load %arg9[%c10_128, %c0_129, %c0_130] : memref<16x2x128xf32, #tpu.memory_space<vmem>>, vector<1x2x64xf32>
    %438 = vector.shape_cast %437 : vector<1x2x64xf32> to vector<2x64xf32>
    %439 = vector.shape_cast %436 : vector<2x64xf32> to vector<1x2x64xf32>
    tpu.vector_store %arg9[%c10_128, %c0_129, %c0_130], %439 {strides = array<i32>} : memref<16x2x128xf32, #tpu.memory_space<vmem>>, vector<1x2x64xf32>,
    %440 = vector.extract_strided_slice %435 {offsets = [0, 64], sizes = [2, 64], strides = [1, 1]} : vector<2x128xf32> to vector<2x64xf32>
    %c5_131 = arith.constant 5 : index
    %c0_132 = arith.constant 0 : index
    %c64_133 = arith.constant 64 : index
    %441 = vector.load %arg9[%c5_131, %c0_132, %c64_133] : memref<16x2x128xf32, #tpu.memory_space<vmem>>, vector<1x2x64xf32>
    %442 = vector.shape_cast %441 : vector<1x2x64xf32> to vector<2x64xf32>
    %443 = vector.shape_cast %440 : vector<2x64xf32> to vector<1x2x64xf32>
    tpu.vector_store %arg9[%c5_131, %c0_132, %c64_133], %443 {strides = array<i32>} : memref<16x2x128xf32, #tpu.memory_space<vmem>>, vector<1x2x64xf32>,
    %c22 = arith.constant 22 : index
    %c0_134 = arith.constant 0 : index
    %444 = vector.load %arg10[%c22, %c0_134] : memref<32x384xf32, #tpu.memory_space<vmem>>, vector<2x384xf32>
    %cst_135 = arith.constant dense<0.000000e+00> : vector<2x384xf32>
    %445 = tpu.matmul %435, %23, %cst_135 {dimension_numbers = #tpu.dot_dimension_numbers<[1], [0], [0], [1], [0, 0, 1, 1], [], []>} : vector<2x128xf32>, vector<128x384xf32>, vector<2x384xf32> -> vector<2x384xf32>
    %446 = vector.broadcast %24 : vector<1x384xf32> to vector<2x384xf32>
    %447 = arith.addf %445, %446 : vector<2x384xf32>
    %448 = vector.extract_strided_slice %444 {offsets = [0, 0], sizes = [2, 128], strides = [1, 1]} : vector<2x384xf32> to vector<2x128xf32>
    %449 = vector.extract_strided_slice %447 {offsets = [0, 0], sizes = [2, 128], strides = [1, 1]} : vector<2x384xf32> to vector<2x128xf32>
    %450 = arith.addf %448, %449 : vector<2x128xf32>
    %451 = arith.negf %450 : vector<2x128xf32>
    %452 = math.exp %451 : vector<2x128xf32>
    %cst_136 = arith.constant 1.000000e+00 : f32
    %453 = vector.broadcast %cst_136 : f32 to vector<2x128xf32>
    %454 = arith.addf %453, %452 : vector<2x128xf32>
    %455 = arith.divf %453, %454 : vector<2x128xf32>
    %456 = vector.extract_strided_slice %444 {offsets = [0, 128], sizes = [2, 128], strides = [1, 1]} : vector<2x384xf32> to vector<2x128xf32>
    %457 = vector.extract_strided_slice %447 {offsets = [0, 128], sizes = [2, 128], strides = [1, 1]} : vector<2x384xf32> to vector<2x128xf32>
    %458 = arith.addf %456, %457 : vector<2x128xf32>
    %459 = arith.negf %458 : vector<2x128xf32>
    %460 = math.exp %459 : vector<2x128xf32>
    %cst_137 = arith.constant 1.000000e+00 : f32
    %461 = vector.broadcast %cst_137 : f32 to vector<2x128xf32>
    %462 = arith.addf %461, %460 : vector<2x128xf32>
    %463 = arith.divf %461, %462 : vector<2x128xf32>
    %464 = vector.extract_strided_slice %444 {offsets = [0, 256], sizes = [2, 128], strides = [1, 1]} : vector<2x384xf32> to vector<2x128xf32>
    %465 = vector.extract_strided_slice %447 {offsets = [0, 256], sizes = [2, 128], strides = [1, 1]} : vector<2x384xf32> to vector<2x128xf32>
    %466 = arith.mulf %455, %465 : vector<2x128xf32>
    %467 = arith.addf %464, %466 : vector<2x128xf32>
    %468 = math.tanh %467 : vector<2x128xf32>
    %cst_138 = arith.constant 1.000000e+00 : f32
    %469 = vector.broadcast %cst_138 : f32 to vector<2x128xf32>
    %470 = arith.subf %469, %463 : vector<2x128xf32>
    %471 = arith.mulf %470, %468 : vector<2x128xf32>
    %472 = arith.mulf %463, %435 : vector<2x128xf32>
    %473 = arith.addf %471, %472 : vector<2x128xf32>
    %474 = vector.extract_strided_slice %473 {offsets = [0, 0], sizes = [2, 64], strides = [1, 1]} : vector<2x128xf32> to vector<2x64xf32>
    %c11_139 = arith.constant 11 : index
    %c0_140 = arith.constant 0 : index
    %c0_141 = arith.constant 0 : index
    %475 = vector.load %arg9[%c11_139, %c0_140, %c0_141] : memref<16x2x128xf32, #tpu.memory_space<vmem>>, vector<1x2x64xf32>
    %476 = vector.shape_cast %475 : vector<1x2x64xf32> to vector<2x64xf32>
    %477 = vector.shape_cast %474 : vector<2x64xf32> to vector<1x2x64xf32>
    tpu.vector_store %arg9[%c11_139, %c0_140, %c0_141], %477 {strides = array<i32>} : memref<16x2x128xf32, #tpu.memory_space<vmem>>, vector<1x2x64xf32>,
    %478 = vector.extract_strided_slice %473 {offsets = [0, 64], sizes = [2, 64], strides = [1, 1]} : vector<2x128xf32> to vector<2x64xf32>
    %c4_142 = arith.constant 4 : index
    %c0_143 = arith.constant 0 : index
    %c64_144 = arith.constant 64 : index
    %479 = vector.load %arg9[%c4_142, %c0_143, %c64_144] : memref<16x2x128xf32, #tpu.memory_space<vmem>>, vector<1x2x64xf32>
    %480 = vector.shape_cast %479 : vector<1x2x64xf32> to vector<2x64xf32>
    %481 = vector.shape_cast %478 : vector<2x64xf32> to vector<1x2x64xf32>
    tpu.vector_store %arg9[%c4_142, %c0_143, %c64_144], %481 {strides = array<i32>} : memref<16x2x128xf32, #tpu.memory_space<vmem>>, vector<1x2x64xf32>,
    %c24 = arith.constant 24 : index
    %c0_145 = arith.constant 0 : index
    %482 = vector.load %arg10[%c24, %c0_145] : memref<32x384xf32, #tpu.memory_space<vmem>>, vector<2x384xf32>
    %cst_146 = arith.constant dense<0.000000e+00> : vector<2x384xf32>
    %483 = tpu.matmul %473, %23, %cst_146 {dimension_numbers = #tpu.dot_dimension_numbers<[1], [0], [0], [1], [0, 0, 1, 1], [], []>} : vector<2x128xf32>, vector<128x384xf32>, vector<2x384xf32> -> vector<2x384xf32>
    %484 = vector.broadcast %24 : vector<1x384xf32> to vector<2x384xf32>
    %485 = arith.addf %483, %484 : vector<2x384xf32>
    %486 = vector.extract_strided_slice %482 {offsets = [0, 0], sizes = [2, 128], strides = [1, 1]} : vector<2x384xf32> to vector<2x128xf32>
    %487 = vector.extract_strided_slice %485 {offsets = [0, 0], sizes = [2, 128], strides = [1, 1]} : vector<2x384xf32> to vector<2x128xf32>
    %488 = arith.addf %486, %487 : vector<2x128xf32>
    %489 = arith.negf %488 : vector<2x128xf32>
    %490 = math.exp %489 : vector<2x128xf32>
    %cst_147 = arith.constant 1.000000e+00 : f32
    %491 = vector.broadcast %cst_147 : f32 to vector<2x128xf32>
    %492 = arith.addf %491, %490 : vector<2x128xf32>
    %493 = arith.divf %491, %492 : vector<2x128xf32>
    %494 = vector.extract_strided_slice %482 {offsets = [0, 128], sizes = [2, 128], strides = [1, 1]} : vector<2x384xf32> to vector<2x128xf32>
    %495 = vector.extract_strided_slice %485 {offsets = [0, 128], sizes = [2, 128], strides = [1, 1]} : vector<2x384xf32> to vector<2x128xf32>
    %496 = arith.addf %494, %495 : vector<2x128xf32>
    %497 = arith.negf %496 : vector<2x128xf32>
    %498 = math.exp %497 : vector<2x128xf32>
    %cst_148 = arith.constant 1.000000e+00 : f32
    %499 = vector.broadcast %cst_148 : f32 to vector<2x128xf32>
    %500 = arith.addf %499, %498 : vector<2x128xf32>
    %501 = arith.divf %499, %500 : vector<2x128xf32>
    %502 = vector.extract_strided_slice %482 {offsets = [0, 256], sizes = [2, 128], strides = [1, 1]} : vector<2x384xf32> to vector<2x128xf32>
    %503 = vector.extract_strided_slice %485 {offsets = [0, 256], sizes = [2, 128], strides = [1, 1]} : vector<2x384xf32> to vector<2x128xf32>
    %504 = arith.mulf %493, %503 : vector<2x128xf32>
    %505 = arith.addf %502, %504 : vector<2x128xf32>
    %506 = math.tanh %505 : vector<2x128xf32>
    %cst_149 = arith.constant 1.000000e+00 : f32
    %507 = vector.broadcast %cst_149 : f32 to vector<2x128xf32>
    %508 = arith.subf %507, %501 : vector<2x128xf32>
    %509 = arith.mulf %508, %506 : vector<2x128xf32>
    %510 = arith.mulf %501, %473 : vector<2x128xf32>
    %511 = arith.addf %509, %510 : vector<2x128xf32>
    %512 = vector.extract_strided_slice %511 {offsets = [0, 0], sizes = [2, 64], strides = [1, 1]} : vector<2x128xf32> to vector<2x64xf32>
    %c12_150 = arith.constant 12 : index
    %c0_151 = arith.constant 0 : index
    %c0_152 = arith.constant 0 : index
    %513 = vector.load %arg9[%c12_150, %c0_151, %c0_152] : memref<16x2x128xf32, #tpu.memory_space<vmem>>, vector<1x2x64xf32>
    %514 = vector.shape_cast %513 : vector<1x2x64xf32> to vector<2x64xf32>
    %515 = vector.shape_cast %512 : vector<2x64xf32> to vector<1x2x64xf32>
    tpu.vector_store %arg9[%c12_150, %c0_151, %c0_152], %515 {strides = array<i32>} : memref<16x2x128xf32, #tpu.memory_space<vmem>>, vector<1x2x64xf32>,
    %516 = vector.extract_strided_slice %511 {offsets = [0, 64], sizes = [2, 64], strides = [1, 1]} : vector<2x128xf32> to vector<2x64xf32>
    %c3_153 = arith.constant 3 : index
    %c0_154 = arith.constant 0 : index
    %c64_155 = arith.constant 64 : index
    %517 = vector.load %arg9[%c3_153, %c0_154, %c64_155] : memref<16x2x128xf32, #tpu.memory_space<vmem>>, vector<1x2x64xf32>
    %518 = vector.shape_cast %517 : vector<1x2x64xf32> to vector<2x64xf32>
    %519 = vector.shape_cast %516 : vector<2x64xf32> to vector<1x2x64xf32>
    tpu.vector_store %arg9[%c3_153, %c0_154, %c64_155], %519 {strides = array<i32>} : memref<16x2x128xf32, #tpu.memory_space<vmem>>, vector<1x2x64xf32>,
    %c26 = arith.constant 26 : index
    %c0_156 = arith.constant 0 : index
    %520 = vector.load %arg10[%c26, %c0_156] : memref<32x384xf32, #tpu.memory_space<vmem>>, vector<2x384xf32>
    %cst_157 = arith.constant dense<0.000000e+00> : vector<2x384xf32>
    %521 = tpu.matmul %511, %23, %cst_157 {dimension_numbers = #tpu.dot_dimension_numbers<[1], [0], [0], [1], [0, 0, 1, 1], [], []>} : vector<2x128xf32>, vector<128x384xf32>, vector<2x384xf32> -> vector<2x384xf32>
    %522 = vector.broadcast %24 : vector<1x384xf32> to vector<2x384xf32>
    %523 = arith.addf %521, %522 : vector<2x384xf32>
    %524 = vector.extract_strided_slice %520 {offsets = [0, 0], sizes = [2, 128], strides = [1, 1]} : vector<2x384xf32> to vector<2x128xf32>
    %525 = vector.extract_strided_slice %523 {offsets = [0, 0], sizes = [2, 128], strides = [1, 1]} : vector<2x384xf32> to vector<2x128xf32>
    %526 = arith.addf %524, %525 : vector<2x128xf32>
    %527 = arith.negf %526 : vector<2x128xf32>
    %528 = math.exp %527 : vector<2x128xf32>
    %cst_158 = arith.constant 1.000000e+00 : f32
    %529 = vector.broadcast %cst_158 : f32 to vector<2x128xf32>
    %530 = arith.addf %529, %528 : vector<2x128xf32>
    %531 = arith.divf %529, %530 : vector<2x128xf32>
    %532 = vector.extract_strided_slice %520 {offsets = [0, 128], sizes = [2, 128], strides = [1, 1]} : vector<2x384xf32> to vector<2x128xf32>
    %533 = vector.extract_strided_slice %523 {offsets = [0, 128], sizes = [2, 128], strides = [1, 1]} : vector<2x384xf32> to vector<2x128xf32>
    %534 = arith.addf %532, %533 : vector<2x128xf32>
    %535 = arith.negf %534 : vector<2x128xf32>
    %536 = math.exp %535 : vector<2x128xf32>
    %cst_159 = arith.constant 1.000000e+00 : f32
    %537 = vector.broadcast %cst_159 : f32 to vector<2x128xf32>
    %538 = arith.addf %537, %536 : vector<2x128xf32>
    %539 = arith.divf %537, %538 : vector<2x128xf32>
    %540 = vector.extract_strided_slice %520 {offsets = [0, 256], sizes = [2, 128], strides = [1, 1]} : vector<2x384xf32> to vector<2x128xf32>
    %541 = vector.extract_strided_slice %523 {offsets = [0, 256], sizes = [2, 128], strides = [1, 1]} : vector<2x384xf32> to vector<2x128xf32>
    %542 = arith.mulf %531, %541 : vector<2x128xf32>
    %543 = arith.addf %540, %542 : vector<2x128xf32>
    %544 = math.tanh %543 : vector<2x128xf32>
    %cst_160 = arith.constant 1.000000e+00 : f32
    %545 = vector.broadcast %cst_160 : f32 to vector<2x128xf32>
    %546 = arith.subf %545, %539 : vector<2x128xf32>
    %547 = arith.mulf %546, %544 : vector<2x128xf32>
    %548 = arith.mulf %539, %511 : vector<2x128xf32>
    %549 = arith.addf %547, %548 : vector<2x128xf32>
    %550 = vector.extract_strided_slice %549 {offsets = [0, 0], sizes = [2, 64], strides = [1, 1]} : vector<2x128xf32> to vector<2x64xf32>
    %c13_161 = arith.constant 13 : index
    %c0_162 = arith.constant 0 : index
    %c0_163 = arith.constant 0 : index
    %551 = vector.load %arg9[%c13_161, %c0_162, %c0_163] : memref<16x2x128xf32, #tpu.memory_space<vmem>>, vector<1x2x64xf32>
    %552 = vector.shape_cast %551 : vector<1x2x64xf32> to vector<2x64xf32>
    %553 = vector.shape_cast %550 : vector<2x64xf32> to vector<1x2x64xf32>
    tpu.vector_store %arg9[%c13_161, %c0_162, %c0_163], %553 {strides = array<i32>} : memref<16x2x128xf32, #tpu.memory_space<vmem>>, vector<1x2x64xf32>,
    %554 = vector.extract_strided_slice %549 {offsets = [0, 64], sizes = [2, 64], strides = [1, 1]} : vector<2x128xf32> to vector<2x64xf32>
    %c2_164 = arith.constant 2 : index
    %c0_165 = arith.constant 0 : index
    %c64_166 = arith.constant 64 : index
    %555 = vector.load %arg9[%c2_164, %c0_165, %c64_166] : memref<16x2x128xf32, #tpu.memory_space<vmem>>, vector<1x2x64xf32>
    %556 = vector.shape_cast %555 : vector<1x2x64xf32> to vector<2x64xf32>
    %557 = vector.shape_cast %554 : vector<2x64xf32> to vector<1x2x64xf32>
    tpu.vector_store %arg9[%c2_164, %c0_165, %c64_166], %557 {strides = array<i32>} : memref<16x2x128xf32, #tpu.memory_space<vmem>>, vector<1x2x64xf32>,
    %c28 = arith.constant 28 : index
    %c0_167 = arith.constant 0 : index
    %558 = vector.load %arg10[%c28, %c0_167] : memref<32x384xf32, #tpu.memory_space<vmem>>, vector<2x384xf32>
    %cst_168 = arith.constant dense<0.000000e+00> : vector<2x384xf32>
    %559 = tpu.matmul %549, %23, %cst_168 {dimension_numbers = #tpu.dot_dimension_numbers<[1], [0], [0], [1], [0, 0, 1, 1], [], []>} : vector<2x128xf32>, vector<128x384xf32>, vector<2x384xf32> -> vector<2x384xf32>
    %560 = vector.broadcast %24 : vector<1x384xf32> to vector<2x384xf32>
    %561 = arith.addf %559, %560 : vector<2x384xf32>
    %562 = vector.extract_strided_slice %558 {offsets = [0, 0], sizes = [2, 128], strides = [1, 1]} : vector<2x384xf32> to vector<2x128xf32>
    %563 = vector.extract_strided_slice %561 {offsets = [0, 0], sizes = [2, 128], strides = [1, 1]} : vector<2x384xf32> to vector<2x128xf32>
    %564 = arith.addf %562, %563 : vector<2x128xf32>
    %565 = arith.negf %564 : vector<2x128xf32>
    %566 = math.exp %565 : vector<2x128xf32>
    %cst_169 = arith.constant 1.000000e+00 : f32
    %567 = vector.broadcast %cst_169 : f32 to vector<2x128xf32>
    %568 = arith.addf %567, %566 : vector<2x128xf32>
    %569 = arith.divf %567, %568 : vector<2x128xf32>
    %570 = vector.extract_strided_slice %558 {offsets = [0, 128], sizes = [2, 128], strides = [1, 1]} : vector<2x384xf32> to vector<2x128xf32>
    %571 = vector.extract_strided_slice %561 {offsets = [0, 128], sizes = [2, 128], strides = [1, 1]} : vector<2x384xf32> to vector<2x128xf32>
    %572 = arith.addf %570, %571 : vector<2x128xf32>
    %573 = arith.negf %572 : vector<2x128xf32>
    %574 = math.exp %573 : vector<2x128xf32>
    %cst_170 = arith.constant 1.000000e+00 : f32
    %575 = vector.broadcast %cst_170 : f32 to vector<2x128xf32>
    %576 = arith.addf %575, %574 : vector<2x128xf32>
    %577 = arith.divf %575, %576 : vector<2x128xf32>
    %578 = vector.extract_strided_slice %558 {offsets = [0, 256], sizes = [2, 128], strides = [1, 1]} : vector<2x384xf32> to vector<2x128xf32>
    %579 = vector.extract_strided_slice %561 {offsets = [0, 256], sizes = [2, 128], strides = [1, 1]} : vector<2x384xf32> to vector<2x128xf32>
    %580 = arith.mulf %569, %579 : vector<2x128xf32>
    %581 = arith.addf %578, %580 : vector<2x128xf32>
    %582 = math.tanh %581 : vector<2x128xf32>
    %cst_171 = arith.constant 1.000000e+00 : f32
    %583 = vector.broadcast %cst_171 : f32 to vector<2x128xf32>
    %584 = arith.subf %583, %577 : vector<2x128xf32>
    %585 = arith.mulf %584, %582 : vector<2x128xf32>
    %586 = arith.mulf %577, %549 : vector<2x128xf32>
    %587 = arith.addf %585, %586 : vector<2x128xf32>
    %588 = vector.extract_strided_slice %587 {offsets = [0, 0], sizes = [2, 64], strides = [1, 1]} : vector<2x128xf32> to vector<2x64xf32>
    %c14_172 = arith.constant 14 : index
    %c0_173 = arith.constant 0 : index
    %c0_174 = arith.constant 0 : index
    %589 = vector.load %arg9[%c14_172, %c0_173, %c0_174] : memref<16x2x128xf32, #tpu.memory_space<vmem>>, vector<1x2x64xf32>
    %590 = vector.shape_cast %589 : vector<1x2x64xf32> to vector<2x64xf32>
    %591 = vector.shape_cast %588 : vector<2x64xf32> to vector<1x2x64xf32>
    tpu.vector_store %arg9[%c14_172, %c0_173, %c0_174], %591 {strides = array<i32>} : memref<16x2x128xf32, #tpu.memory_space<vmem>>, vector<1x2x64xf32>,
    %592 = vector.extract_strided_slice %587 {offsets = [0, 64], sizes = [2, 64], strides = [1, 1]} : vector<2x128xf32> to vector<2x64xf32>
    %c1_175 = arith.constant 1 : index
    %c0_176 = arith.constant 0 : index
    %c64_177 = arith.constant 64 : index
    %593 = vector.load %arg9[%c1_175, %c0_176, %c64_177] : memref<16x2x128xf32, #tpu.memory_space<vmem>>, vector<1x2x64xf32>
    %594 = vector.shape_cast %593 : vector<1x2x64xf32> to vector<2x64xf32>
    %595 = vector.shape_cast %592 : vector<2x64xf32> to vector<1x2x64xf32>
    tpu.vector_store %arg9[%c1_175, %c0_176, %c64_177], %595 {strides = array<i32>} : memref<16x2x128xf32, #tpu.memory_space<vmem>>, vector<1x2x64xf32>,
    %c30 = arith.constant 30 : index
    %c0_178 = arith.constant 0 : index
    %596 = vector.load %arg10[%c30, %c0_178] : memref<32x384xf32, #tpu.memory_space<vmem>>, vector<2x384xf32>
    %cst_179 = arith.constant dense<0.000000e+00> : vector<2x384xf32>
    %597 = tpu.matmul %587, %23, %cst_179 {dimension_numbers = #tpu.dot_dimension_numbers<[1], [0], [0], [1], [0, 0, 1, 1], [], []>} : vector<2x128xf32>, vector<128x384xf32>, vector<2x384xf32> -> vector<2x384xf32>
    %598 = vector.broadcast %24 : vector<1x384xf32> to vector<2x384xf32>
    %599 = arith.addf %597, %598 : vector<2x384xf32>
    %600 = vector.extract_strided_slice %596 {offsets = [0, 0], sizes = [2, 128], strides = [1, 1]} : vector<2x384xf32> to vector<2x128xf32>
    %601 = vector.extract_strided_slice %599 {offsets = [0, 0], sizes = [2, 128], strides = [1, 1]} : vector<2x384xf32> to vector<2x128xf32>
    %602 = arith.addf %600, %601 : vector<2x128xf32>
    %603 = arith.negf %602 : vector<2x128xf32>
    %604 = math.exp %603 : vector<2x128xf32>
    %cst_180 = arith.constant 1.000000e+00 : f32
    %605 = vector.broadcast %cst_180 : f32 to vector<2x128xf32>
    %606 = arith.addf %605, %604 : vector<2x128xf32>
    %607 = arith.divf %605, %606 : vector<2x128xf32>
    %608 = vector.extract_strided_slice %596 {offsets = [0, 128], sizes = [2, 128], strides = [1, 1]} : vector<2x384xf32> to vector<2x128xf32>
    %609 = vector.extract_strided_slice %599 {offsets = [0, 128], sizes = [2, 128], strides = [1, 1]} : vector<2x384xf32> to vector<2x128xf32>
    %610 = arith.addf %608, %609 : vector<2x128xf32>
    %611 = arith.negf %610 : vector<2x128xf32>
    %612 = math.exp %611 : vector<2x128xf32>
    %cst_181 = arith.constant 1.000000e+00 : f32
    %613 = vector.broadcast %cst_181 : f32 to vector<2x128xf32>
    %614 = arith.addf %613, %612 : vector<2x128xf32>
    %615 = arith.divf %613, %614 : vector<2x128xf32>
    %616 = vector.extract_strided_slice %596 {offsets = [0, 256], sizes = [2, 128], strides = [1, 1]} : vector<2x384xf32> to vector<2x128xf32>
    %617 = vector.extract_strided_slice %599 {offsets = [0, 256], sizes = [2, 128], strides = [1, 1]} : vector<2x384xf32> to vector<2x128xf32>
    %618 = arith.mulf %607, %617 : vector<2x128xf32>
    %619 = arith.addf %616, %618 : vector<2x128xf32>
    %620 = math.tanh %619 : vector<2x128xf32>
    %cst_182 = arith.constant 1.000000e+00 : f32
    %621 = vector.broadcast %cst_182 : f32 to vector<2x128xf32>
    %622 = arith.subf %621, %615 : vector<2x128xf32>
    %623 = arith.mulf %622, %620 : vector<2x128xf32>
    %624 = arith.mulf %615, %587 : vector<2x128xf32>
    %625 = arith.addf %623, %624 : vector<2x128xf32>
    %626 = vector.extract_strided_slice %625 {offsets = [0, 0], sizes = [2, 64], strides = [1, 1]} : vector<2x128xf32> to vector<2x64xf32>
    %c15_183 = arith.constant 15 : index
    %c0_184 = arith.constant 0 : index
    %c0_185 = arith.constant 0 : index
    %627 = vector.load %arg9[%c15_183, %c0_184, %c0_185] : memref<16x2x128xf32, #tpu.memory_space<vmem>>, vector<1x2x64xf32>
    %628 = vector.shape_cast %627 : vector<1x2x64xf32> to vector<2x64xf32>
    %629 = vector.shape_cast %626 : vector<2x64xf32> to vector<1x2x64xf32>
    tpu.vector_store %arg9[%c15_183, %c0_184, %c0_185], %629 {strides = array<i32>} : memref<16x2x128xf32, #tpu.memory_space<vmem>>, vector<1x2x64xf32>,
    %630 = vector.extract_strided_slice %625 {offsets = [0, 64], sizes = [2, 64], strides = [1, 1]} : vector<2x128xf32> to vector<2x64xf32>
    %c0_186 = arith.constant 0 : index
    %c0_187 = arith.constant 0 : index
    %c64_188 = arith.constant 64 : index
    %631 = vector.load %arg9[%c0_186, %c0_187, %c64_188] : memref<16x2x128xf32, #tpu.memory_space<vmem>>, vector<1x2x64xf32>
    %632 = vector.shape_cast %631 : vector<1x2x64xf32> to vector<2x64xf32>
    %633 = vector.shape_cast %630 : vector<2x64xf32> to vector<1x2x64xf32>
    tpu.vector_store %arg9[%c0_186, %c0_187, %c64_188], %633 {strides = array<i32>} : memref<16x2x128xf32, #tpu.memory_space<vmem>>, vector<1x2x64xf32>,
    return
  }
  func.func @transform_0(%arg0: i32) -> (i32, i32) {
    %c0_i32 = arith.constant 0 : i32
    %c0_i32_0 = arith.constant 0 : i32
    %c0_i32_1 = arith.constant 0 : i32
    return %c0_i32, %c0_i32_0 : i32, i32
  }
  func.func @transform_1(%arg0: i32) -> (i32, i32) {
    %c0_i32 = arith.constant 0 : i32
    %c0_i32_0 = arith.constant 0 : i32
    %c0_i32_1 = arith.constant 0 : i32
    return %c0_i32, %c0_i32_0 : i32, i32
  }
  func.func @transform_2(%arg0: i32) -> (i32, i32) {
    %c0_i32 = arith.constant 0 : i32
    %c0_i32_0 = arith.constant 0 : i32
    %c0_i32_1 = arith.constant 0 : i32
    return %c0_i32, %c0_i32_0 : i32, i32
  }
  func.func @transform_3(%arg0: i32) -> (i32, i32) {
    %c0_i32 = arith.constant 0 : i32
    %c0_i32_0 = arith.constant 0 : i32
    %c0_i32_1 = arith.constant 0 : i32
    return %c0_i32, %c0_i32_0 : i32, i32
  }
  func.func @transform_4(%arg0: i32) -> (i32, i32) {
    %c0_i32 = arith.constant 0 : i32
    %c0_i32_0 = arith.constant 0 : i32
    %c0_i32_1 = arith.constant 0 : i32
    return %c0_i32, %c0_i32_0 : i32, i32
  }
  func.func @transform_5(%arg0: i32) -> (i32, i32) {
    %c0_i32 = arith.constant 0 : i32
    %c0_i32_0 = arith.constant 0 : i32
    %c0_i32_1 = arith.constant 0 : i32
    return %c0_i32, %c0_i32_0 : i32, i32
  }
  func.func @transform_6(%arg0: i32) -> (i32, i32) {
    %c0_i32 = arith.constant 0 : i32
    %c0_i32_0 = arith.constant 0 : i32
    %c0_i32_1 = arith.constant 0 : i32
    return %c0_i32, %c0_i32_0 : i32, i32
  }
  func.func @transform_7(%arg0: i32) -> (i32, i32) {
    %c0_i32 = arith.constant 0 : i32
    %c0_i32_0 = arith.constant 0 : i32
    %c0_i32_1 = arith.constant 0 : i32
    return %c0_i32, %c0_i32_0 : i32, i32
  }
  func.func @transform_8(%arg0: i32) -> (i32, i32, i32) {
    %c0_i32 = arith.constant 0 : i32
    %c0_i32_0 = arith.constant 0 : i32
    %c0_i32_1 = arith.constant 0 : i32
    %c0_i32_2 = arith.constant 0 : i32
    return %c0_i32, %c0_i32_0, %c0_i32_1 : i32, i32, i32
  }
}

</mosaic_0001>

<llo_original>
// kernel: tpu_custom_call.1
$region0: #{tpu_custom_call.1}
  #allocation0 [shape = 'u32[]', space=smem, size = 0x4, offset = 0x4, fixed_abs, tag = 'smem constant byte address 0x4 - core index']
  #allocation1 [shape = 'u32[144,128]{1,0:T(1,128)}', space=vmem, size = 0x12000, scoped, tag = 'internal scratch']
  #allocation2 [shape = 'f32[32,384]{1,0:T(8,128)}', space=vmem, size = 0xc000, scoped, tag = 'scratch operand']
  %s0 = inlined_call_operand.vmem [shape: s32[32,1], index: 0, kind: input, shape index: {}]
  %s1 = inlined_call_operand.vmem [shape: s32[32,1], index: 1, kind: input, shape index: {}]
  %s2 = inlined_call_operand.vmem [shape: f32[50,128], index: 2, kind: input, shape index: {}]
  %s3 = inlined_call_operand.hbm [shape: f32[128,384], index: 3, kind: input, shape index: {}]
  %s4 = inlined_call_operand.hbm [shape: f32[128,384], index: 4, kind: input, shape index: {}]
  %s5 = inlined_call_operand.vmem [shape: f32[1,384], index: 5, kind: input, shape index: {}]
  %s6 = inlined_call_operand.hbm [shape: f32[128,384], index: 6, kind: input, shape index: {}]
  %s7 = inlined_call_operand.vmem [shape: f32[1,384], index: 7, kind: input, shape index: {}]
  %s8 = inlined_call_operand.hbm [shape: f32[16,2,128], index: 8, kind: output, shape index: {}]
  %s9 = sld [smem:[#allocation0]]
  $region54: #{tpu_custom_call.1} parent=0
    _
  %s11 = ssub.s32 1, %s9
  %s12 = scalar_select 0, %s11, %s9
  $region1: #{tpu_custom_call.1} parent=0
    #allocation3 [shape = 'u8[196608]{0}', space=vmem, size = 0x30000, scoped, tag = 'input window, operand 3, single buffered']
    #allocation4 [shape = 's32[1]{0}', space=sflag, size = 0x4, scoped, tag = 'scoped memory for tpu_custom_call.1']
    #allocation5 [shape = 's32[1]{0}', space=sflag, size = 0x4, scoped, tag = 'scoped memory for tpu_custom_call.1']
    #allocation6 [shape = 'u8[196608]{0}', space=vmem, size = 0x30000, scoped, tag = 'input window, operand 4, single buffered']
    #allocation7 [shape = 's32[1]{0}', space=sflag, size = 0x4, scoped, tag = 'scoped memory for tpu_custom_call.1']
    #allocation8 [shape = 'u8[196608]{0}', space=vmem, size = 0x30000, scoped, tag = 'input window, operand 6, single buffered']
    #allocation9 [shape = 'u8[16384]{0}', space=vmem, size = 0x4000, scoped, tag = 'output window, operand 0, single buffered']
    %13 = vsyncpa [#allocation4], 0
    %14 = vsyncpa [#allocation7], 0
    %15 = vsyncpa [#allocation5], 0
    // Predicated region
    $region2: #{tpu_custom_call.1} parent=1 // pred_check
      _
    $region3: #{tpu_custom_call.1} parent=1 // pred_check_branch
      %17 = sbr.rel (0) target = $region5
    $region4: #{tpu_custom_call.1} parent=1 // pred_region
      _
    $region5: #{tpu_custom_call.1} parent=1 // pred_fallthru
      _
    // Predicated region
    $region6: #{tpu_custom_call.1} parent=1 // pred_check
      _
    $region7: #{tpu_custom_call.1} parent=1 // pred_check_branch
      %19 = sbr.rel (0) target = $region9
    $region8: #{tpu_custom_call.1} parent=1 // pred_region
      _
    $region9: #{tpu_custom_call.1} parent=1 // pred_fallthru
      _
    // Predicated region
    $region10: #{tpu_custom_call.1} parent=1 // pred_check
      _
    $region11: #{tpu_custom_call.1} parent=1 // pred_check_branch
      %21 = sbr.rel (0) target = $region13
    $region12: #{tpu_custom_call.1} parent=1 // pred_region
      _
    $region13: #{tpu_custom_call.1} parent=1 // pred_fallthru
      _
    // Predicated region
    $region14: #{tpu_custom_call.1} parent=1 // pred_check
      _
    $region15: #{tpu_custom_call.1} parent=1 // pred_check_branch
      %23 = sbr.rel (0) target = $region17
    $region16: #{tpu_custom_call.1} parent=1 // pred_region
      %s25 = ssub.s32 6144, 6144
      %26 = vsyncadd [#allocation4], %s25
      %s27 = sshll.u32 [#allocation3], 4
      %s28 = int_to_ptr.vmem [resolvable:$true] %s27
      %33 = dma.hbm_to_vmem [thread:$0]  %s3, 6144, %s28, [#allocation4], 384, 384, 24
    $region17: #{tpu_custom_call.1} parent=1 // pred_fallthru
      _
    // Predicated region
    $region18: #{tpu_custom_call.1} parent=1 // pred_check
      _
    $region19: #{tpu_custom_call.1} parent=1 // pred_check_branch
      %35 = sbr.rel (0) target = $region21
    $region20: #{tpu_custom_call.1} parent=1 // pred_region
      %s37 = ssub.s32 6144, 6144
      %38 = vsyncadd [#allocation7], %s37
      %s39 = sshll.u32 [#allocation6], 4
      %s40 = int_to_ptr.vmem [resolvable:$true] %s39
      %45 = dma.hbm_to_vmem [thread:$0]  %s4, 6144, %s40, [#allocation7], 384, 384, 24
    $region21: #{tpu_custom_call.1} parent=1 // pred_fallthru
      _
    // Predicated region
    $region22: #{tpu_custom_call.1} parent=1 // pred_check
      _
    $region23: #{tpu_custom_call.1} parent=1 // pred_check_branch
      %47 = sbr.rel (0) target = $region25
    $region24: #{tpu_custom_call.1} parent=1 // pred_region
      _
    $region25: #{tpu_custom_call.1} parent=1 // pred_fallthru
      _
    // Predicated region
    $region26: #{tpu_custom_call.1} parent=1 // pred_check
      _
    $region27: #{tpu_custom_call.1} parent=1 // pred_check_branch
      %49 = sbr.rel (0) target = $region29
    $region28: #{tpu_custom_call.1} parent=1 // pred_region
      %s51 = ssub.s32 6144, 6144
      %52 = vsyncadd [#allocation7], %s51
      %s53 = sshll.u32 [#allocation8], 4
      %s54 = int_to_ptr.vmem [resolvable:$true] %s53
      %59 = dma.hbm_to_vmem [thread:$0]  %s6, 6144, %s54, [#allocation7], 384, 384, 24
    $region29: #{tpu_custom_call.1} parent=1 // pred_fallthru
      _
    // Predicated region
    $region30: #{tpu_custom_call.1} parent=1 // pred_check
      _
    $region31: #{tpu_custom_call.1} parent=1 // pred_check_branch
      %61 = sbr.rel (0) target = $region33
    $region32: #{tpu_custom_call.1} parent=1 // pred_region
      _
    $region33: #{tpu_custom_call.1} parent=1 // pred_fallthru
      _
    // Predicated region
    $region34: #{tpu_custom_call.1} parent=1 // pred_check
      _
    $region35: #{tpu_custom_call.1} parent=1 // pred_check_branch
      %63 = sbr.rel (0) target = $region37
    $region36: #{tpu_custom_call.1} parent=1 // pred_region
      %64 = dma.done [#allocation4], 6144
    $region37: #{tpu_custom_call.1} parent=1 // pred_fallthru
      _
    // Predicated region
    $region38: #{tpu_custom_call.1} parent=1 // pred_check
      _
    $region39: #{tpu_custom_call.1} parent=1 // pred_check_branch
      %66 = sbr.rel (0) target = $region41
    $region40: #{tpu_custom_call.1} parent=1 // pred_region
      %67 = dma.done [#allocation7], 6144
    $region41: #{tpu_custom_call.1} parent=1 // pred_fallthru
      _
    // Predicated region
    $region42: #{tpu_custom_call.1} parent=1 // pred_check
      _
    $region43: #{tpu_custom_call.1} parent=1 // pred_check_branch
      %69 = sbr.rel (0) target = $region45
    $region44: #{tpu_custom_call.1} parent=1 // pred_region
      %70 = dma.done [#allocation7], 6144
    $region45: #{tpu_custom_call.1} parent=1 // pred_fallthru
      _
    %v71 = vld [vmem:[%s2] sm:$0xff]
    %v72 = vld [vmem:[%s2 + $0x8] sm:$0xff]
    %v73 = vld [vmem:[%s2 + $0x10] sm:$0xff]
    %v74 = vld [vmem:[%s2 + $0x18] sm:$0xff]
    %v75 = vld [vmem:[%s2 + $0x20] sm:$0xff]
    %v76 = vld [vmem:[%s2 + $0x28] sm:$0xff]
    %v77 = vld [vmem:[%s2 + $0x30] sm:$0x3]
    %v78 = vlaneseq
    %v79 = vand.u32 %v78, 127
    %v80 = vld [vmem:[%s0] sm:$0xff]
    %v81 = vld [vmem:[%s0 + $0x8] sm:$0xff]
    %v82 = vld [vmem:[%s0 + $0x10] sm:$0xff]
    %v83 = vld [vmem:[%s0 + $0x18] sm:$0xff]
    %84 = vset.pattern.permute.xlu0 0
    %85 = vperm.xlu0 %84, %v80
    %v86 = vpop.permute.xlu0 %85
    %87 = vset.pattern.permute.xlu0 0
    %88 = vperm.xlu0 %87, %v81
    %v89 = vpop.permute.xlu0 %88
    %90 = vset.pattern.permute.xlu0 0
    %91 = vperm.xlu0 %90, %v82
    %v92 = vpop.permute.xlu0 %91
    %93 = vset.pattern.permute.xlu0 0
    %94 = vperm.xlu0 %93, %v83
    %v95 = vpop.permute.xlu0 %94
    %vm96 = vcmp.eq.s32.totalorder %v86, %v79
    %vm97 = vcmp.eq.s32.totalorder %v89, %v79
    %vm98 = vcmp.eq.s32.totalorder %v92, %v79
    %vm99 = vcmp.eq.s32.totalorder %v95, %v79
    %v100 = vsel %vm96, 1, 0
    %v101 = vsel %vm97, 1, 0
    %v102 = vsel %vm98, 1, 0
    %v103 = vsel %vm99, 1, 0
    %v104 = vcvt.s32.f32 %v100
    %v105 = vcvt.s32.f32 %v101
    %v106 = vcvt.s32.f32 %v102
    %v107 = vcvt.s32.f32 %v103
    %v108 = vld [vmem:[%s1] sm:$0xff]
    %v109 = vld [vmem:[%s1 + $0x8] sm:$0xff]
    %v110 = vld [vmem:[%s1 + $0x10] sm:$0xff]
    %v111 = vld [vmem:[%s1 + $0x18] sm:$0xff]
    %112 = vset.pattern.permute.xlu0 0
    %113 = vperm.xlu0 %112, %v108
    %v114 = vpop.permute.xlu0 %113
    %115 = vset.pattern.permute.xlu0 0
    %116 = vperm.xlu0 %115, %v109
    %v117 = vpop.permute.xlu0 %116
    %118 = vset.pattern.permute.xlu0 0
    %119 = vperm.xlu0 %118, %v110
    %v120 = vpop.permute.xlu0 %119
    %121 = vset.pattern.permute.xlu0 0
    %122 = vperm.xlu0 %121, %v111
    %v123 = vpop.permute.xlu0 %122
    %vm124 = vcmp.eq.s32.totalorder %v114, %v79
    %vm125 = vcmp.eq.s32.totalorder %v117, %v79
    %vm126 = vcmp.eq.s32.totalorder %v120, %v79
    %vm127 = vcmp.eq.s32.totalorder %v123, %v79
    %v128 = vsel %vm124, 1, 0
    %v129 = vsel %vm125, 1, 0
    %v130 = vsel %vm126, 1, 0
    %v131 = vsel %vm127, 1, 0
    %v132 = vcvt.s32.f32 %v128
    %v133 = vcvt.s32.f32 %v129
    %v134 = vcvt.s32.f32 %v130
    %v135 = vcvt.s32.f32 %v131
    %vm136 = vcmask 408576
    %v138 = vsel %vm136, %v104, 0
    %v141 = vsel %vm136, %v105, 0
    %v144 = vsel %vm136, %v106, 0
    %v147 = vsel %vm136, %v107, 0
    %vm149 = vcmask 1041408
    %v151 = vsel %vm149, %v77, 0
    %153 = vmatprep.subr.mxu0 0.0
    %154 = vmatpush1.msra.mxu0 %v71
    %155 = vmatprep.subr.mxu0 0.0
    %156 = vmatpush1.msra.mxu0 %v72
    %157 = vmatprep.subr.mxu0 0.0
    %158 = vmatpush1.msra.mxu0 %v73
    %159 = vmatprep.subr.mxu0 0.0
    %160 = vmatpush1.msra.mxu0 %v74
    %161 = vmatprep.subr.mxu0 0.0
    %162 = vmatpush1.msra.mxu0 %v75
    %163 = vmatprep.subr.mxu0 0.0
    %164 = vmatpush1.msra.mxu0 %v76
    %165 = vmatprep.subr.mxu0 0.0
    %166 = vmatpush1.msra.mxu0 %v151
    %167 = vmatprep.subr.mxu0 0.0
    %168 = vmatpush1.msra.mxu0 0.0
    %169 = vmatprep.subr.mxu0 0.0
    %170 = vmatpush1.msra.mxu0 0.0
    %171 = vmatprep.subr.mxu0 0.0
    %172 = vmatpush1.msra.mxu0 0.0
    %173 = vmatprep.subr.mxu0 0.0
    %174 = vmatpush1.msra.mxu0 0.0
    %175 = vmatprep.subr.mxu0 0.0
    %176 = vmatpush1.msra.mxu0 0.0
    %177 = vmatprep.subr.mxu0 0.0
    %178 = vmatpush1.msra.mxu0 0.0
    %179 = vmatprep.subr.mxu0 0.0
    %180 = vmatpush1.msra.mxu0 0.0
    %181 = vmatprep.subr.mxu0 0.0
    %182 = vmatpush1.msra.mxu0 0.0
    %183 = vmatprep.subr.mxu0 0.0
    %184 = vmatpush1.msra.mxu0 0.0
    %185 = vmatprep.subr.mxu0 0.0
    %186 = vmatpush1.msra.mxu0 0.0
    %187 = vmatprep.subr.mxu0 0.0
    %188 = vmatpush1.msra.mxu0 0.0
    %189 = vmatprep.subr.mxu0 0.0
    %190 = vmatpush1.msra.mxu0 0.0
    %191 = vmatprep.subr.mxu0 0.0
    %192 = vmatpush1.msra.mxu0 0.0
    %193 = vmatprep.subr.mxu0 0.0
    %194 = vmatpush1.msra.mxu0 0.0
    %195 = vmatprep.subr.mxu0 0.0
    %196 = vmatpush1.msra.mxu0 0.0
    %197 = vmatprep.subr.mxu0 0.0
    %198 = vmatpush1.msra.mxu0 0.0
    %199 = vmatprep.subr.mxu0 0.0
    %200 = vmatpush1.msra.mxu0 0.0
    %201 = vmatprep.subr.mxu0 0.0
    %202 = vmatpush1.msra.mxu0 0.0
    %203 = vmatprep.subr.mxu0 0.0
    %204 = vmatpush1.msra.mxu0 0.0
    %205 = vmatprep.subr.mxu0 0.0
    %206 = vmatpush1.msra.mxu0 0.0
    %207 = vmatprep.subr.mxu0 0.0
    %208 = vmatpush1.msra.mxu0 0.0
    %209 = vmatprep.subr.mxu0 0.0
    %210 = vmatpush1.msra.mxu0 0.0
    %211 = vmatprep.subr.mxu0 0.0
    %212 = vmatpush1.msra.mxu0 0.0
    %213 = vmatprep.subr.mxu0 0.0
    %214 = vmatpush1.msra.mxu0 0.0
    %215 = vmatprep.subr.mxu0 0.0
    %216 = vmatpush1.msra.mxu0 0.0
    %217 = vmatprep.mubr.f32.mxu0 0.0
    %218 = vmatmul.mubr.f32.gmra.mrb[0].mxu0 %v138
    %v219 = vpop.f32.mrb[0].mxu0
    %v220 = vadd.f32 0.0, %v219
    %v221 = vpop.f32.mrb[0].mxu0
    %222 = vmatprep.mubr.f32.mxu0 0.0
    %223 = vmatmul.mubr.f32.gmra.mrb[0].mxu0 %v141
    %v224 = vpop.f32.mrb[0].mxu0
    %v225 = vadd.f32 0.0, %v224
    %v226 = vpop.f32.mrb[0].mxu0
    %227 = vmatprep.mubr.f32.mxu0 0.0
    %228 = vmatmul.mubr.f32.gmra.mrb[0].mxu0 %v144
    %v229 = vpop.f32.mrb[0].mxu0
    %v230 = vadd.f32 0.0, %v229
    %v231 = vpop.f32.mrb[0].mxu0
    %232 = vmatprep.mubr.f32.mxu0 0.0
    %233 = vmatmul.mubr.f32.gmra.mrb[0].mxu0 %v147
    %v234 = vpop.f32.mrb[0].mxu0
    %v235 = vadd.f32 0.0, %v234
    %v236 = vpop.f32.mrb[0].mxu0
    %237 = vdwg.mxu0
    %v239 = vsel %vm136, %v132, 0
    %v242 = vsel %vm136, %v133, 0
    %v245 = vsel %vm136, %v134, 0
    %v248 = vsel %vm136, %v135, 0
    %250 = vmatprep.subr.mxu0 0.0
    %251 = vmatpush1.msra.mxu0 %v71
    %252 = vmatprep.subr.mxu0 0.0
    %253 = vmatpush1.msra.mxu0 %v72
    %254 = vmatprep.subr.mxu0 0.0
    %255 = vmatpush1.msra.mxu0 %v73
    %256 = vmatprep.subr.mxu0 0.0
    %257 = vmatpush1.msra.mxu0 %v74
    %258 = vmatprep.subr.mxu0 0.0
    %259 = vmatpush1.msra.mxu0 %v75
    %260 = vmatprep.subr.mxu0 0.0
    %261 = vmatpush1.msra.mxu0 %v76
    %262 = vmatprep.subr.mxu0 0.0
    %263 = vmatpush1.msra.mxu0 %v151
    %264 = vmatprep.subr.mxu0 0.0
    %265 = vmatpush1.msra.mxu0 0.0
    %266 = vmatprep.subr.mxu0 0.0
    %267 = vmatpush1.msra.mxu0 0.0
    %268 = vmatprep.subr.mxu0 0.0
    %269 = vmatpush1.msra.mxu0 0.0
    %270 = vmatprep.subr.mxu0 0.0
    %271 = vmatpush1.msra.mxu0 0.0
    %272 = vmatprep.subr.mxu0 0.0
    %273 = vmatpush1.msra.mxu0 0.0
    %274 = vmatprep.subr.mxu0 0.0
    %275 = vmatpush1.msra.mxu0 0.0
    %276 = vmatprep.subr.mxu0 0.0
    %277 = vmatpush1.msra.mxu0 0.0
    %278 = vmatprep.subr.mxu0 0.0
    %279 = vmatpush1.msra.mxu0 0.0
    %280 = vmatprep.subr.mxu0 0.0
    %281 = vmatpush1.msra.mxu0 0.0
    %282 = vmatprep.subr.mxu0 0.0
    %283 = vmatpush1.msra.mxu0 0.0
    %284 = vmatprep.subr.mxu0 0.0
    %285 = vmatpush1.msra.mxu0 0.0
    %286 = vmatprep.subr.mxu0 0.0
    %287 = vmatpush1.msra.mxu0 0.0
    %288 = vmatprep.subr.mxu0 0.0
    %289 = vmatpush1.msra.mxu0 0.0
    %290 = vmatprep.subr.mxu0 0.0
    %291 = vmatpush1.msra.mxu0 0.0
    %292 = vmatprep.subr.mxu0 0.0
    %293 = vmatpush1.msra.mxu0 0.0
    %294 = vmatprep.subr.mxu0 0.0
    %295 = vmatpush1.msra.mxu0 0.0
    %296 = vmatprep.subr.mxu0 0.0
    %297 = vmatpush1.msra.mxu0 0.0
    %298 = vmatprep.subr.mxu0 0.0
    %299 = vmatpush1.msra.mxu0 0.0
    %300 = vmatprep.subr.mxu0 0.0
    %301 = vmatpush1.msra.mxu0 0.0
    %302 = vmatprep.subr.mxu0 0.0
    %303 = vmatpush1.msra.mxu0 0.0
    %304 = vmatprep.subr.mxu0 0.0
    %305 = vmatpush1.msra.mxu0 0.0
    %306 = vmatprep.subr.mxu0 0.0
    %307 = vmatpush1.msra.mxu0 0.0
    %308 = vmatprep.subr.mxu0 0.0
    %309 = vmatpush1.msra.mxu0 0.0
    %310 = vmatprep.subr.mxu0 0.0
    %311 = vmatpush1.msra.mxu0 0.0
    %312 = vmatprep.subr.mxu0 0.0
    %313 = vmatpush1.msra.mxu0 0.0
    %314 = vmatprep.mubr.f32.mxu0 0.0
    %315 = vmatmul.mubr.f32.gmra.mrb[0].mxu0 %v239
    %v316 = vpop.f32.mrb[0].mxu0
    %v317 = vadd.f32 0.0, %v316
    %v318 = vpop.f32.mrb[0].mxu0
    %319 = vmatprep.mubr.f32.mxu0 0.0
    %320 = vmatmul.mubr.f32.gmra.mrb[0].mxu0 %v242
    %v321 = vpop.f32.mrb[0].mxu0
    %v322 = vadd.f32 0.0, %v321
    %v323 = vpop.f32.mrb[0].mxu0
    %324 = vmatprep.mubr.f32.mxu0 0.0
    %325 = vmatmul.mubr.f32.gmra.mrb[0].mxu0 %v245
    %v326 = vpop.f32.mrb[0].mxu0
    %v327 = vadd.f32 0.0, %v326
    %v328 = vpop.f32.mrb[0].mxu0
    %329 = vmatprep.mubr.f32.mxu0 0.0
    %330 = vmatmul.mubr.f32.gmra.mrb[0].mxu0 %v248
    %v331 = vpop.f32.mrb[0].mxu0
    %v332 = vadd.f32 0.0, %v331
    %v333 = vpop.f32.mrb[0].mxu0
    %334 = vdwg.mxu0
    %v335 = vld [vmem:[#allocation3] sm:$0xff]
    %v336 = vld [vmem:[#allocation3 + $0x8] sm:$0xff]
    %v337 = vld [vmem:[#allocation3 + $0x10] sm:$0xff]
    %v338 = vld [vmem:[#allocation3 + $0x18] sm:$0xff]
    %v339 = vld [vmem:[#allocation3 + $0x20] sm:$0xff]
    %v340 = vld [vmem:[#allocation3 + $0x28] sm:$0xff]
    %v341 = vld [vmem:[#allocation3 + $0x30] sm:$0xff]
    %v342 = vld [vmem:[#allocation3 + $0x38] sm:$0xff]
    %v343 = vld [vmem:[#allocation3 + $0x40] sm:$0xff]
    %v344 = vld [vmem:[#allocation3 + $0x48] sm:$0xff]
    %v345 = vld [vmem:[#allocation3 + $0x50] sm:$0xff]
    %v346 = vld [vmem:[#allocation3 + $0x58] sm:$0xff]
    %v347 = vld [vmem:[#allocation3 + $0x60] sm:$0xff]
    %v348 = vld [vmem:[#allocation3 + $0x68] sm:$0xff]
    %v349 = vld [vmem:[#allocation3 + $0x70] sm:$0xff]
    %v350 = vld [vmem:[#allocation3 + $0x78] sm:$0xff]
    %v351 = vld [vmem:[#allocation3 + $0x80] sm:$0xff]
    %v352 = vld [vmem:[#allocation3 + $0x88] sm:$0xff]
    %v353 = vld [vmem:[#allocation3 + $0x90] sm:$0xff]
    %v354 = vld [vmem:[#allocation3 + $0x98] sm:$0xff]
    %v355 = vld [vmem:[#allocation3 + $0xa0] sm:$0xff]
    %v356 = vld [vmem:[#allocation3 + $0xa8] sm:$0xff]
    %v357 = vld [vmem:[#allocation3 + $0xb0] sm:$0xff]
    %v358 = vld [vmem:[#allocation3 + $0xb8] sm:$0xff]
    %v359 = vld [vmem:[#allocation3 + $0xc0] sm:$0xff]
    %v360 = vld [vmem:[#allocation3 + $0xc8] sm:$0xff]
    %v361 = vld [vmem:[#allocation3 + $0xd0] sm:$0xff]
    %v362 = vld [vmem:[#allocation3 + $0xd8] sm:$0xff]
    %v363 = vld [vmem:[#allocation3 + $0xe0] sm:$0xff]
    %v364 = vld [vmem:[#allocation3 + $0xe8] sm:$0xff]
    %v365 = vld [vmem:[#allocation3 + $0xf0] sm:$0xff]
    %v366 = vld [vmem:[#allocation3 + $0xf8] sm:$0xff]
    %v367 = vld [vmem:[#allocation3 + $0x100] sm:$0xff]
    %v368 = vld [vmem:[#allocation3 + $0x108] sm:$0xff]
    %v369 = vld [vmem:[#allocation3 + $0x110] sm:$0xff]
    %v370 = vld [vmem:[#allocation3 + $0x118] sm:$0xff]
    %v371 = vld [vmem:[#allocation3 + $0x120] sm:$0xff]
    %v372 = vld [vmem:[#allocation3 + $0x128] sm:$0xff]
    %v373 = vld [vmem:[#allocation3 + $0x130] sm:$0xff]
    %v374 = vld [vmem:[#allocation3 + $0x138] sm:$0xff]
    %v375 = vld [vmem:[#allocation3 + $0x140] sm:$0xff]
    %v376 = vld [vmem:[#allocation3 + $0x148] sm:$0xff]
    %v377 = vld [vmem:[#allocation3 + $0x150] sm:$0xff]
    %v378 = vld [vmem:[#allocation3 + $0x158] sm:$0xff]
    %v379 = vld [vmem:[#allocation3 + $0x160] sm:$0xff]
    %v380 = vld [vmem:[#allocation3 + $0x168] sm:$0xff]
    %v381 = vld [vmem:[#allocation3 + $0x170] sm:$0xff]
    %v382 = vld [vmem:[#allocation3 + $0x178] sm:$0xff]
    %v383 = vld [vmem:[#allocation6] sm:$0xff]
    %v384 = vld [vmem:[#allocation6 + $0x8] sm:$0xff]
    %v385 = vld [vmem:[#allocation6 + $0x10] sm:$0xff]
    %v386 = vld [vmem:[#allocation6 + $0x18] sm:$0xff]
    %v387 = vld [vmem:[#allocation6 + $0x20] sm:$0xff]
    %v388 = vld [vmem:[#allocation6 + $0x28] sm:$0xff]
    %v389 = vld [vmem:[#allocation6 + $0x30] sm:$0xff]
    %v390 = vld [vmem:[#allocation6 + $0x38] sm:$0xff]
    %v391 = vld [vmem:[#allocation6 + $0x40] sm:$0xff]
    %v392 = vld [vmem:[#allocation6 + $0x48] sm:$0xff]
    %v393 = vld [vmem:[#allocation6 + $0x50] sm:$0xff]
    %v394 = vld [vmem:[#allocation6 + $0x58] sm:$0xff]
    %v395 = vld [vmem:[#allocation6 + $0x60] sm:$0xff]
    %v396 = vld [vmem:[#allocation6 + $0x68] sm:$0xff]
    %v397 = vld [vmem:[#allocation6 + $0x70] sm:$0xff]
    %v398 = vld [vmem:[#allocation6 + $0x78] sm:$0xff]
    %v399 = vld [vmem:[#allocation6 + $0x80] sm:$0xff]
    %v400 = vld [vmem:[#allocation6 + $0x88] sm:$0xff]
    %v401 = vld [vmem:[#allocation6 + $0x90] sm:$0xff]
    %v402 = vld [vmem:[#allocation6 + $0x98] sm:$0xff]
    %v403 = vld [vmem:[#allocation6 + $0xa0] sm:$0xff]
    %v404 = vld [vmem:[#allocation6 + $0xa8] sm:$0xff]
    %v405 = vld [vmem:[#allocation6 + $0xb0] sm:$0xff]
    %v406 = vld [vmem:[#allocation6 + $0xb8] sm:$0xff]
    %v407 = vld [vmem:[#allocation6 + $0xc0] sm:$0xff]
    %v408 = vld [vmem:[#allocation6 + $0xc8] sm:$0xff]
    %v409 = vld [vmem:[#allocation6 + $0xd0] sm:$0xff]
    %v410 = vld [vmem:[#allocation6 + $0xd8] sm:$0xff]
    %v411 = vld [vmem:[#allocation6 + $0xe0] sm:$0xff]
    %v412 = vld [vmem:[#allocation6 + $0xe8] sm:$0xff]
    %v413 = vld [vmem:[#allocation6 + $0xf0] sm:$0xff]
    %v414 = vld [vmem:[#allocation6 + $0xf8] sm:$0xff]
    %v415 = vld [vmem:[#allocation6 + $0x100] sm:$0xff]
    %v416 = vld [vmem:[#allocation6 + $0x108] sm:$0xff]
    %v417 = vld [vmem:[#allocation6 + $0x110] sm:$0xff]
    %v418 = vld [vmem:[#allocation6 + $0x118] sm:$0xff]
    %v419 = vld [vmem:[#allocation6 + $0x120] sm:$0xff]
    %v420 = vld [vmem:[#allocation6 + $0x128] sm:$0xff]
    %v421 = vld [vmem:[#allocation6 + $0x130] sm:$0xff]
    %v422 = vld [vmem:[#allocation6 + $0x138] sm:$0xff]
    %v423 = vld [vmem:[#allocation6 + $0x140] sm:$0xff]
    %v424 = vld [vmem:[#allocation6 + $0x148] sm:$0xff]
    %v425 = vld [vmem:[#allocation6 + $0x150] sm:$0xff]
    %v426 = vld [vmem:[#allocation6 + $0x158] sm:$0xff]
    %v427 = vld [vmem:[#allocation6 + $0x160] sm:$0xff]
    %v428 = vld [vmem:[#allocation6 + $0x168] sm:$0xff]
    %v429 = vld [vmem:[#allocation6 + $0x170] sm:$0xff]
    %v430 = vld [vmem:[#allocation6 + $0x178] sm:$0xff]
    %431 = vmatprep.subr.mxu0 %v384
    %432 = vmatpush1.msra.mxu0 %v383
    %433 = vmatprep.subr.mxu0 %v387
    %434 = vmatpush1.msra.mxu0 %v386
    %435 = vmatprep.subr.mxu0 %v390
    %436 = vmatpush1.msra.mxu0 %v389
    %437 = vmatprep.subr.mxu0 %v393
    %438 = vmatpush1.msra.mxu0 %v392
    %439 = vmatprep.subr.mxu0 %v396
    %440 = vmatpush1.msra.mxu0 %v395
    %441 = vmatprep.subr.mxu0 %v399
    %442 = vmatpush1.msra.mxu0 %v398
    %443 = vmatprep.subr.mxu0 %v402
    %444 = vmatpush1.msra.mxu0 %v401
    %445 = vmatprep.subr.mxu0 %v405
    %446 = vmatpush1.msra.mxu0 %v404
    %447 = vmatprep.subr.mxu0 %v408
    %448 = vmatpush1.msra.mxu0 %v407
    %449 = vmatprep.subr.mxu0 %v411
    %450 = vmatpush1.msra.mxu0 %v410
    %451 = vmatprep.subr.mxu0 %v414
    %452 = vmatpush1.msra.mxu0 %v413
    %453 = vmatprep.subr.mxu0 %v417
    %454 = vmatpush1.msra.mxu0 %v416
    %455 = vmatprep.subr.mxu0 %v420
    %456 = vmatpush1.msra.mxu0 %v419
    %457 = vmatprep.subr.mxu0 %v423
    %458 = vmatpush1.msra.mxu0 %v422
    %459 = vmatprep.subr.mxu0 %v426
    %460 = vmatpush1.msra.mxu0 %v425
    %461 = vmatprep.subr.mxu0 %v429
    %462 = vmatpush1.msra.mxu0 %v428
    %463 = vmatprep.subr.mxu0 0.0
    %464 = vmatpush1.msra.mxu0 0.0
    %465 = vmatprep.subr.mxu0 0.0
    %466 = vmatpush1.msra.mxu0 0.0
    %467 = vmatprep.subr.mxu0 0.0
    %468 = vmatpush1.msra.mxu0 0.0
    %469 = vmatprep.subr.mxu0 0.0
    %470 = vmatpush1.msra.mxu0 0.0
    %471 = vmatprep.subr.mxu0 0.0
    %472 = vmatpush1.msra.mxu0 0.0
    %473 = vmatprep.subr.mxu0 0.0
    %474 = vmatpush1.msra.mxu0 0.0
    %475 = vmatprep.subr.mxu0 0.0
    %476 = vmatpush1.msra.mxu0 0.0
    %477 = vmatprep.subr.mxu0 0.0
    %478 = vmatpush1.msra.mxu0 0.0
    %479 = vmatprep.subr.mxu0 0.0
    %480 = vmatpush1.msra.mxu0 0.0
    %481 = vmatprep.subr.mxu0 0.0
    %482 = vmatpush1.msra.mxu0 0.0
    %483 = vmatprep.subr.mxu0 0.0
    %484 = vmatpush1.msra.mxu0 0.0
    %485 = vmatprep.subr.mxu0 0.0
    %486 = vmatpush1.msra.mxu0 0.0
    %487 = vmatprep.subr.mxu0 0.0
    %488 = vmatpush1.msra.mxu0 0.0
    %489 = vmatprep.subr.mxu0 0.0
    %490 = vmatpush1.msra.mxu0 0.0
    %491 = vmatprep.subr.mxu0 0.0
    %492 = vmatpush1.msra.mxu0 0.0
    %493 = vmatprep.subr.mxu0 0.0
    %494 = vmatpush1.msra.mxu0 0.0
    %495 = vmatprep.mubr.f32.mxu0 0.0
    %496 = vmatmul.mubr.f32.gmra.mrb[0].mxu0 %v317
    %v497 = vpop.f32.mrb[0].mxu0
    %v498 = vadd.f32 0.0, %v497
    %v499 = vpop.f32.mrb[0].mxu0
    %v500 = vadd.f32 0.0, %v499
    %501 = vmatprep.mubr.f32.mxu0 0.0
    %502 = vmatmul.mubr.f32.gmra.mrb[0].mxu0 %v322
    %v503 = vpop.f32.mrb[0].mxu0
    %v504 = vadd.f32 0.0, %v503
    %v505 = vpop.f32.mrb[0].mxu0
    %v506 = vadd.f32 0.0, %v505
    %507 = vmatprep.mubr.f32.mxu0 0.0
    %508 = vmatmul.mubr.f32.gmra.mrb[0].mxu0 %v327
    %v509 = vpop.f32.mrb[0].mxu0
    %v510 = vadd.f32 0.0, %v509
    %v511 = vpop.f32.mrb[0].mxu0
    %v512 = vadd.f32 0.0, %v511
    %513 = vmatprep.mubr.f32.mxu0 0.0
    %514 = vmatmul.mubr.f32.gmra.mrb[0].mxu0 %v332
    %v515 = vpop.f32.mrb[0].mxu0
    %v516 = vadd.f32 0.0, %v515
    %v517 = vpop.f32.mrb[0].mxu0
    %v518 = vadd.f32 0.0, %v517
    %519 = vdwg.mxu0
    %520 = vmatprep.subr.mxu0 0.0
    %521 = vmatpush1.msra.mxu0 %v385
    %522 = vmatprep.subr.mxu0 0.0
    %523 = vmatpush1.msra.mxu0 %v388
    %524 = vmatprep.subr.mxu0 0.0
    %525 = vmatpush1.msra.mxu0 %v391
    %526 = vmatprep.subr.mxu0 0.0
    %527 = vmatpush1.msra.mxu0 %v394
    %528 = vmatprep.subr.mxu0 0.0
    %529 = vmatpush1.msra.mxu0 %v397
    %530 = vmatprep.subr.mxu0 0.0
    %531 = vmatpush1.msra.mxu0 %v400
    %532 = vmatprep.subr.mxu0 0.0
    %533 = vmatpush1.msra.mxu0 %v403
    %534 = vmatprep.subr.mxu0 0.0
    %535 = vmatpush1.msra.mxu0 %v406
    %536 = vmatprep.subr.mxu0 0.0
    %537 = vmatpush1.msra.mxu0 %v409
    %538 = vmatprep.subr.mxu0 0.0
    %539 = vmatpush1.msra.mxu0 %v412
    %540 = vmatprep.subr.mxu0 0.0
    %541 = vmatpush1.msra.mxu0 %v415
    %542 = vmatprep.subr.mxu0 0.0
    %543 = vmatpush1.msra.mxu0 %v418
    %544 = vmatprep.subr.mxu0 0.0
    %545 = vmatpush1.msra.mxu0 %v421
    %546 = vmatprep.subr.mxu0 0.0
    %547 = vmatpush1.msra.mxu0 %v424
    %548 = vmatprep.subr.mxu0 0.0
    %549 = vmatpush1.msra.mxu0 %v427
    %550 = vmatprep.subr.mxu0 0.0
    %551 = vmatpush1.msra.mxu0 %v430
    %552 = vmatprep.subr.mxu0 0.0
    %553 = vmatpush1.msra.mxu0 0.0
    %554 = vmatprep.subr.mxu0 0.0
    %555 = vmatpush1.msra.mxu0 0.0
    %556 = vmatprep.subr.mxu0 0.0
    %557 = vmatpush1.msra.mxu0 0.0
    %558 = vmatprep.subr.mxu0 0.0
    %559 = vmatpush1.msra.mxu0 0.0
    %560 = vmatprep.subr.mxu0 0.0
    %561 = vmatpush1.msra.mxu0 0.0
    %562 = vmatprep.subr.mxu0 0.0
    %563 = vmatpush1.msra.mxu0 0.0
    %564 = vmatprep.subr.mxu0 0.0
    %565 = vmatpush1.msra.mxu0 0.0
    %566 = vmatprep.subr.mxu0 0.0
    %567 = vmatpush1.msra.mxu0 0.0
    %568 = vmatprep.subr.mxu0 0.0
    %569 = vmatpush1.msra.mxu0 0.0
    %570 = vmatprep.subr.mxu0 0.0
    %571 = vmatpush1.msra.mxu0 0.0
    %572 = vmatprep.subr.mxu0 0.0
    %573 = vmatpush1.msra.mxu0 0.0
    %574 = vmatprep.subr.mxu0 0.0
    %575 = vmatpush1.msra.mxu0 0.0
    %576 = vmatprep.subr.mxu0 0.0
    %577 = vmatpush1.msra.mxu0 0.0
    %578 = vmatprep.subr.mxu0 0.0
    %579 = vmatpush1.msra.mxu0 0.0
    %580 = vmatprep.subr.mxu0 0.0
    %581 = vmatpush1.msra.mxu0 0.0
    %582 = vmatprep.subr.mxu0 0.0
    %583 = vmatpush1.msra.mxu0 0.0
    %584 = vmatprep.mubr.f32.mxu0 0.0
    %585 = vmatmul.mubr.f32.gmra.mrb[0].mxu0 %v317
    %v586 = vpop.f32.mrb[0].mxu0
    %v587 = vadd.f32 0.0, %v586
    %v588 = vpop.f32.mrb[0].mxu0
    %589 = vmatprep.mubr.f32.mxu0 0.0
    %590 = vmatmul.mubr.f32.gmra.mrb[0].mxu0 %v322
    %v591 = vpop.f32.mrb[0].mxu0
    %v592 = vadd.f32 0.0, %v591
    %v593 = vpop.f32.mrb[0].mxu0
    %594 = vmatprep.mubr.f32.mxu0 0.0
    %595 = vmatmul.mubr.f32.gmra.mrb[0].mxu0 %v327
    %v596 = vpop.f32.mrb[0].mxu0
    %v597 = vadd.f32 0.0, %v596
    %v598 = vpop.f32.mrb[0].mxu0
    %599 = vmatprep.mubr.f32.mxu0 0.0
    %600 = vmatmul.mubr.f32.gmra.mrb[0].mxu0 %v332
    %v601 = vpop.f32.mrb[0].mxu0
    %v602 = vadd.f32 0.0, %v601
    %v603 = vpop.f32.mrb[0].mxu0
    %604 = vdwg.mxu0
    %605 = vmatprep.subr.mxu0 %v336
    %606 = vmatpush1.msra.mxu0 %v335
    %607 = vmatprep.subr.mxu0 %v339
    %608 = vmatpush1.msra.mxu0 %v338
    %609 = vmatprep.subr.mxu0 %v342
    %610 = vmatpush1.msra.mxu0 %v341
    %611 = vmatprep.subr.mxu0 %v345
    %612 = vmatpush1.msra.mxu0 %v344
    %613 = vmatprep.subr.mxu0 %v348
    %614 = vmatpush1.msra.mxu0 %v347
    %615 = vmatprep.subr.mxu0 %v351
    %616 = vmatpush1.msra.mxu0 %v350
    %617 = vmatprep.subr.mxu0 %v354
    %618 = vmatpush1.msra.mxu0 %v353
    %619 = vmatprep.subr.mxu0 %v357
    %620 = vmatpush1.msra.mxu0 %v356
    %621 = vmatprep.subr.mxu0 %v360
    %622 = vmatpush1.msra.mxu0 %v359
    %623 = vmatprep.subr.mxu0 %v363
    %624 = vmatpush1.msra.mxu0 %v362
    %625 = vmatprep.subr.mxu0 %v366
    %626 = vmatpush1.msra.mxu0 %v365
    %627 = vmatprep.subr.mxu0 %v369
    %628 = vmatpush1.msra.mxu0 %v368
    %629 = vmatprep.subr.mxu0 %v372
    %630 = vmatpush1.msra.mxu0 %v371
    %631 = vmatprep.subr.mxu0 %v375
    %632 = vmatpush1.msra.mxu0 %v374
    %633 = vmatprep.subr.mxu0 %v378
    %634 = vmatpush1.msra.mxu0 %v377
    %635 = vmatprep.subr.mxu0 %v381
    %636 = vmatpush1.msra.mxu0 %v380
    %637 = vmatprep.subr.mxu0 0.0
    %638 = vmatpush1.msra.mxu0 0.0
    %639 = vmatprep.subr.mxu0 0.0
    %640 = vmatpush1.msra.mxu0 0.0
    %641 = vmatprep.subr.mxu0 0.0
    %642 = vmatpush1.msra.mxu0 0.0
    %643 = vmatprep.subr.mxu0 0.0
    %644 = vmatpush1.msra.mxu0 0.0
    %645 = vmatprep.subr.mxu0 0.0
    %646 = vmatpush1.msra.mxu0 0.0
    %647 = vmatprep.subr.mxu0 0.0
    %648 = vmatpush1.msra.mxu0 0.0
    %649 = vmatprep.subr.mxu0 0.0
    %650 = vmatpush1.msra.mxu0 0.0
    %651 = vmatprep.subr.mxu0 0.0
    %652 = vmatpush1.msra.mxu0 0.0
    %653 = vmatprep.subr.mxu0 0.0
    %654 = vmatpush1.msra.mxu0 0.0
    %655 = vmatprep.subr.mxu0 0.0
    %656 = vmatpush1.msra.mxu0 0.0
    %657 = vmatprep.subr.mxu0 0.0
    %658 = vmatpush1.msra.mxu0 0.0
    %659 = vmatprep.subr.mxu0 0.0
    %660 = vmatpush1.msra.mxu0 0.0
    %661 = vmatprep.subr.mxu0 0.0
    %662 = vmatpush1.msra.mxu0 0.0
    %663 = vmatprep.subr.mxu0 0.0
    %664 = vmatpush1.msra.mxu0 0.0
    %665 = vmatprep.subr.mxu0 0.0
    %666 = vmatpush1.msra.mxu0 0.0
    %667 = vmatprep.subr.mxu0 0.0
    %668 = vmatpush1.msra.mxu0 0.0
    %669 = vmatprep.mubr.f32.mxu0 0.0
    %670 = vmatmul.mubr.f32.gmra.mrb[0].mxu0 %v220
    %v671 = vpop.f32.mrb[0].mxu0
    %v672 = vadd.f32 %v498, %v671
    %v673 = vpop.f32.mrb[0].mxu0
    %v674 = vadd.f32 %v500, %v673
    %675 = vmatprep.mubr.f32.mxu0 0.0
    %676 = vmatmul.mubr.f32.gmra.mrb[0].mxu0 %v225
    %v677 = vpop.f32.mrb[0].mxu0
    %v678 = vadd.f32 %v504, %v677
    %v679 = vpop.f32.mrb[0].mxu0
    %v680 = vadd.f32 %v506, %v679
    %681 = vmatprep.mubr.f32.mxu0 0.0
    %682 = vmatmul.mubr.f32.gmra.mrb[0].mxu0 %v230
    %v683 = vpop.f32.mrb[0].mxu0
    %v684 = vadd.f32 %v510, %v683
    %v685 = vpop.f32.mrb[0].mxu0
    %v686 = vadd.f32 %v512, %v685
    %687 = vmatprep.mubr.f32.mxu0 0.0
    %688 = vmatmul.mubr.f32.gmra.mrb[0].mxu0 %v235
    %v689 = vpop.f32.mrb[0].mxu0
    %v690 = vadd.f32 %v516, %v689
    %v691 = vpop.f32.mrb[0].mxu0
    %v692 = vadd.f32 %v518, %v691
    %693 = vdwg.mxu0
    %694 = vmatprep.subr.mxu0 0.0
    %695 = vmatpush1.msra.mxu0 %v337
    %696 = vmatprep.subr.mxu0 0.0
    %697 = vmatpush1.msra.mxu0 %v340
    %698 = vmatprep.subr.mxu0 0.0
    %699 = vmatpush1.msra.mxu0 %v343
    %700 = vmatprep.subr.mxu0 0.0
    %701 = vmatpush1.msra.mxu0 %v346
    %702 = vmatprep.subr.mxu0 0.0
    %703 = vmatpush1.msra.mxu0 %v349
    %704 = vmatprep.subr.mxu0 0.0
    %705 = vmatpush1.msra.mxu0 %v352
    %706 = vmatprep.subr.mxu0 0.0
    %707 = vmatpush1.msra.mxu0 %v355
    %708 = vmatprep.subr.mxu0 0.0
    %709 = vmatpush1.msra.mxu0 %v358
    %710 = vmatprep.subr.mxu0 0.0
    %711 = vmatpush1.msra.mxu0 %v361
    %712 = vmatprep.subr.mxu0 0.0
    %713 = vmatpush1.msra.mxu0 %v364
    %714 = vmatprep.subr.mxu0 0.0
    %715 = vmatpush1.msra.mxu0 %v367
    %716 = vmatprep.subr.mxu0 0.0
    %717 = vmatpush1.msra.mxu0 %v370
    %718 = vmatprep.subr.mxu0 0.0
    %719 = vmatpush1.msra.mxu0 %v373
    %720 = vmatprep.subr.mxu0 0.0
    %721 = vmatpush1.msra.mxu0 %v376
    %722 = vmatprep.subr.mxu0 0.0
    %723 = vmatpush1.msra.mxu0 %v379
    %724 = vmatprep.subr.mxu0 0.0
    %725 = vmatpush1.msra.mxu0 %v382
    %726 = vmatprep.subr.mxu0 0.0
    %727 = vmatpush1.msra.mxu0 0.0
    %728 = vmatprep.subr.mxu0 0.0
    %729 = vmatpush1.msra.mxu0 0.0
    %730 = vmatprep.subr.mxu0 0.0
    %731 = vmatpush1.msra.mxu0 0.0
    %732 = vmatprep.subr.mxu0 0.0
    %733 = vmatpush1.msra.mxu0 0.0
    %734 = vmatprep.subr.mxu0 0.0
    %735 = vmatpush1.msra.mxu0 0.0
    %736 = vmatprep.subr.mxu0 0.0
    %737 = vmatpush1.msra.mxu0 0.0
    %738 = vmatprep.subr.mxu0 0.0
    %739 = vmatpush1.msra.mxu0 0.0
    %740 = vmatprep.subr.mxu0 0.0
    %741 = vmatpush1.msra.mxu0 0.0
    %742 = vmatprep.subr.mxu0 0.0
    %743 = vmatpush1.msra.mxu0 0.0
    %744 = vmatprep.subr.mxu0 0.0
    %745 = vmatpush1.msra.mxu0 0.0
    %746 = vmatprep.subr.mxu0 0.0
    %747 = vmatpush1.msra.mxu0 0.0
    %748 = vmatprep.subr.mxu0 0.0
    %749 = vmatpush1.msra.mxu0 0.0
    %750 = vmatprep.subr.mxu0 0.0
    %751 = vmatpush1.msra.mxu0 0.0
    %752 = vmatprep.subr.mxu0 0.0
    %753 = vmatpush1.msra.mxu0 0.0
    %754 = vmatprep.subr.mxu0 0.0
    %755 = vmatpush1.msra.mxu0 0.0
    %756 = vmatprep.subr.mxu0 0.0
    %757 = vmatpush1.msra.mxu0 0.0
    %758 = vmatprep.mubr.f32.mxu0 0.0
    %759 = vmatmul.mubr.f32.gmra.mrb[0].mxu0 %v220
    %v760 = vpop.f32.mrb[0].mxu0
    %v761 = vadd.f32 %v587, %v760
    %v762 = vpop.f32.mrb[0].mxu0
    %763 = vmatprep.mubr.f32.mxu0 0.0
    %764 = vmatmul.mubr.f32.gmra.mrb[0].mxu0 %v225
    %v765 = vpop.f32.mrb[0].mxu0
    %v766 = vadd.f32 %v592, %v765
    %v767 = vpop.f32.mrb[0].mxu0
    %768 = vmatprep.mubr.f32.mxu0 0.0
    %769 = vmatmul.mubr.f32.gmra.mrb[0].mxu0 %v230
    %v770 = vpop.f32.mrb[0].mxu0
    %v771 = vadd.f32 %v597, %v770
    %v772 = vpop.f32.mrb[0].mxu0
    %773 = vmatprep.mubr.f32.mxu0 0.0
    %774 = vmatmul.mubr.f32.gmra.mrb[0].mxu0 %v235
    %v775 = vpop.f32.mrb[0].mxu0
    %v776 = vadd.f32 %v602, %v775
    %v777 = vpop.f32.mrb[0].mxu0
    %778 = vdwg.mxu0
    %v779 = vld [vmem:[%s5] sm:$0x7]
    %v781 = vlaneseq
    %v782 = vshrl.u32 %v781, 7
    %v783 = vsub.s32 0, %v782
    %v784 = vrot.slane %v779, %v783
    %v785 = vlaneseq
    %v786 = vshrl.u32 %v785, 7
    %v787 = vsub.s32 1, %v786
    %v788 = vrot.slane %v779, %v787
    %v789 = vlaneseq
    %v790 = vshrl.u32 %v789, 7
    %v791 = vsub.s32 2, %v790
    %v792 = vrot.slane %v779, %v791
    %v796 = vadd.f32 %v672, %v784
    %v797 = vadd.f32 %v674, %v788
    %v798 = vadd.f32 %v761, %v792
    %v799 = vadd.f32 %v678, %v784
    %v800 = vadd.f32 %v680, %v788
    %v801 = vadd.f32 %v766, %v792
    %v802 = vadd.f32 %v684, %v784
    %v803 = vadd.f32 %v686, %v788
    %v804 = vadd.f32 %v771, %v792
    %v805 = vadd.f32 %v690, %v784
    %v806 = vadd.f32 %v692, %v788
    %v807 = vadd.f32 %v776, %v792
    %808 = vst [vmem:[#allocation2] sm:$0xff] %v796
    %809 = vst [vmem:[#allocation2 + $0x8] sm:$0xff] %v797
    %810 = vst [vmem:[#allocation2 + $0x10] sm:$0xff] %v798
    %811 = vst [vmem:[#allocation2 + $0x18] sm:$0xff] %v799
    %812 = vst [vmem:[#allocation2 + $0x20] sm:$0xff] %v800
    %813 = vst [vmem:[#allocation2 + $0x28] sm:$0xff] %v801
    %814 = vst [vmem:[#allocation2 + $0x30] sm:$0xff] %v802
    %815 = vst [vmem:[#allocation2 + $0x38] sm:$0xff] %v803
    %816 = vst [vmem:[#allocation2 + $0x40] sm:$0xff] %v804
    %817 = vst [vmem:[#allocation2 + $0x48] sm:$0xff] %v805
    %818 = vst [vmem:[#allocation2 + $0x50] sm:$0xff] %v806
    %819 = vst [vmem:[#allocation2 + $0x58] sm:$0xff] %v807
    %v820 = vld [vmem:[#allocation8] sm:$0xff]
    %v821 = vld [vmem:[#allocation8 + $0x8] sm:$0xff]
    %v822 = vld [vmem:[#allocation8 + $0x10] sm:$0xff]
    %v823 = vld [vmem:[#allocation8 + $0x18] sm:$0xff]
    %v824 = vld [vmem:[#allocation8 + $0x20] sm:$0xff]
    %v825 = vld [vmem:[#allocation8 + $0x28] sm:$0xff]
    %v826 = vld [vmem:[#allocation8 + $0x30] sm:$0xff]
    %v827 = vld [vmem:[#allocation8 + $0x38] sm:$0xff]
    %v828 = vld [vmem:[#allocation8 + $0x40] sm:$0xff]
    %v829 = vld [vmem:[#allocation8 + $0x48] sm:$0xff]
    %v830 = vld [vmem:[#allocation8 + $0x50] sm:$0xff]
    %v831 = vld [vmem:[#allocation8 + $0x58] sm:$0xff]
    %v832 = vld [vmem:[#allocation8 + $0x60] sm:$0xff]
    %v833 = vld [vmem:[#allocation8 + $0x68] sm:$0xff]
    %v834 = vld [vmem:[#allocation8 + $0x70] sm:$0xff]
    %v835 = vld [vmem:[#allocation8 + $0x78] sm:$0xff]
    %v836 = vld [vmem:[#allocation8 + $0x80] sm:$0xff]
    %v837 = vld [vmem:[#allocation8 + $0x88] sm:$0xff]
    %v838 = vld [vmem:[#allocation8 + $0x90] sm:$0xff]
    %v839 = vld [vmem:[#allocation8 + $0x98] sm:$0xff]
    %v840 = vld [vmem:[#allocation8 + $0xa0] sm:$0xff]
    %v841 = vld [vmem:[#allocation8 + $0xa8] sm:$0xff]
    %v842 = vld [vmem:[#allocation8 + $0xb0] sm:$0xff]
    %v843 = vld [vmem:[#allocation8 + $0xb8] sm:$0xff]
    %v844 = vld [vmem:[#allocation8 + $0xc0] sm:$0xff]
    %v845 = vld [vmem:[#allocation8 + $0xc8] sm:$0xff]
    %v846 = vld [vmem:[#allocation8 + $0xd0] sm:$0xff]
    %v847 = vld [vmem:[#allocation8 + $0xd8] sm:$0xff]
    %v848 = vld [vmem:[#allocation8 + $0xe0] sm:$0xff]
    %v849 = vld [vmem:[#allocation8 + $0xe8] sm:$0xff]
    %v850 = vld [vmem:[#allocation8 + $0xf0] sm:$0xff]
    %v851 = vld [vmem:[#allocation8 + $0xf8] sm:$0xff]
    %v852 = vld [vmem:[#allocation8 + $0x100] sm:$0xff]
    %v853 = vld [vmem:[#allocation8 + $0x108] sm:$0xff]
    %v854 = vld [vmem:[#allocation8 + $0x110] sm:$0xff]
    %v855 = vld [vmem:[#allocation8 + $0x118] sm:$0xff]
    %v856 = vld [vmem:[#allocation8 + $0x120] sm:$0xff]
    %v857 = vld [vmem:[#allocation8 + $0x128] sm:$0xff]
    %v858 = vld [vmem:[#allocation8 + $0x130] sm:$0xff]
    %v859 = vld [vmem:[#allocation8 + $0x138] sm:$0xff]
    %v860 = vld [vmem:[#allocation8 + $0x140] sm:$0xff]
    %v861 = vld [vmem:[#allocation8 + $0x148] sm:$0xff]
    %v862 = vld [vmem:[#allocation8 + $0x150] sm:$0xff]
    %v863 = vld [vmem:[#allocation8 + $0x158] sm:$0xff]
    %v864 = vld [vmem:[#allocation8 + $0x160] sm:$0xff]
    %v865 = vld [vmem:[#allocation8 + $0x168] sm:$0xff]
    %v866 = vld [vmem:[#allocation8 + $0x170] sm:$0xff]
    %v867 = vld [vmem:[#allocation8 + $0x178] sm:$0xff]
    %v868 = vld [vmem:[%s7] sm:$0x7]
    %v869 = vld [vmem:[#allocation2] sm:$0x3]
    %v870 = vld [vmem:[#allocation2 + $0x8] sm:$0x3]
    %v871 = vld [vmem:[#allocation2 + $0x10] sm:$0x3]
    %v873 = vlaneseq
    %v874 = vshrl.u32 %v873, 7
    %v875 = vsub.s32 0, %v874
    %v876 = vrot.slane %v868, %v875
    %v877 = vlaneseq
    %v878 = vshrl.u32 %v877, 7
    %v879 = vsub.s32 1, %v878
    %v880 = vrot.slane %v868, %v879
    %v881 = vlaneseq
    %v882 = vshrl.u32 %v881, 7
    %v883 = vsub.s32 2, %v882
    %v884 = vrot.slane %v868, %v883
    %888 = vmatprep.subr.mxu0 %v821
    %889 = vmatpush1.msra.mxu0 %v820
    %890 = vmatprep.subr.mxu0 %v824
    %891 = vmatpush1.msra.mxu0 %v823
    %892 = vmatprep.subr.mxu0 %v827
    %893 = vmatpush1.msra.mxu0 %v826
    %894 = vmatprep.subr.mxu0 %v830
    %895 = vmatpush1.msra.mxu0 %v829
    %896 = vmatprep.subr.mxu0 %v833
    %897 = vmatpush1.msra.mxu0 %v832
    %898 = vmatprep.subr.mxu0 %v836
    %899 = vmatpush1.msra.mxu0 %v835
    %900 = vmatprep.subr.mxu0 %v839
    %901 = vmatpush1.msra.mxu0 %v838
    %902 = vmatprep.subr.mxu0 %v842
    %903 = vmatpush1.msra.mxu0 %v841
    %904 = vmatprep.subr.mxu0 %v845
    %905 = vmatpush1.msra.mxu0 %v844
    %906 = vmatprep.subr.mxu0 %v848
    %907 = vmatpush1.msra.mxu0 %v847
    %908 = vmatprep.subr.mxu0 %v851
    %909 = vmatpush1.msra.mxu0 %v850
    %910 = vmatprep.subr.mxu0 %v854
    %911 = vmatpush1.msra.mxu0 %v853
    %912 = vmatprep.subr.mxu0 %v857
    %913 = vmatpush1.msra.mxu0 %v856
    %914 = vmatprep.subr.mxu0 %v860
    %915 = vmatpush1.msra.mxu0 %v859
    %916 = vmatprep.subr.mxu0 %v863
    %917 = vmatpush1.msra.mxu0 %v862
    %918 = vmatprep.subr.mxu0 %v866
    %919 = vmatpush1.msra.mxu0 %v865
    %920 = vmatprep.subr.mxu0 0.0
    %921 = vmatpush1.msra.mxu0 0.0
    %922 = vmatprep.subr.mxu0 0.0
    %923 = vmatpush1.msra.mxu0 0.0
    %924 = vmatprep.subr.mxu0 0.0
    %925 = vmatpush1.msra.mxu0 0.0
    %926 = vmatprep.subr.mxu0 0.0
    %927 = vmatpush1.msra.mxu0 0.0
    %928 = vmatprep.subr.mxu0 0.0
    %929 = vmatpush1.msra.mxu0 0.0
    %930 = vmatprep.subr.mxu0 0.0
    %931 = vmatpush1.msra.mxu0 0.0
    %932 = vmatprep.subr.mxu0 0.0
    %933 = vmatpush1.msra.mxu0 0.0
    %934 = vmatprep.subr.mxu0 0.0
    %935 = vmatpush1.msra.mxu0 0.0
    %936 = vmatprep.subr.mxu0 0.0
    %937 = vmatpush1.msra.mxu0 0.0
    %938 = vmatprep.subr.mxu0 0.0
    %939 = vmatpush1.msra.mxu0 0.0
    %940 = vmatprep.subr.mxu0 0.0
    %941 = vmatpush1.msra.mxu0 0.0
    %942 = vmatprep.subr.mxu0 0.0
    %943 = vmatpush1.msra.mxu0 0.0
    %944 = vmatprep.subr.mxu0 0.0
    %945 = vmatpush1.msra.mxu0 0.0
    %946 = vmatprep.subr.mxu0 0.0
    %947 = vmatpush1.msra.mxu0 0.0
    %948 = vmatprep.subr.mxu0 0.0
    %949 = vmatpush1.msra.mxu0 0.0
    %950 = vmatprep.subr.mxu0 0.0
    %951 = vmatpush1.msra.mxu0 0.0
    %952 = vmatprep.mubr.f32.mxu0 0.0
    %953 = vmatmul.mubr.f32.gmra.mrb[0].mxu0 0.0
    %v954 = vpop.f32.mrb[0].mxu0
    %v955 = vadd.f32 %v876, %v954
    %v956 = vpop.f32.mrb[0].mxu0
    %v957 = vadd.f32 %v880, %v956
    %958 = vdwg.mxu0
    %959 = vmatprep.subr.mxu0 0.0
    %960 = vmatpush1.msra.mxu0 %v822
    %961 = vmatprep.subr.mxu0 0.0
    %962 = vmatpush1.msra.mxu0 %v825
    %963 = vmatprep.subr.mxu0 0.0
    %964 = vmatpush1.msra.mxu0 %v828
    %965 = vmatprep.subr.mxu0 0.0
    %966 = vmatpush1.msra.mxu0 %v831
    %967 = vmatprep.subr.mxu0 0.0
    %968 = vmatpush1.msra.mxu0 %v834
    %969 = vmatprep.subr.mxu0 0.0
    %970 = vmatpush1.msra.mxu0 %v837
    %971 = vmatprep.subr.mxu0 0.0
    %972 = vmatpush1.msra.mxu0 %v840
    %973 = vmatprep.subr.mxu0 0.0
    %974 = vmatpush1.msra.mxu0 %v843
    %975 = vmatprep.subr.mxu0 0.0
    %976 = vmatpush1.msra.mxu0 %v846
    %977 = vmatprep.subr.mxu0 0.0
    %978 = vmatpush1.msra.mxu0 %v849
    %979 = vmatprep.subr.mxu0 0.0
    %980 = vmatpush1.msra.mxu0 %v852
    %981 = vmatprep.subr.mxu0 0.0
    %982 = vmatpush1.msra.mxu0 %v855
    %983 = vmatprep.subr.mxu0 0.0
    %984 = vmatpush1.msra.mxu0 %v858
    %985 = vmatprep.subr.mxu0 0.0
    %986 = vmatpush1.msra.mxu0 %v861
    %987 = vmatprep.subr.mxu0 0.0
    %988 = vmatpush1.msra.mxu0 %v864
    %989 = vmatprep.subr.mxu0 0.0
    %990 = vmatpush1.msra.mxu0 %v867
    %991 = vmatprep.subr.mxu0 0.0
    %992 = vmatpush1.msra.mxu0 0.0
    %993 = vmatprep.subr.mxu0 0.0
    %994 = vmatpush1.msra.mxu0 0.0
    %995 = vmatprep.subr.mxu0 0.0
    %996 = vmatpush1.msra.mxu0 0.0
    %997 = vmatprep.subr.mxu0 0.0
    %998 = vmatpush1.msra.mxu0 0.0
    %999 = vmatprep.subr.mxu0 0.0
    %1000 = vmatpush1.msra.mxu0 0.0
    %1001 = vmatprep.subr.mxu0 0.0
    %1002 = vmatpush1.msra.mxu0 0.0
    %1003 = vmatprep.subr.mxu0 0.0
    %1004 = vmatpush1.msra.mxu0 0.0
    %1005 = vmatprep.subr.mxu0 0.0
    %1006 = vmatpush1.msra.mxu0 0.0
    %1007 = vmatprep.subr.mxu0 0.0
    %1008 = vmatpush1.msra.mxu0 0.0
    %1009 = vmatprep.subr.mxu0 0.0
    %1010 = vmatpush1.msra.mxu0 0.0
    %1011 = vmatprep.subr.mxu0 0.0
    %1012 = vmatpush1.msra.mxu0 0.0
    %1013 = vmatprep.subr.mxu0 0.0
    %1014 = vmatpush1.msra.mxu0 0.0
    %1015 = vmatprep.subr.mxu0 0.0
    %1016 = vmatpush1.msra.mxu0 0.0
    %1017 = vmatprep.subr.mxu0 0.0
    %1018 = vmatpush1.msra.mxu0 0.0
    %1019 = vmatprep.subr.mxu0 0.0
    %1020 = vmatpush1.msra.mxu0 0.0
    %1021 = vmatprep.subr.mxu0 0.0
    %1022 = vmatpush1.msra.mxu0 0.0
    %1023 = vmatprep.mubr.f32.mxu0 0.0
    %1024 = vmatmul.mubr.f32.gmra.mrb[0].mxu0 0.0
    %v1025 = vpop.f32.mrb[0].mxu0
    %v1026 = vadd.f32 %v884, %v1025
    %v1027 = vpop.f32.mrb[0].mxu0
    %1028 = vdwg.mxu0
    %v1029 = vadd.f32 %v869, %v955
    %v1030 = vxor.u32 %v1029, 2147483648
    %v1031 = vmul.f32 %v1030, 1.442695
    %v1032 = vpow.pop %v1031
    %v1033 = vadd.f32 %v1032, 1.0
    %v1034 = vrcp.pop %v1033
    %v1035 = vmul.f32 1.0, %v1034
    %v1036 = vadd.f32 %v870, %v957
    %v1037 = vxor.u32 %v1036, 2147483648
    %v1038 = vmul.f32 %v1037, 1.442695
    %v1039 = vpow.pop %v1038
    %v1040 = vadd.f32 %v1039, 1.0
    %v1041 = vrcp.pop %v1040
    %v1042 = vmul.f32 1.0, %v1041
    %v1043 = vmul.f32 %v1035, %v1026
    %v1044 = vadd.f32 %v871, %v1043
    %v1045 = vtanh.pop %v1044
    %v1046 = vsub.f32 1.0, %v1042
    %v1047 = vmul.f32 %v1046, %v1045
    %v1048 = vmul.f32 %v1042, 0.0
    %v1049 = vadd.f32 %v1047, %v1048
    %vm1050 = vcmask 517120
    %1051 = vst.msk [vmem:[#allocation9] sm:$0x3] %vm1050, %v1049
    %s1052 = scalar_lea.vmem [#allocation9], 30
    %vm1053 = vcmask 1041920
    %1054 = vst.msk [vmem:[%s1052] sm:$0x3] %vm1053, %v1049
    %v1055 = vld [vmem:[#allocation2] sm:$0xc]
    %v1056 = vld [vmem:[#allocation2 + $0x8] sm:$0xc]
    %v1057 = vld [vmem:[#allocation2 + $0x10] sm:$0xc]
    %1058 = vmatprep.subr.mxu0 %v821
    %1059 = vmatpush1.msra.mxu0 %v820
    %1060 = vmatprep.subr.mxu0 %v824
    %1061 = vmatpush1.msra.mxu0 %v823
    %1062 = vmatprep.subr.mxu0 %v827
    %1063 = vmatpush1.msra.mxu0 %v826
    %1064 = vmatprep.subr.mxu0 %v830
    %1065 = vmatpush1.msra.mxu0 %v829
    %1066 = vmatprep.subr.mxu0 %v833
    %1067 = vmatpush1.msra.mxu0 %v832
    %1068 = vmatprep.subr.mxu0 %v836
    %1069 = vmatpush1.msra.mxu0 %v835
    %1070 = vmatprep.subr.mxu0 %v839
    %1071 = vmatpush1.msra.mxu0 %v838
    %1072 = vmatprep.subr.mxu0 %v842
    %1073 = vmatpush1.msra.mxu0 %v841
    %1074 = vmatprep.subr.mxu0 %v845
    %1075 = vmatpush1.msra.mxu0 %v844
    %1076 = vmatprep.subr.mxu0 %v848
    %1077 = vmatpush1.msra.mxu0 %v847
    %1078 = vmatprep.subr.mxu0 %v851
    %1079 = vmatpush1.msra.mxu0 %v850
    %1080 = vmatprep.subr.mxu0 %v854
    %1081 = vmatpush1.msra.mxu0 %v853
    %1082 = vmatprep.subr.mxu0 %v857
    %1083 = vmatpush1.msra.mxu0 %v856
    %1084 = vmatprep.subr.mxu0 %v860
    %1085 = vmatpush1.msra.mxu0 %v859
    %1086 = vmatprep.subr.mxu0 %v863
    %1087 = vmatpush1.msra.mxu0 %v862
    %1088 = vmatprep.subr.mxu0 %v866
    %1089 = vmatpush1.msra.mxu0 %v865
    %1090 = vmatprep.subr.mxu0 0.0
    %1091 = vmatpush1.msra.mxu0 0.0
    %1092 = vmatprep.subr.mxu0 0.0
    %1093 = vmatpush1.msra.mxu0 0.0
    %1094 = vmatprep.subr.mxu0 0.0
    %1095 = vmatpush1.msra.mxu0 0.0
    %1096 = vmatprep.subr.mxu0 0.0
    %1097 = vmatpush1.msra.mxu0 0.0
    %1098 = vmatprep.subr.mxu0 0.0
    %1099 = vmatpush1.msra.mxu0 0.0
    %1100 = vmatprep.subr.mxu0 0.0
    %1101 = vmatpush1.msra.mxu0 0.0
    %1102 = vmatprep.subr.mxu0 0.0
    %1103 = vmatpush1.msra.mxu0 0.0
    %1104 = vmatprep.subr.mxu0 0.0
    %1105 = vmatpush1.msra.mxu0 0.0
    %1106 = vmatprep.subr.mxu0 0.0
    %1107 = vmatpush1.msra.mxu0 0.0
    %1108 = vmatprep.subr.mxu0 0.0
    %1109 = vmatpush1.msra.mxu0 0.0
    %1110 = vmatprep.subr.mxu0 0.0
    %1111 = vmatpush1.msra.mxu0 0.0
    %1112 = vmatprep.subr.mxu0 0.0
    %1113 = vmatpush1.msra.mxu0 0.0
    %1114 = vmatprep.subr.mxu0 0.0
    %1115 = vmatpush1.msra.mxu0 0.0
    %1116 = vmatprep.subr.mxu0 0.0
    %1117 = vmatpush1.msra.mxu0 0.0
    %1118 = vmatprep.subr.mxu0 0.0
    %1119 = vmatpush1.msra.mxu0 0.0
    %1120 = vmatprep.subr.mxu0 0.0
    %1121 = vmatpush1.msra.mxu0 0.0
    %1122 = vmatprep.mubr.f32.mxu0 0.0
    %1123 = vmatmul.mubr.f32.gmra.mrb[0].mxu0 %v1049
    %v1124 = vpop.f32.mrb[0].mxu0
    %v1125 = vadd.f32 %v876, %v1124
    %v1126 = vpop.f32.mrb[0].mxu0
    %v1127 = vadd.f32 %v880, %v1126
    %1128 = vdwg.mxu0
    %1129 = vmatprep.subr.mxu0 0.0
    %1130 = vmatpush1.msra.mxu0 %v822
    %1131 = vmatprep.subr.mxu0 0.0
    %1132 = vmatpush1.msra.mxu0 %v825
    %1133 = vmatprep.subr.mxu0 0.0
    %1134 = vmatpush1.msra.mxu0 %v828
    %1135 = vmatprep.subr.mxu0 0.0
    %1136 = vmatpush1.msra.mxu0 %v831
    %1137 = vmatprep.subr.mxu0 0.0
    %1138 = vmatpush1.msra.mxu0 %v834
    %1139 = vmatprep.subr.mxu0 0.0
    %1140 = vmatpush1.msra.mxu0 %v837
    %1141 = vmatprep.subr.mxu0 0.0
    %1142 = vmatpush1.msra.mxu0 %v840
    %1143 = vmatprep.subr.mxu0 0.0
    %1144 = vmatpush1.msra.mxu0 %v843
    %1145 = vmatprep.subr.mxu0 0.0
    %1146 = vmatpush1.msra.mxu0 %v846
    %1147 = vmatprep.subr.mxu0 0.0
    %1148 = vmatpush1.msra.mxu0 %v849
    %1149 = vmatprep.subr.mxu0 0.0
    %1150 = vmatpush1.msra.mxu0 %v852
    %1151 = vmatprep.subr.mxu0 0.0
    %1152 = vmatpush1.msra.mxu0 %v855
    %1153 = vmatprep.subr.mxu0 0.0
    %1154 = vmatpush1.msra.mxu0 %v858
    %1155 = vmatprep.subr.mxu0 0.0
    %1156 = vmatpush1.msra.mxu0 %v861
    %1157 = vmatprep.subr.mxu0 0.0
    %1158 = vmatpush1.msra.mxu0 %v864
    %1159 = vmatprep.subr.mxu0 0.0
    %1160 = vmatpush1.msra.mxu0 %v867
    %1161 = vmatprep.subr.mxu0 0.0
    %1162 = vmatpush1.msra.mxu0 0.0
    %1163 = vmatprep.subr.mxu0 0.0
    %1164 = vmatpush1.msra.mxu0 0.0
    %1165 = vmatprep.subr.mxu0 0.0
    %1166 = vmatpush1.msra.mxu0 0.0
    %1167 = vmatprep.subr.mxu0 0.0
    %1168 = vmatpush1.msra.mxu0 0.0
    %1169 = vmatprep.subr.mxu0 0.0
    %1170 = vmatpush1.msra.mxu0 0.0
    %1171 = vmatprep.subr.mxu0 0.0
    %1172 = vmatpush1.msra.mxu0 0.0
    %1173 = vmatprep.subr.mxu0 0.0
    %1174 = vmatpush1.msra.mxu0 0.0
    %1175 = vmatprep.subr.mxu0 0.0
    %1176 = vmatpush1.msra.mxu0 0.0
    %1177 = vmatprep.subr.mxu0 0.0
    %1178 = vmatpush1.msra.mxu0 0.0
    %1179 = vmatprep.subr.mxu0 0.0
    %1180 = vmatpush1.msra.mxu0 0.0
    %1181 = vmatprep.subr.mxu0 0.0
    %1182 = vmatpush1.msra.mxu0 0.0
    %1183 = vmatprep.subr.mxu0 0.0
    %1184 = vmatpush1.msra.mxu0 0.0
    %1185 = vmatprep.subr.mxu0 0.0
    %1186 = vmatpush1.msra.mxu0 0.0
    %1187 = vmatprep.subr.mxu0 0.0
    %1188 = vmatpush1.msra.mxu0 0.0
    %1189 = vmatprep.subr.mxu0 0.0
    %1190 = vmatpush1.msra.mxu0 0.0
    %1191 = vmatprep.subr.mxu0 0.0
    %1192 = vmatpush1.msra.mxu0 0.0
    %1193 = vmatprep.mubr.f32.mxu0 0.0
    %1194 = vmatmul.mubr.f32.gmra.mrb[0].mxu0 %v1049
    %v1195 = vpop.f32.mrb[0].mxu0
    %v1196 = vadd.f32 %v884, %v1195
    %v1197 = vpop.f32.mrb[0].mxu0
    %1198 = vdwg.mxu0
    %v1200 = vrot.slane %v1125, 6
    %v1202 = vadd.f32 %v1055, %v1200
    %v1203 = vxor.u32 %v1202, 2147483648
    %v1204 = vmul.f32 %v1203, 1.442695
    %v1205 = vpow.pop %v1204
    %v1206 = vadd.f32 %v1205, 1.0
    %v1207 = vrcp.pop %v1206
    %v1208 = vmul.f32 1.0, %v1207
    %v1210 = vrot.slane %v1127, 6
    %v1212 = vadd.f32 %v1056, %v1210
    %v1213 = vxor.u32 %v1212, 2147483648
    %v1214 = vmul.f32 %v1213, 1.442695
    %v1215 = vpow.pop %v1214
    %v1216 = vadd.f32 %v1215, 1.0
    %v1217 = vrcp.pop %v1216
    %v1218 = vmul.f32 1.0, %v1217
    %v1220 = vrot.slane %v1196, 6
    %v1222 = vmul.f32 %v1208, %v1220
    %v1223 = vadd.f32 %v1057, %v1222
    %v1224 = vtanh.pop %v1223
    %v1225 = vsub.f32 1.0, %v1218
    %v1226 = vmul.f32 %v1225, %v1224
    %v1228 = vrot.slane %v1049, 6
    %v1230 = vmul.f32 %v1218, %v1228
    %v1231 = vadd.f32 %v1226, %v1230
    %s1232 = scalar_lea.vmem [#allocation9], 2
    %vm1233 = vcmask 519170
    %1234 = vst.msk [vmem:[%s1232 - $0x2] sm:$0xc] %vm1233, %v1231
    %s1235 = scalar_lea.vmem [#allocation9], 28
    %vm1236 = vcmask 1043970
    %1237 = vst.msk [vmem:[%s1235 - $0x2] sm:$0xc] %vm1236, %v1231
    %v1238 = vld [vmem:[#allocation2] sm:$0x30]
    %v1239 = vld [vmem:[#allocation2 + $0x8] sm:$0x30]
    %v1240 = vld [vmem:[#allocation2 + $0x10] sm:$0x30]
    %v1242 = vrot.slane %v1231, 2
    %1244 = vmatprep.subr.mxu0 %v821
    %1245 = vmatpush1.msra.mxu0 %v820
    %1246 = vmatprep.subr.mxu0 %v824
    %1247 = vmatpush1.msra.mxu0 %v823
    %1248 = vmatprep.subr.mxu0 %v827
    %1249 = vmatpush1.msra.mxu0 %v826
    %1250 = vmatprep.subr.mxu0 %v830
    %1251 = vmatpush1.msra.mxu0 %v829
    %1252 = vmatprep.subr.mxu0 %v833
    %1253 = vmatpush1.msra.mxu0 %v832
    %1254 = vmatprep.subr.mxu0 %v836
    %1255 = vmatpush1.msra.mxu0 %v835
    %1256 = vmatprep.subr.mxu0 %v839
    %1257 = vmatpush1.msra.mxu0 %v838
    %1258 = vmatprep.subr.mxu0 %v842
    %1259 = vmatpush1.msra.mxu0 %v841
    %1260 = vmatprep.subr.mxu0 %v845
    %1261 = vmatpush1.msra.mxu0 %v844
    %1262 = vmatprep.subr.mxu0 %v848
    %1263 = vmatpush1.msra.mxu0 %v847
    %1264 = vmatprep.subr.mxu0 %v851
    %1265 = vmatpush1.msra.mxu0 %v850
    %1266 = vmatprep.subr.mxu0 %v854
    %1267 = vmatpush1.msra.mxu0 %v853
    %1268 = vmatprep.subr.mxu0 %v857
    %1269 = vmatpush1.msra.mxu0 %v856
    %1270 = vmatprep.subr.mxu0 %v860
    %1271 = vmatpush1.msra.mxu0 %v859
    %1272 = vmatprep.subr.mxu0 %v863
    %1273 = vmatpush1.msra.mxu0 %v862
    %1274 = vmatprep.subr.mxu0 %v866
    %1275 = vmatpush1.msra.mxu0 %v865
    %1276 = vmatprep.subr.mxu0 0.0
    %1277 = vmatpush1.msra.mxu0 0.0
    %1278 = vmatprep.subr.mxu0 0.0
    %1279 = vmatpush1.msra.mxu0 0.0
    %1280 = vmatprep.subr.mxu0 0.0
    %1281 = vmatpush1.msra.mxu0 0.0
    %1282 = vmatprep.subr.mxu0 0.0
    %1283 = vmatpush1.msra.mxu0 0.0
    %1284 = vmatprep.subr.mxu0 0.0
    %1285 = vmatpush1.msra.mxu0 0.0
    %1286 = vmatprep.subr.mxu0 0.0
    %1287 = vmatpush1.msra.mxu0 0.0
    %1288 = vmatprep.subr.mxu0 0.0
    %1289 = vmatpush1.msra.mxu0 0.0
    %1290 = vmatprep.subr.mxu0 0.0
    %1291 = vmatpush1.msra.mxu0 0.0
    %1292 = vmatprep.subr.mxu0 0.0
    %1293 = vmatpush1.msra.mxu0 0.0
    %1294 = vmatprep.subr.mxu0 0.0
    %1295 = vmatpush1.msra.mxu0 0.0
    %1296 = vmatprep.subr.mxu0 0.0
    %1297 = vmatpush1.msra.mxu0 0.0
    %1298 = vmatprep.subr.mxu0 0.0
    %1299 = vmatpush1.msra.mxu0 0.0
    %1300 = vmatprep.subr.mxu0 0.0
    %1301 = vmatpush1.msra.mxu0 0.0
    %1302 = vmatprep.subr.mxu0 0.0
    %1303 = vmatpush1.msra.mxu0 0.0
    %1304 = vmatprep.subr.mxu0 0.0
    %1305 = vmatpush1.msra.mxu0 0.0
    %1306 = vmatprep.subr.mxu0 0.0
    %1307 = vmatpush1.msra.mxu0 0.0
    %1308 = vmatprep.mubr.f32.mxu0 0.0
    %1309 = vmatmul.mubr.f32.gmra.mrb[0].mxu0 %v1242
    %v1310 = vpop.f32.mrb[0].mxu0
    %v1311 = vadd.f32 %v876, %v1310
    %v1312 = vpop.f32.mrb[0].mxu0
    %v1313 = vadd.f32 %v880, %v1312
    %1314 = vdwg.mxu0
    %1315 = vmatprep.subr.mxu0 0.0
    %1316 = vmatpush1.msra.mxu0 %v822
    %1317 = vmatprep.subr.mxu0 0.0
    %1318 = vmatpush1.msra.mxu0 %v825
    %1319 = vmatprep.subr.mxu0 0.0
    %1320 = vmatpush1.msra.mxu0 %v828
    %1321 = vmatprep.subr.mxu0 0.0
    %1322 = vmatpush1.msra.mxu0 %v831
    %1323 = vmatprep.subr.mxu0 0.0
    %1324 = vmatpush1.msra.mxu0 %v834
    %1325 = vmatprep.subr.mxu0 0.0
    %1326 = vmatpush1.msra.mxu0 %v837
    %1327 = vmatprep.subr.mxu0 0.0
    %1328 = vmatpush1.msra.mxu0 %v840
    %1329 = vmatprep.subr.mxu0 0.0
    %1330 = vmatpush1.msra.mxu0 %v843
    %1331 = vmatprep.subr.mxu0 0.0
    %1332 = vmatpush1.msra.mxu0 %v846
    %1333 = vmatprep.subr.mxu0 0.0
    %1334 = vmatpush1.msra.mxu0 %v849
    %1335 = vmatprep.subr.mxu0 0.0
    %1336 = vmatpush1.msra.mxu0 %v852
    %1337 = vmatprep.subr.mxu0 0.0
    %1338 = vmatpush1.msra.mxu0 %v855
    %1339 = vmatprep.subr.mxu0 0.0
    %1340 = vmatpush1.msra.mxu0 %v858
    %1341 = vmatprep.subr.mxu0 0.0
    %1342 = vmatpush1.msra.mxu0 %v861
    %1343 = vmatprep.subr.mxu0 0.0
    %1344 = vmatpush1.msra.mxu0 %v864
    %1345 = vmatprep.subr.mxu0 0.0
    %1346 = vmatpush1.msra.mxu0 %v867
    %1347 = vmatprep.subr.mxu0 0.0
    %1348 = vmatpush1.msra.mxu0 0.0
    %1349 = vmatprep.subr.mxu0 0.0
    %1350 = vmatpush1.msra.mxu0 0.0
    %1351 = vmatprep.subr.mxu0 0.0
    %1352 = vmatpush1.msra.mxu0 0.0
    %1353 = vmatprep.subr.mxu0 0.0
    %1354 = vmatpush1.msra.mxu0 0.0
    %1355 = vmatprep.subr.mxu0 0.0
    %1356 = vmatpush1.msra.mxu0 0.0
    %1357 = vmatprep.subr.mxu0 0.0
    %1358 = vmatpush1.msra.mxu0 0.0
    %1359 = vmatprep.subr.mxu0 0.0
    %1360 = vmatpush1.msra.mxu0 0.0
    %1361 = vmatprep.subr.mxu0 0.0
    %1362 = vmatpush1.msra.mxu0 0.0
    %1363 = vmatprep.subr.mxu0 0.0
    %1364 = vmatpush1.msra.mxu0 0.0
    %1365 = vmatprep.subr.mxu0 0.0
    %1366 = vmatpush1.msra.mxu0 0.0
    %1367 = vmatprep.subr.mxu0 0.0
    %1368 = vmatpush1.msra.mxu0 0.0
    %1369 = vmatprep.subr.mxu0 0.0
    %1370 = vmatpush1.msra.mxu0 0.0
    %1371 = vmatprep.subr.mxu0 0.0
    %1372 = vmatpush1.msra.mxu0 0.0
    %1373 = vmatprep.subr.mxu0 0.0
    %1374 = vmatpush1.msra.mxu0 0.0
    %1375 = vmatprep.subr.mxu0 0.0
    %1376 = vmatpush1.msra.mxu0 0.0
    %1377 = vmatprep.subr.mxu0 0.0
    %1378 = vmatpush1.msra.mxu0 0.0
    %1379 = vmatprep.mubr.f32.mxu0 0.0
    %1380 = vmatmul.mubr.f32.gmra.mrb[0].mxu0 %v1242
    %v1381 = vpop.f32.mrb[0].mxu0
    %v1382 = vadd.f32 %v884, %v1381
    %v1383 = vpop.f32.mrb[0].mxu0
    %1384 = vdwg.mxu0
    %v1386 = vrot.slane %v1311, 4
    %v1388 = vadd.f32 %v1238, %v1386
    %v1389 = vxor.u32 %v1388, 2147483648
    %v1390 = vmul.f32 %v1389, 1.442695
    %v1391 = vpow.pop %v1390
    %v1392 = vadd.f32 %v1391, 1.0
    %v1393 = vrcp.pop %v1392
    %v1394 = vmul.f32 1.0, %v1393
    %v1396 = vrot.slane %v1313, 4
    %v1398 = vadd.f32 %v1239, %v1396
    %v1399 = vxor.u32 %v1398, 2147483648
    %v1400 = vmul.f32 %v1399, 1.442695
    %v1401 = vpow.pop %v1400
    %v1402 = vadd.f32 %v1401, 1.0
    %v1403 = vrcp.pop %v1402
    %v1404 = vmul.f32 1.0, %v1403
    %v1406 = vrot.slane %v1382, 4
    %v1408 = vmul.f32 %v1394, %v1406
    %v1409 = vadd.f32 %v1240, %v1408
    %v1410 = vtanh.pop %v1409
    %v1411 = vsub.f32 1.0, %v1404
    %v1412 = vmul.f32 %v1411, %v1410
    %v1413 = vrot.slane %v1231, 6
    %v1415 = vmul.f32 %v1404, %v1413
    %v1416 = vadd.f32 %v1412, %v1415
    %s1417 = scalar_lea.vmem [#allocation9], 4
    %vm1418 = vcmask 521220
    %1419 = vst.msk [vmem:[%s1417 - $0x4] sm:$0x30] %vm1418, %v1416
    %s1420 = scalar_lea.vmem [#allocation9], 26
    %vm1421 = vcmask 1046020
    %1422 = vst.msk [vmem:[%s1420 - $0x4] sm:$0x30] %vm1421, %v1416
    %v1423 = vld [vmem:[#allocation2] sm:$0xc0]
    %v1424 = vld [vmem:[#allocation2 + $0x8] sm:$0xc0]
    %v1425 = vld [vmem:[#allocation2 + $0x10] sm:$0xc0]
    %v1427 = vrot.slane %v1416, 4
    %1429 = vmatprep.subr.mxu0 %v821
    %1430 = vmatpush1.msra.mxu0 %v820
    %1431 = vmatprep.subr.mxu0 %v824
    %1432 = vmatpush1.msra.mxu0 %v823
    %1433 = vmatprep.subr.mxu0 %v827
    %1434 = vmatpush1.msra.mxu0 %v826
    %1435 = vmatprep.subr.mxu0 %v830
    %1436 = vmatpush1.msra.mxu0 %v829
    %1437 = vmatprep.subr.mxu0 %v833
    %1438 = vmatpush1.msra.mxu0 %v832
    %1439 = vmatprep.subr.mxu0 %v836
    %1440 = vmatpush1.msra.mxu0 %v835
    %1441 = vmatprep.subr.mxu0 %v839
    %1442 = vmatpush1.msra.mxu0 %v838
    %1443 = vmatprep.subr.mxu0 %v842
    %1444 = vmatpush1.msra.mxu0 %v841
    %1445 = vmatprep.subr.mxu0 %v845
    %1446 = vmatpush1.msra.mxu0 %v844
    %1447 = vmatprep.subr.mxu0 %v848
    %1448 = vmatpush1.msra.mxu0 %v847
    %1449 = vmatprep.subr.mxu0 %v851
    %1450 = vmatpush1.msra.mxu0 %v850
    %1451 = vmatprep.subr.mxu0 %v854
    %1452 = vmatpush1.msra.mxu0 %v853
    %1453 = vmatprep.subr.mxu0 %v857
    %1454 = vmatpush1.msra.mxu0 %v856
    %1455 = vmatprep.subr.mxu0 %v860
    %1456 = vmatpush1.msra.mxu0 %v859
    %1457 = vmatprep.subr.mxu0 %v863
    %1458 = vmatpush1.msra.mxu0 %v862
    %1459 = vmatprep.subr.mxu0 %v866
    %1460 = vmatpush1.msra.mxu0 %v865
    %1461 = vmatprep.subr.mxu0 0.0
    %1462 = vmatpush1.msra.mxu0 0.0
    %1463 = vmatprep.subr.mxu0 0.0
    %1464 = vmatpush1.msra.mxu0 0.0
    %1465 = vmatprep.subr.mxu0 0.0
    %1466 = vmatpush1.msra.mxu0 0.0
    %1467 = vmatprep.subr.mxu0 0.0
    %1468 = vmatpush1.msra.mxu0 0.0
    %1469 = vmatprep.subr.mxu0 0.0
    %1470 = vmatpush1.msra.mxu0 0.0
    %1471 = vmatprep.subr.mxu0 0.0
    %1472 = vmatpush1.msra.mxu0 0.0
    %1473 = vmatprep.subr.mxu0 0.0
    %1474 = vmatpush1.msra.mxu0 0.0
    %1475 = vmatprep.subr.mxu0 0.0
    %1476 = vmatpush1.msra.mxu0 0.0
    %1477 = vmatprep.subr.mxu0 0.0
    %1478 = vmatpush1.msra.mxu0 0.0
    %1479 = vmatprep.subr.mxu0 0.0
    %1480 = vmatpush1.msra.mxu0 0.0
    %1481 = vmatprep.subr.mxu0 0.0
    %1482 = vmatpush1.msra.mxu0 0.0
    %1483 = vmatprep.subr.mxu0 0.0
    %1484 = vmatpush1.msra.mxu0 0.0
    %1485 = vmatprep.subr.mxu0 0.0
    %1486 = vmatpush1.msra.mxu0 0.0
    %1487 = vmatprep.subr.mxu0 0.0
    %1488 = vmatpush1.msra.mxu0 0.0
    %1489 = vmatprep.subr.mxu0 0.0
    %1490 = vmatpush1.msra.mxu0 0.0
    %1491 = vmatprep.subr.mxu0 0.0
    %1492 = vmatpush1.msra.mxu0 0.0
    %1493 = vmatprep.mubr.f32.mxu0 0.0
    %1494 = vmatmul.mubr.f32.gmra.mrb[0].mxu0 %v1427
    %v1495 = vpop.f32.mrb[0].mxu0
    %v1496 = vadd.f32 %v876, %v1495
    %v1497 = vpop.f32.mrb[0].mxu0
    %v1498 = vadd.f32 %v880, %v1497
    %1499 = vdwg.mxu0
    %1500 = vmatprep.subr.mxu0 0.0
    %1501 = vmatpush1.msra.mxu0 %v822
    %1502 = vmatprep.subr.mxu0 0.0
    %1503 = vmatpush1.msra.mxu0 %v825
    %1504 = vmatprep.subr.mxu0 0.0
    %1505 = vmatpush1.msra.mxu0 %v828
    %1506 = vmatprep.subr.mxu0 0.0
    %1507 = vmatpush1.msra.mxu0 %v831
    %1508 = vmatprep.subr.mxu0 0.0
    %1509 = vmatpush1.msra.mxu0 %v834
    %1510 = vmatprep.subr.mxu0 0.0
    %1511 = vmatpush1.msra.mxu0 %v837
    %1512 = vmatprep.subr.mxu0 0.0
    %1513 = vmatpush1.msra.mxu0 %v840
    %1514 = vmatprep.subr.mxu0 0.0
    %1515 = vmatpush1.msra.mxu0 %v843
    %1516 = vmatprep.subr.mxu0 0.0
    %1517 = vmatpush1.msra.mxu0 %v846
    %1518 = vmatprep.subr.mxu0 0.0
    %1519 = vmatpush1.msra.mxu0 %v849
    %1520 = vmatprep.subr.mxu0 0.0
    %1521 = vmatpush1.msra.mxu0 %v852
    %1522 = vmatprep.subr.mxu0 0.0
    %1523 = vmatpush1.msra.mxu0 %v855
    %1524 = vmatprep.subr.mxu0 0.0
    %1525 = vmatpush1.msra.mxu0 %v858
    %1526 = vmatprep.subr.mxu0 0.0
    %1527 = vmatpush1.msra.mxu0 %v861
    %1528 = vmatprep.subr.mxu0 0.0
    %1529 = vmatpush1.msra.mxu0 %v864
    %1530 = vmatprep.subr.mxu0 0.0
    %1531 = vmatpush1.msra.mxu0 %v867
    %1532 = vmatprep.subr.mxu0 0.0
    %1533 = vmatpush1.msra.mxu0 0.0
    %1534 = vmatprep.subr.mxu0 0.0
    %1535 = vmatpush1.msra.mxu0 0.0
    %1536 = vmatprep.subr.mxu0 0.0
    %1537 = vmatpush1.msra.mxu0 0.0
    %1538 = vmatprep.subr.mxu0 0.0
    %1539 = vmatpush1.msra.mxu0 0.0
    %1540 = vmatprep.subr.mxu0 0.0
    %1541 = vmatpush1.msra.mxu0 0.0
    %1542 = vmatprep.subr.mxu0 0.0
    %1543 = vmatpush1.msra.mxu0 0.0
    %1544 = vmatprep.subr.mxu0 0.0
    %1545 = vmatpush1.msra.mxu0 0.0
    %1546 = vmatprep.subr.mxu0 0.0
    %1547 = vmatpush1.msra.mxu0 0.0
    %1548 = vmatprep.subr.mxu0 0.0
    %1549 = vmatpush1.msra.mxu0 0.0
    %1550 = vmatprep.subr.mxu0 0.0
    %1551 = vmatpush1.msra.mxu0 0.0
    %1552 = vmatprep.subr.mxu0 0.0
    %1553 = vmatpush1.msra.mxu0 0.0
    %1554 = vmatprep.subr.mxu0 0.0
    %1555 = vmatpush1.msra.mxu0 0.0
    %1556 = vmatprep.subr.mxu0 0.0
    %1557 = vmatpush1.msra.mxu0 0.0
    %1558 = vmatprep.subr.mxu0 0.0
    %1559 = vmatpush1.msra.mxu0 0.0
    %1560 = vmatprep.subr.mxu0 0.0
    %1561 = vmatpush1.msra.mxu0 0.0
    %1562 = vmatprep.subr.mxu0 0.0
    %1563 = vmatpush1.msra.mxu0 0.0
    %1564 = vmatprep.mubr.f32.mxu0 0.0
    %1565 = vmatmul.mubr.f32.gmra.mrb[0].mxu0 %v1427
    %v1566 = vpop.f32.mrb[0].mxu0
    %v1567 = vadd.f32 %v884, %v1566
    %v1568 = vpop.f32.mrb[0].mxu0
    %1569 = vdwg.mxu0
    %v1571 = vrot.slane %v1496, 2
    %v1573 = vadd.f32 %v1423, %v1571
    %v1574 = vxor.u32 %v1573, 2147483648
    %v1575 = vmul.f32 %v1574, 1.442695
    %v1576 = vpow.pop %v1575
    %v1577 = vadd.f32 %v1576, 1.0
    %v1578 = vrcp.pop %v1577
    %v1579 = vmul.f32 1.0, %v1578
    %v1581 = vrot.slane %v1498, 2
    %v1583 = vadd.f32 %v1424, %v1581
    %v1584 = vxor.u32 %v1583, 2147483648
    %v1585 = vmul.f32 %v1584, 1.442695
    %v1586 = vpow.pop %v1585
    %v1587 = vadd.f32 %v1586, 1.0
    %v1588 = vrcp.pop %v1587
    %v1589 = vmul.f32 1.0, %v1588
    %v1591 = vrot.slane %v1567, 2
    %v1593 = vmul.f32 %v1579, %v1591
    %v1594 = vadd.f32 %v1425, %v1593
    %v1595 = vtanh.pop %v1594
    %v1596 = vsub.f32 1.0, %v1589
    %v1597 = vmul.f32 %v1596, %v1595
    %v1598 = vrot.slane %v1416, 6
    %v1600 = vmul.f32 %v1589, %v1598
    %v1601 = vadd.f32 %v1597, %v1600
    %s1602 = scalar_lea.vmem [#allocation9], 6
    %vm1603 = vcmask 523270
    %1604 = vst.msk [vmem:[%s1602 - $0x6] sm:$0xc0] %vm1603, %v1601
    %s1605 = scalar_lea.vmem [#allocation9], 24
    %vm1606 = vcmask 1048070
    %1607 = vst.msk [vmem:[%s1605 - $0x6] sm:$0xc0] %vm1606, %v1601
    %v1608 = vld [vmem:[#allocation2 + $0x18] sm:$0x3]
    %v1609 = vld [vmem:[#allocation2 + $0x20] sm:$0x3]
    %v1610 = vld [vmem:[#allocation2 + $0x28] sm:$0x3]
    %v1612 = vrot.slane %v1601, 6
    %1614 = vmatprep.subr.mxu0 %v821
    %1615 = vmatpush1.msra.mxu0 %v820
    %1616 = vmatprep.subr.mxu0 %v824
    %1617 = vmatpush1.msra.mxu0 %v823
    %1618 = vmatprep.subr.mxu0 %v827
    %1619 = vmatpush1.msra.mxu0 %v826
    %1620 = vmatprep.subr.mxu0 %v830
    %1621 = vmatpush1.msra.mxu0 %v829
    %1622 = vmatprep.subr.mxu0 %v833
    %1623 = vmatpush1.msra.mxu0 %v832
    %1624 = vmatprep.subr.mxu0 %v836
    %1625 = vmatpush1.msra.mxu0 %v835
    %1626 = vmatprep.subr.mxu0 %v839
    %1627 = vmatpush1.msra.mxu0 %v838
    %1628 = vmatprep.subr.mxu0 %v842
    %1629 = vmatpush1.msra.mxu0 %v841
    %1630 = vmatprep.subr.mxu0 %v845
    %1631 = vmatpush1.msra.mxu0 %v844
    %1632 = vmatprep.subr.mxu0 %v848
    %1633 = vmatpush1.msra.mxu0 %v847
    %1634 = vmatprep.subr.mxu0 %v851
    %1635 = vmatpush1.msra.mxu0 %v850
    %1636 = vmatprep.subr.mxu0 %v854
    %1637 = vmatpush1.msra.mxu0 %v853
    %1638 = vmatprep.subr.mxu0 %v857
    %1639 = vmatpush1.msra.mxu0 %v856
    %1640 = vmatprep.subr.mxu0 %v860
    %1641 = vmatpush1.msra.mxu0 %v859
    %1642 = vmatprep.subr.mxu0 %v863
    %1643 = vmatpush1.msra.mxu0 %v862
    %1644 = vmatprep.subr.mxu0 %v866
    %1645 = vmatpush1.msra.mxu0 %v865
    %1646 = vmatprep.subr.mxu0 0.0
    %1647 = vmatpush1.msra.mxu0 0.0
    %1648 = vmatprep.subr.mxu0 0.0
    %1649 = vmatpush1.msra.mxu0 0.0
    %1650 = vmatprep.subr.mxu0 0.0
    %1651 = vmatpush1.msra.mxu0 0.0
    %1652 = vmatprep.subr.mxu0 0.0
    %1653 = vmatpush1.msra.mxu0 0.0
    %1654 = vmatprep.subr.mxu0 0.0
    %1655 = vmatpush1.msra.mxu0 0.0
    %1656 = vmatprep.subr.mxu0 0.0
    %1657 = vmatpush1.msra.mxu0 0.0
    %1658 = vmatprep.subr.mxu0 0.0
    %1659 = vmatpush1.msra.mxu0 0.0
    %1660 = vmatprep.subr.mxu0 0.0
    %1661 = vmatpush1.msra.mxu0 0.0
    %1662 = vmatprep.subr.mxu0 0.0
    %1663 = vmatpush1.msra.mxu0 0.0
    %1664 = vmatprep.subr.mxu0 0.0
    %1665 = vmatpush1.msra.mxu0 0.0
    %1666 = vmatprep.subr.mxu0 0.0
    %1667 = vmatpush1.msra.mxu0 0.0
    %1668 = vmatprep.subr.mxu0 0.0
    %1669 = vmatpush1.msra.mxu0 0.0
    %1670 = vmatprep.subr.mxu0 0.0
    %1671 = vmatpush1.msra.mxu0 0.0
    %1672 = vmatprep.subr.mxu0 0.0
    %1673 = vmatpush1.msra.mxu0 0.0
    %1674 = vmatprep.subr.mxu0 0.0
    %1675 = vmatpush1.msra.mxu0 0.0
    %1676 = vmatprep.subr.mxu0 0.0
    %1677 = vmatpush1.msra.mxu0 0.0
    %1678 = vmatprep.mubr.f32.mxu0 0.0
    %1679 = vmatmul.mubr.f32.gmra.mrb[0].mxu0 %v1612
    %v1680 = vpop.f32.mrb[0].mxu0
    %v1681 = vadd.f32 %v876, %v1680
    %v1682 = vpop.f32.mrb[0].mxu0
    %v1683 = vadd.f32 %v880, %v1682
    %1684 = vdwg.mxu0
    %1685 = vmatprep.subr.mxu0 0.0
    %1686 = vmatpush1.msra.mxu0 %v822
    %1687 = vmatprep.subr.mxu0 0.0
    %1688 = vmatpush1.msra.mxu0 %v825
    %1689 = vmatprep.subr.mxu0 0.0
    %1690 = vmatpush1.msra.mxu0 %v828
    %1691 = vmatprep.subr.mxu0 0.0
    %1692 = vmatpush1.msra.mxu0 %v831
    %1693 = vmatprep.subr.mxu0 0.0
    %1694 = vmatpush1.msra.mxu0 %v834
    %1695 = vmatprep.subr.mxu0 0.0
    %1696 = vmatpush1.msra.mxu0 %v837
    %1697 = vmatprep.subr.mxu0 0.0
    %1698 = vmatpush1.msra.mxu0 %v840
    %1699 = vmatprep.subr.mxu0 0.0
    %1700 = vmatpush1.msra.mxu0 %v843
    %1701 = vmatprep.subr.mxu0 0.0
    %1702 = vmatpush1.msra.mxu0 %v846
    %1703 = vmatprep.subr.mxu0 0.0
    %1704 = vmatpush1.msra.mxu0 %v849
    %1705 = vmatprep.subr.mxu0 0.0
    %1706 = vmatpush1.msra.mxu0 %v852
    %1707 = vmatprep.subr.mxu0 0.0
    %1708 = vmatpush1.msra.mxu0 %v855
    %1709 = vmatprep.subr.mxu0 0.0
    %1710 = vmatpush1.msra.mxu0 %v858
    %1711 = vmatprep.subr.mxu0 0.0
    %1712 = vmatpush1.msra.mxu0 %v861
    %1713 = vmatprep.subr.mxu0 0.0
    %1714 = vmatpush1.msra.mxu0 %v864
    %1715 = vmatprep.subr.mxu0 0.0
    %1716 = vmatpush1.msra.mxu0 %v867
    %1717 = vmatprep.subr.mxu0 0.0
    %1718 = vmatpush1.msra.mxu0 0.0
    %1719 = vmatprep.subr.mxu0 0.0
    %1720 = vmatpush1.msra.mxu0 0.0
    %1721 = vmatprep.subr.mxu0 0.0
    %1722 = vmatpush1.msra.mxu0 0.0
    %1723 = vmatprep.subr.mxu0 0.0
    %1724 = vmatpush1.msra.mxu0 0.0
    %1725 = vmatprep.subr.mxu0 0.0
    %1726 = vmatpush1.msra.mxu0 0.0
    %1727 = vmatprep.subr.mxu0 0.0
    %1728 = vmatpush1.msra.mxu0 0.0
    %1729 = vmatprep.subr.mxu0 0.0
    %1730 = vmatpush1.msra.mxu0 0.0
    %1731 = vmatprep.subr.mxu0 0.0
    %1732 = vmatpush1.msra.mxu0 0.0
    %1733 = vmatprep.subr.mxu0 0.0
    %1734 = vmatpush1.msra.mxu0 0.0
    %1735 = vmatprep.subr.mxu0 0.0
    %1736 = vmatpush1.msra.mxu0 0.0
    %1737 = vmatprep.subr.mxu0 0.0
    %1738 = vmatpush1.msra.mxu0 0.0
    %1739 = vmatprep.subr.mxu0 0.0
    %1740 = vmatpush1.msra.mxu0 0.0
    %1741 = vmatprep.subr.mxu0 0.0
    %1742 = vmatpush1.msra.mxu0 0.0
    %1743 = vmatprep.subr.mxu0 0.0
    %1744 = vmatpush1.msra.mxu0 0.0
    %1745 = vmatprep.subr.mxu0 0.0
    %1746 = vmatpush1.msra.mxu0 0.0
    %1747 = vmatprep.subr.mxu0 0.0
    %1748 = vmatpush1.msra.mxu0 0.0
    %1749 = vmatprep.mubr.f32.mxu0 0.0
    %1750 = vmatmul.mubr.f32.gmra.mrb[0].mxu0 %v1612
    %v1751 = vpop.f32.mrb[0].mxu0
    %v1752 = vadd.f32 %v884, %v1751
    %v1753 = vpop.f32.mrb[0].mxu0
    %1754 = vdwg.mxu0
    %v1755 = vadd.f32 %v1608, %v1681
    %v1756 = vxor.u32 %v1755, 2147483648
    %v1757 = vmul.f32 %v1756, 1.442695
    %v1758 = vpow.pop %v1757
    %v1759 = vadd.f32 %v1758, 1.0
    %v1760 = vrcp.pop %v1759
    %v1761 = vmul.f32 1.0, %v1760
    %v1762 = vadd.f32 %v1609, %v1683
    %v1763 = vxor.u32 %v1762, 2147483648
    %v1764 = vmul.f32 %v1763, 1.442695
    %v1765 = vpow.pop %v1764
    %v1766 = vadd.f32 %v1765, 1.0
    %v1767 = vrcp.pop %v1766
    %v1768 = vmul.f32 1.0, %v1767
    %v1769 = vmul.f32 %v1761, %v1752
    %v1770 = vadd.f32 %v1610, %v1769
    %v1771 = vtanh.pop %v1770
    %v1772 = vsub.f32 1.0, %v1768
    %v1773 = vmul.f32 %v1772, %v1771
    %v1774 = vmul.f32 %v1768, %v1612
    %v1775 = vadd.f32 %v1773, %v1774
    %s1776 = scalar_lea.vmem [#allocation9], 8
    %1777 = vst.msk [vmem:[%s1776] sm:$0x3] %vm1050, %v1775
    %s1778 = scalar_lea.vmem [#allocation9], 22
    %1779 = vst.msk [vmem:[%s1778] sm:$0x3] %vm1053, %v1775
    %v1780 = vld [vmem:[#allocation2 + $0x18] sm:$0xc]
    %v1781 = vld [vmem:[#allocation2 + $0x20] sm:$0xc]
    %v1782 = vld [vmem:[#allocation2 + $0x28] sm:$0xc]
    %1783 = vmatprep.subr.mxu0 %v821
    %1784 = vmatpush1.msra.mxu0 %v820
    %1785 = vmatprep.subr.mxu0 %v824
    %1786 = vmatpush1.msra.mxu0 %v823
    %1787 = vmatprep.subr.mxu0 %v827
    %1788 = vmatpush1.msra.mxu0 %v826
    %1789 = vmatprep.subr.mxu0 %v830
    %1790 = vmatpush1.msra.mxu0 %v829
    %1791 = vmatprep.subr.mxu0 %v833
    %1792 = vmatpush1.msra.mxu0 %v832
    %1793 = vmatprep.subr.mxu0 %v836
    %1794 = vmatpush1.msra.mxu0 %v835
    %1795 = vmatprep.subr.mxu0 %v839
    %1796 = vmatpush1.msra.mxu0 %v838
    %1797 = vmatprep.subr.mxu0 %v842
    %1798 = vmatpush1.msra.mxu0 %v841
    %1799 = vmatprep.subr.mxu0 %v845
    %1800 = vmatpush1.msra.mxu0 %v844
    %1801 = vmatprep.subr.mxu0 %v848
    %1802 = vmatpush1.msra.mxu0 %v847
    %1803 = vmatprep.subr.mxu0 %v851
    %1804 = vmatpush1.msra.mxu0 %v850
    %1805 = vmatprep.subr.mxu0 %v854
    %1806 = vmatpush1.msra.mxu0 %v853
    %1807 = vmatprep.subr.mxu0 %v857
    %1808 = vmatpush1.msra.mxu0 %v856
    %1809 = vmatprep.subr.mxu0 %v860
    %1810 = vmatpush1.msra.mxu0 %v859
    %1811 = vmatprep.subr.mxu0 %v863
    %1812 = vmatpush1.msra.mxu0 %v862
    %1813 = vmatprep.subr.mxu0 %v866
    %1814 = vmatpush1.msra.mxu0 %v865
    %1815 = vmatprep.subr.mxu0 0.0
    %1816 = vmatpush1.msra.mxu0 0.0
    %1817 = vmatprep.subr.mxu0 0.0
    %1818 = vmatpush1.msra.mxu0 0.0
    %1819 = vmatprep.subr.mxu0 0.0
    %1820 = vmatpush1.msra.mxu0 0.0
    %1821 = vmatprep.subr.mxu0 0.0
    %1822 = vmatpush1.msra.mxu0 0.0
    %1823 = vmatprep.subr.mxu0 0.0
    %1824 = vmatpush1.msra.mxu0 0.0
    %1825 = vmatprep.subr.mxu0 0.0
    %1826 = vmatpush1.msra.mxu0 0.0
    %1827 = vmatprep.subr.mxu0 0.0
    %1828 = vmatpush1.msra.mxu0 0.0
    %1829 = vmatprep.subr.mxu0 0.0
    %1830 = vmatpush1.msra.mxu0 0.0
    %1831 = vmatprep.subr.mxu0 0.0
    %1832 = vmatpush1.msra.mxu0 0.0
    %1833 = vmatprep.subr.mxu0 0.0
    %1834 = vmatpush1.msra.mxu0 0.0
    %1835 = vmatprep.subr.mxu0 0.0
    %1836 = vmatpush1.msra.mxu0 0.0
    %1837 = vmatprep.subr.mxu0 0.0
    %1838 = vmatpush1.msra.mxu0 0.0
    %1839 = vmatprep.subr.mxu0 0.0
    %1840 = vmatpush1.msra.mxu0 0.0
    %1841 = vmatprep.subr.mxu0 0.0
    %1842 = vmatpush1.msra.mxu0 0.0
    %1843 = vmatprep.subr.mxu0 0.0
    %1844 = vmatpush1.msra.mxu0 0.0
    %1845 = vmatprep.subr.mxu0 0.0
    %1846 = vmatpush1.msra.mxu0 0.0
    %1847 = vmatprep.mubr.f32.mxu0 0.0
    %1848 = vmatmul.mubr.f32.gmra.mrb[0].mxu0 %v1775
    %v1849 = vpop.f32.mrb[0].mxu0
    %v1850 = vadd.f32 %v876, %v1849
    %v1851 = vpop.f32.mrb[0].mxu0
    %v1852 = vadd.f32 %v880, %v1851
    %1853 = vdwg.mxu0
    %1854 = vmatprep.subr.mxu0 0.0
    %1855 = vmatpush1.msra.mxu0 %v822
    %1856 = vmatprep.subr.mxu0 0.0
    %1857 = vmatpush1.msra.mxu0 %v825
    %1858 = vmatprep.subr.mxu0 0.0
    %1859 = vmatpush1.msra.mxu0 %v828
    %1860 = vmatprep.subr.mxu0 0.0
    %1861 = vmatpush1.msra.mxu0 %v831
    %1862 = vmatprep.subr.mxu0 0.0
    %1863 = vmatpush1.msra.mxu0 %v834
    %1864 = vmatprep.subr.mxu0 0.0
    %1865 = vmatpush1.msra.mxu0 %v837
    %1866 = vmatprep.subr.mxu0 0.0
    %1867 = vmatpush1.msra.mxu0 %v840
    %1868 = vmatprep.subr.mxu0 0.0
    %1869 = vmatpush1.msra.mxu0 %v843
    %1870 = vmatprep.subr.mxu0 0.0
    %1871 = vmatpush1.msra.mxu0 %v846
    %1872 = vmatprep.subr.mxu0 0.0
    %1873 = vmatpush1.msra.mxu0 %v849
    %1874 = vmatprep.subr.mxu0 0.0
    %1875 = vmatpush1.msra.mxu0 %v852
    %1876 = vmatprep.subr.mxu0 0.0
    %1877 = vmatpush1.msra.mxu0 %v855
    %1878 = vmatprep.subr.mxu0 0.0
    %1879 = vmatpush1.msra.mxu0 %v858
    %1880 = vmatprep.subr.mxu0 0.0
    %1881 = vmatpush1.msra.mxu0 %v861
    %1882 = vmatprep.subr.mxu0 0.0
    %1883 = vmatpush1.msra.mxu0 %v864
    %1884 = vmatprep.subr.mxu0 0.0
    %1885 = vmatpush1.msra.mxu0 %v867
    %1886 = vmatprep.subr.mxu0 0.0
    %1887 = vmatpush1.msra.mxu0 0.0
    %1888 = vmatprep.subr.mxu0 0.0
    %1889 = vmatpush1.msra.mxu0 0.0
    %1890 = vmatprep.subr.mxu0 0.0
    %1891 = vmatpush1.msra.mxu0 0.0
    %1892 = vmatprep.subr.mxu0 0.0
    %1893 = vmatpush1.msra.mxu0 0.0
    %1894 = vmatprep.subr.mxu0 0.0
    %1895 = vmatpush1.msra.mxu0 0.0
    %1896 = vmatprep.subr.mxu0 0.0
    %1897 = vmatpush1.msra.mxu0 0.0
    %1898 = vmatprep.subr.mxu0 0.0
    %1899 = vmatpush1.msra.mxu0 0.0
    %1900 = vmatprep.subr.mxu0 0.0
    %1901 = vmatpush1.msra.mxu0 0.0
    %1902 = vmatprep.subr.mxu0 0.0
    %1903 = vmatpush1.msra.mxu0 0.0
    %1904 = vmatprep.subr.mxu0 0.0
    %1905 = vmatpush1.msra.mxu0 0.0
    %1906 = vmatprep.subr.mxu0 0.0
    %1907 = vmatpush1.msra.mxu0 0.0
    %1908 = vmatprep.subr.mxu0 0.0
    %1909 = vmatpush1.msra.mxu0 0.0
    %1910 = vmatprep.subr.mxu0 0.0
    %1911 = vmatpush1.msra.mxu0 0.0
    %1912 = vmatprep.subr.mxu0 0.0
    %1913 = vmatpush1.msra.mxu0 0.0
    %1914 = vmatprep.subr.mxu0 0.0
    %1915 = vmatpush1.msra.mxu0 0.0
    %1916 = vmatprep.subr.mxu0 0.0
    %1917 = vmatpush1.msra.mxu0 0.0
    %1918 = vmatprep.mubr.f32.mxu0 0.0
    %1919 = vmatmul.mubr.f32.gmra.mrb[0].mxu0 %v1775
    %v1920 = vpop.f32.mrb[0].mxu0
    %v1921 = vadd.f32 %v884, %v1920
    %v1922 = vpop.f32.mrb[0].mxu0
    %1923 = vdwg.mxu0
    %v1925 = vrot.slane %v1850, 6
    %v1927 = vadd.f32 %v1780, %v1925
    %v1928 = vxor.u32 %v1927, 2147483648
    %v1929 = vmul.f32 %v1928, 1.442695
    %v1930 = vpow.pop %v1929
    %v1931 = vadd.f32 %v1930, 1.0
    %v1932 = vrcp.pop %v1931
    %v1933 = vmul.f32 1.0, %v1932
    %v1935 = vrot.slane %v1852, 6
    %v1937 = vadd.f32 %v1781, %v1935
    %v1938 = vxor.u32 %v1937, 2147483648
    %v1939 = vmul.f32 %v1938, 1.442695
    %v1940 = vpow.pop %v1939
    %v1941 = vadd.f32 %v1940, 1.0
    %v1942 = vrcp.pop %v1941
    %v1943 = vmul.f32 1.0, %v1942
    %v1945 = vrot.slane %v1921, 6
    %v1947 = vmul.f32 %v1933, %v1945
    %v1948 = vadd.f32 %v1782, %v1947
    %v1949 = vtanh.pop %v1948
    %v1950 = vsub.f32 1.0, %v1943
    %v1951 = vmul.f32 %v1950, %v1949
    %v1953 = vrot.slane %v1775, 6
    %v1955 = vmul.f32 %v1943, %v1953
    %v1956 = vadd.f32 %v1951, %v1955
    %s1957 = scalar_lea.vmem [#allocation9], 10
    %1958 = vst.msk [vmem:[%s1957 - $0x2] sm:$0xc] %vm1233, %v1956
    %s1959 = scalar_lea.vmem [#allocation9], 20
    %1960 = vst.msk [vmem:[%s1959 - $0x2] sm:$0xc] %vm1236, %v1956
    %v1961 = vld [vmem:[#allocation2 + $0x18] sm:$0x30]
    %v1962 = vld [vmem:[#allocation2 + $0x20] sm:$0x30]
    %v1963 = vld [vmem:[#allocation2 + $0x28] sm:$0x30]
    %v1965 = vrot.slane %v1956, 2
    %1967 = vmatprep.subr.mxu0 %v821
    %1968 = vmatpush1.msra.mxu0 %v820
    %1969 = vmatprep.subr.mxu0 %v824
    %1970 = vmatpush1.msra.mxu0 %v823
    %1971 = vmatprep.subr.mxu0 %v827
    %1972 = vmatpush1.msra.mxu0 %v826
    %1973 = vmatprep.subr.mxu0 %v830
    %1974 = vmatpush1.msra.mxu0 %v829
    %1975 = vmatprep.subr.mxu0 %v833
    %1976 = vmatpush1.msra.mxu0 %v832
    %1977 = vmatprep.subr.mxu0 %v836
    %1978 = vmatpush1.msra.mxu0 %v835
    %1979 = vmatprep.subr.mxu0 %v839
    %1980 = vmatpush1.msra.mxu0 %v838
    %1981 = vmatprep.subr.mxu0 %v842
    %1982 = vmatpush1.msra.mxu0 %v841
    %1983 = vmatprep.subr.mxu0 %v845
    %1984 = vmatpush1.msra.mxu0 %v844
    %1985 = vmatprep.subr.mxu0 %v848
    %1986 = vmatpush1.msra.mxu0 %v847
    %1987 = vmatprep.subr.mxu0 %v851
    %1988 = vmatpush1.msra.mxu0 %v850
    %1989 = vmatprep.subr.mxu0 %v854
    %1990 = vmatpush1.msra.mxu0 %v853
    %1991 = vmatprep.subr.mxu0 %v857
    %1992 = vmatpush1.msra.mxu0 %v856
    %1993 = vmatprep.subr.mxu0 %v860
    %1994 = vmatpush1.msra.mxu0 %v859
    %1995 = vmatprep.subr.mxu0 %v863
    %1996 = vmatpush1.msra.mxu0 %v862
    %1997 = vmatprep.subr.mxu0 %v866
    %1998 = vmatpush1.msra.mxu0 %v865
    %1999 = vmatprep.subr.mxu0 0.0
    %2000 = vmatpush1.msra.mxu0 0.0
    %2001 = vmatprep.subr.mxu0 0.0
    %2002 = vmatpush1.msra.mxu0 0.0
    %2003 = vmatprep.subr.mxu0 0.0
    %2004 = vmatpush1.msra.mxu0 0.0
    %2005 = vmatprep.subr.mxu0 0.0
    %2006 = vmatpush1.msra.mxu0 0.0
    %2007 = vmatprep.subr.mxu0 0.0
    %2008 = vmatpush1.msra.mxu0 0.0
    %2009 = vmatprep.subr.mxu0 0.0
    %2010 = vmatpush1.msra.mxu0 0.0
    %2011 = vmatprep.subr.mxu0 0.0
    %2012 = vmatpush1.msra.mxu0 0.0
    %2013 = vmatprep.subr.mxu0 0.0
    %2014 = vmatpush1.msra.mxu0 0.0
    %2015 = vmatprep.subr.mxu0 0.0
    %2016 = vmatpush1.msra.mxu0 0.0
    %2017 = vmatprep.subr.mxu0 0.0
    %2018 = vmatpush1.msra.mxu0 0.0
    %2019 = vmatprep.subr.mxu0 0.0
    %2020 = vmatpush1.msra.mxu0 0.0
    %2021 = vmatprep.subr.mxu0 0.0
    %2022 = vmatpush1.msra.mxu0 0.0
    %2023 = vmatprep.subr.mxu0 0.0
    %2024 = vmatpush1.msra.mxu0 0.0
    %2025 = vmatprep.subr.mxu0 0.0
    %2026 = vmatpush1.msra.mxu0 0.0
    %2027 = vmatprep.subr.mxu0 0.0
    %2028 = vmatpush1.msra.mxu0 0.0
    %2029 = vmatprep.subr.mxu0 0.0
    %2030 = vmatpush1.msra.mxu0 0.0
    %2031 = vmatprep.mubr.f32.mxu0 0.0
    %2032 = vmatmul.mubr.f32.gmra.mrb[0].mxu0 %v1965
    %v2033 = vpop.f32.mrb[0].mxu0
    %v2034 = vadd.f32 %v876, %v2033
    %v2035 = vpop.f32.mrb[0].mxu0
    %v2036 = vadd.f32 %v880, %v2035
    %2037 = vdwg.mxu0
    %2038 = vmatprep.subr.mxu0 0.0
    %2039 = vmatpush1.msra.mxu0 %v822
    %2040 = vmatprep.subr.mxu0 0.0
    %2041 = vmatpush1.msra.mxu0 %v825
    %2042 = vmatprep.subr.mxu0 0.0
    %2043 = vmatpush1.msra.mxu0 %v828
    %2044 = vmatprep.subr.mxu0 0.0
    %2045 = vmatpush1.msra.mxu0 %v831
    %2046 = vmatprep.subr.mxu0 0.0
    %2047 = vmatpush1.msra.mxu0 %v834
    %2048 = vmatprep.subr.mxu0 0.0
    %2049 = vmatpush1.msra.mxu0 %v837
    %2050 = vmatprep.subr.mxu0 0.0
    %2051 = vmatpush1.msra.mxu0 %v840
    %2052 = vmatprep.subr.mxu0 0.0
    %2053 = vmatpush1.msra.mxu0 %v843
    %2054 = vmatprep.subr.mxu0 0.0
    %2055 = vmatpush1.msra.mxu0 %v846
    %2056 = vmatprep.subr.mxu0 0.0
    %2057 = vmatpush1.msra.mxu0 %v849
    %2058 = vmatprep.subr.mxu0 0.0
    %2059 = vmatpush1.msra.mxu0 %v852
    %2060 = vmatprep.subr.mxu0 0.0
    %2061 = vmatpush1.msra.mxu0 %v855
    %2062 = vmatprep.subr.mxu0 0.0
    %2063 = vmatpush1.msra.mxu0 %v858
    %2064 = vmatprep.subr.mxu0 0.0
    %2065 = vmatpush1.msra.mxu0 %v861
    %2066 = vmatprep.subr.mxu0 0.0
    %2067 = vmatpush1.msra.mxu0 %v864
    %2068 = vmatprep.subr.mxu0 0.0
    %2069 = vmatpush1.msra.mxu0 %v867
    %2070 = vmatprep.subr.mxu0 0.0
    %2071 = vmatpush1.msra.mxu0 0.0
    %2072 = vmatprep.subr.mxu0 0.0
    %2073 = vmatpush1.msra.mxu0 0.0
    %2074 = vmatprep.subr.mxu0 0.0
    %2075 = vmatpush1.msra.mxu0 0.0
    %2076 = vmatprep.subr.mxu0 0.0
    %2077 = vmatpush1.msra.mxu0 0.0
    %2078 = vmatprep.subr.mxu0 0.0
    %2079 = vmatpush1.msra.mxu0 0.0
    %2080 = vmatprep.subr.mxu0 0.0
    %2081 = vmatpush1.msra.mxu0 0.0
    %2082 = vmatprep.subr.mxu0 0.0
    %2083 = vmatpush1.msra.mxu0 0.0
    %2084 = vmatprep.subr.mxu0 0.0
    %2085 = vmatpush1.msra.mxu0 0.0
    %2086 = vmatprep.subr.mxu0 0.0
    %2087 = vmatpush1.msra.mxu0 0.0
    %2088 = vmatprep.subr.mxu0 0.0
    %2089 = vmatpush1.msra.mxu0 0.0
    %2090 = vmatprep.subr.mxu0 0.0
    %2091 = vmatpush1.msra.mxu0 0.0
    %2092 = vmatprep.subr.mxu0 0.0
    %2093 = vmatpush1.msra.mxu0 0.0
    %2094 = vmatprep.subr.mxu0 0.0
    %2095 = vmatpush1.msra.mxu0 0.0
    %2096 = vmatprep.subr.mxu0 0.0
    %2097 = vmatpush1.msra.mxu0 0.0
    %2098 = vmatprep.subr.mxu0 0.0
    %2099 = vmatpush1.msra.mxu0 0.0
    %2100 = vmatprep.subr.mxu0 0.0
    %2101 = vmatpush1.msra.mxu0 0.0
    %2102 = vmatprep.mubr.f32.mxu0 0.0
    %2103 = vmatmul.mubr.f32.gmra.mrb[0].mxu0 %v1965
    %v2104 = vpop.f32.mrb[0].mxu0
    %v2105 = vadd.f32 %v884, %v2104
    %v2106 = vpop.f32.mrb[0].mxu0
    %2107 = vdwg.mxu0
    %v2109 = vrot.slane %v2034, 4
    %v2111 = vadd.f32 %v1961, %v2109
    %v2112 = vxor.u32 %v2111, 2147483648
    %v2113 = vmul.f32 %v2112, 1.442695
    %v2114 = vpow.pop %v2113
    %v2115 = vadd.f32 %v2114, 1.0
    %v2116 = vrcp.pop %v2115
    %v2117 = vmul.f32 1.0, %v2116
    %v2119 = vrot.slane %v2036, 4
    %v2121 = vadd.f32 %v1962, %v2119
    %v2122 = vxor.u32 %v2121, 2147483648
    %v2123 = vmul.f32 %v2122, 1.442695
    %v2124 = vpow.pop %v2123
    %v2125 = vadd.f32 %v2124, 1.0
    %v2126 = vrcp.pop %v2125
    %v2127 = vmul.f32 1.0, %v2126
    %v2129 = vrot.slane %v2105, 4
    %v2131 = vmul.f32 %v2117, %v2129
    %v2132 = vadd.f32 %v1963, %v2131
    %v2133 = vtanh.pop %v2132
    %v2134 = vsub.f32 1.0, %v2127
    %v2135 = vmul.f32 %v2134, %v2133
    %v2136 = vrot.slane %v1956, 6
    %v2138 = vmul.f32 %v2127, %v2136
    %v2139 = vadd.f32 %v2135, %v2138
    %s2140 = scalar_lea.vmem [#allocation9], 12
    %2141 = vst.msk [vmem:[%s2140 - $0x4] sm:$0x30] %vm1418, %v2139
    %s2142 = scalar_lea.vmem [#allocation9], 18
    %2143 = vst.msk [vmem:[%s2142 - $0x4] sm:$0x30] %vm1421, %v2139
    %v2144 = vld [vmem:[#allocation2 + $0x18] sm:$0xc0]
    %v2145 = vld [vmem:[#allocation2 + $0x20] sm:$0xc0]
    %v2146 = vld [vmem:[#allocation2 + $0x28] sm:$0xc0]
    %v2148 = vrot.slane %v2139, 4
    %2150 = vmatprep.subr.mxu0 %v821
    %2151 = vmatpush1.msra.mxu0 %v820
    %2152 = vmatprep.subr.mxu0 %v824
    %2153 = vmatpush1.msra.mxu0 %v823
    %2154 = vmatprep.subr.mxu0 %v827
    %2155 = vmatpush1.msra.mxu0 %v826
    %2156 = vmatprep.subr.mxu0 %v830
    %2157 = vmatpush1.msra.mxu0 %v829
    %2158 = vmatprep.subr.mxu0 %v833
    %2159 = vmatpush1.msra.mxu0 %v832
    %2160 = vmatprep.subr.mxu0 %v836
    %2161 = vmatpush1.msra.mxu0 %v835
    %2162 = vmatprep.subr.mxu0 %v839
    %2163 = vmatpush1.msra.mxu0 %v838
    %2164 = vmatprep.subr.mxu0 %v842
    %2165 = vmatpush1.msra.mxu0 %v841
    %2166 = vmatprep.subr.mxu0 %v845
    %2167 = vmatpush1.msra.mxu0 %v844
    %2168 = vmatprep.subr.mxu0 %v848
    %2169 = vmatpush1.msra.mxu0 %v847
    %2170 = vmatprep.subr.mxu0 %v851
    %2171 = vmatpush1.msra.mxu0 %v850
    %2172 = vmatprep.subr.mxu0 %v854
    %2173 = vmatpush1.msra.mxu0 %v853
    %2174 = vmatprep.subr.mxu0 %v857
    %2175 = vmatpush1.msra.mxu0 %v856
    %2176 = vmatprep.subr.mxu0 %v860
    %2177 = vmatpush1.msra.mxu0 %v859
    %2178 = vmatprep.subr.mxu0 %v863
    %2179 = vmatpush1.msra.mxu0 %v862
    %2180 = vmatprep.subr.mxu0 %v866
    %2181 = vmatpush1.msra.mxu0 %v865
    %2182 = vmatprep.subr.mxu0 0.0
    %2183 = vmatpush1.msra.mxu0 0.0
    %2184 = vmatprep.subr.mxu0 0.0
    %2185 = vmatpush1.msra.mxu0 0.0
    %2186 = vmatprep.subr.mxu0 0.0
    %2187 = vmatpush1.msra.mxu0 0.0
    %2188 = vmatprep.subr.mxu0 0.0
    %2189 = vmatpush1.msra.mxu0 0.0
    %2190 = vmatprep.subr.mxu0 0.0
    %2191 = vmatpush1.msra.mxu0 0.0
    %2192 = vmatprep.subr.mxu0 0.0
    %2193 = vmatpush1.msra.mxu0 0.0
    %2194 = vmatprep.subr.mxu0 0.0
    %2195 = vmatpush1.msra.mxu0 0.0
    %2196 = vmatprep.subr.mxu0 0.0
    %2197 = vmatpush1.msra.mxu0 0.0
    %2198 = vmatprep.subr.mxu0 0.0
    %2199 = vmatpush1.msra.mxu0 0.0
    %2200 = vmatprep.subr.mxu0 0.0
    %2201 = vmatpush1.msra.mxu0 0.0
    %2202 = vmatprep.subr.mxu0 0.0
    %2203 = vmatpush1.msra.mxu0 0.0
    %2204 = vmatprep.subr.mxu0 0.0
    %2205 = vmatpush1.msra.mxu0 0.0
    %2206 = vmatprep.subr.mxu0 0.0
    %2207 = vmatpush1.msra.mxu0 0.0
    %2208 = vmatprep.subr.mxu0 0.0
    %2209 = vmatpush1.msra.mxu0 0.0
    %2210 = vmatprep.subr.mxu0 0.0
    %2211 = vmatpush1.msra.mxu0 0.0
    %2212 = vmatprep.subr.mxu0 0.0
    %2213 = vmatpush1.msra.mxu0 0.0
    %2214 = vmatprep.mubr.f32.mxu0 0.0
    %2215 = vmatmul.mubr.f32.gmra.mrb[0].mxu0 %v2148
    %v2216 = vpop.f32.mrb[0].mxu0
    %v2217 = vadd.f32 %v876, %v2216
    %v2218 = vpop.f32.mrb[0].mxu0
    %v2219 = vadd.f32 %v880, %v2218
    %2220 = vdwg.mxu0
    %2221 = vmatprep.subr.mxu0 0.0
    %2222 = vmatpush1.msra.mxu0 %v822
    %2223 = vmatprep.subr.mxu0 0.0
    %2224 = vmatpush1.msra.mxu0 %v825
    %2225 = vmatprep.subr.mxu0 0.0
    %2226 = vmatpush1.msra.mxu0 %v828
    %2227 = vmatprep.subr.mxu0 0.0
    %2228 = vmatpush1.msra.mxu0 %v831
    %2229 = vmatprep.subr.mxu0 0.0
    %2230 = vmatpush1.msra.mxu0 %v834
    %2231 = vmatprep.subr.mxu0 0.0
    %2232 = vmatpush1.msra.mxu0 %v837
    %2233 = vmatprep.subr.mxu0 0.0
    %2234 = vmatpush1.msra.mxu0 %v840
    %2235 = vmatprep.subr.mxu0 0.0
    %2236 = vmatpush1.msra.mxu0 %v843
    %2237 = vmatprep.subr.mxu0 0.0
    %2238 = vmatpush1.msra.mxu0 %v846
    %2239 = vmatprep.subr.mxu0 0.0
    %2240 = vmatpush1.msra.mxu0 %v849
    %2241 = vmatprep.subr.mxu0 0.0
    %2242 = vmatpush1.msra.mxu0 %v852
    %2243 = vmatprep.subr.mxu0 0.0
    %2244 = vmatpush1.msra.mxu0 %v855
    %2245 = vmatprep.subr.mxu0 0.0
    %2246 = vmatpush1.msra.mxu0 %v858
    %2247 = vmatprep.subr.mxu0 0.0
    %2248 = vmatpush1.msra.mxu0 %v861
    %2249 = vmatprep.subr.mxu0 0.0
    %2250 = vmatpush1.msra.mxu0 %v864
    %2251 = vmatprep.subr.mxu0 0.0
    %2252 = vmatpush1.msra.mxu0 %v867
    %2253 = vmatprep.subr.mxu0 0.0
    %2254 = vmatpush1.msra.mxu0 0.0
    %2255 = vmatprep.subr.mxu0 0.0
    %2256 = vmatpush1.msra.mxu0 0.0
    %2257 = vmatprep.subr.mxu0 0.0
    %2258 = vmatpush1.msra.mxu0 0.0
    %2259 = vmatprep.subr.mxu0 0.0
    %2260 = vmatpush1.msra.mxu0 0.0
    %2261 = vmatprep.subr.mxu0 0.0
    %2262 = vmatpush1.msra.mxu0 0.0
    %2263 = vmatprep.subr.mxu0 0.0
    %2264 = vmatpush1.msra.mxu0 0.0
    %2265 = vmatprep.subr.mxu0 0.0
    %2266 = vmatpush1.msra.mxu0 0.0
    %2267 = vmatprep.subr.mxu0 0.0
    %2268 = vmatpush1.msra.mxu0 0.0
    %2269 = vmatprep.subr.mxu0 0.0
    %2270 = vmatpush1.msra.mxu0 0.0
    %2271 = vmatprep.subr.mxu0 0.0
    %2272 = vmatpush1.msra.mxu0 0.0
    %2273 = vmatprep.subr.mxu0 0.0
    %2274 = vmatpush1.msra.mxu0 0.0
    %2275 = vmatprep.subr.mxu0 0.0
    %2276 = vmatpush1.msra.mxu0 0.0
    %2277 = vmatprep.subr.mxu0 0.0
    %2278 = vmatpush1.msra.mxu0 0.0
    %2279 = vmatprep.subr.mxu0 0.0
    %2280 = vmatpush1.msra.mxu0 0.0
    %2281 = vmatprep.subr.mxu0 0.0
    %2282 = vmatpush1.msra.mxu0 0.0
    %2283 = vmatprep.subr.mxu0 0.0
    %2284 = vmatpush1.msra.mxu0 0.0
    %2285 = vmatprep.mubr.f32.mxu0 0.0
    %2286 = vmatmul.mubr.f32.gmra.mrb[0].mxu0 %v2148
    %v2287 = vpop.f32.mrb[0].mxu0
    %v2288 = vadd.f32 %v884, %v2287
    %v2289 = vpop.f32.mrb[0].mxu0
    %2290 = vdwg.mxu0
    %v2292 = vrot.slane %v2217, 2
    %v2294 = vadd.f32 %v2144, %v2292
    %v2295 = vxor.u32 %v2294, 2147483648
    %v2296 = vmul.f32 %v2295, 1.442695
    %v2297 = vpow.pop %v2296
    %v2298 = vadd.f32 %v2297, 1.0
    %v2299 = vrcp.pop %v2298
    %v2300 = vmul.f32 1.0, %v2299
    %v2302 = vrot.slane %v2219, 2
    %v2304 = vadd.f32 %v2145, %v2302
    %v2305 = vxor.u32 %v2304, 2147483648
    %v2306 = vmul.f32 %v2305, 1.442695
    %v2307 = vpow.pop %v2306
    %v2308 = vadd.f32 %v2307, 1.0
    %v2309 = vrcp.pop %v2308
    %v2310 = vmul.f32 1.0, %v2309
    %v2312 = vrot.slane %v2288, 2
    %v2314 = vmul.f32 %v2300, %v2312
    %v2315 = vadd.f32 %v2146, %v2314
    %v2316 = vtanh.pop %v2315
    %v2317 = vsub.f32 1.0, %v2310
    %v2318 = vmul.f32 %v2317, %v2316
    %v2319 = vrot.slane %v2139, 6
    %v2321 = vmul.f32 %v2310, %v2319
    %v2322 = vadd.f32 %v2318, %v2321
    %s2323 = scalar_lea.vmem [#allocation9], 14
    %2324 = vst.msk [vmem:[%s2323 - $0x6] sm:$0xc0] %vm1603, %v2322
    %s2325 = scalar_lea.vmem [#allocation9], 16
    %2326 = vst.msk [vmem:[%s2325 - $0x6] sm:$0xc0] %vm1606, %v2322
    %v2327 = vld [vmem:[#allocation2 + $0x30] sm:$0x3]
    %v2328 = vld [vmem:[#allocation2 + $0x38] sm:$0x3]
    %v2329 = vld [vmem:[#allocation2 + $0x40] sm:$0x3]
    %v2331 = vrot.slane %v2322, 6
    %2333 = vmatprep.subr.mxu0 %v821
    %2334 = vmatpush1.msra.mxu0 %v820
    %2335 = vmatprep.subr.mxu0 %v824
    %2336 = vmatpush1.msra.mxu0 %v823
    %2337 = vmatprep.subr.mxu0 %v827
    %2338 = vmatpush1.msra.mxu0 %v826
    %2339 = vmatprep.subr.mxu0 %v830
    %2340 = vmatpush1.msra.mxu0 %v829
    %2341 = vmatprep.subr.mxu0 %v833
    %2342 = vmatpush1.msra.mxu0 %v832
    %2343 = vmatprep.subr.mxu0 %v836
    %2344 = vmatpush1.msra.mxu0 %v835
    %2345 = vmatprep.subr.mxu0 %v839
    %2346 = vmatpush1.msra.mxu0 %v838
    %2347 = vmatprep.subr.mxu0 %v842
    %2348 = vmatpush1.msra.mxu0 %v841
    %2349 = vmatprep.subr.mxu0 %v845
    %2350 = vmatpush1.msra.mxu0 %v844
    %2351 = vmatprep.subr.mxu0 %v848
    %2352 = vmatpush1.msra.mxu0 %v847
    %2353 = vmatprep.subr.mxu0 %v851
    %2354 = vmatpush1.msra.mxu0 %v850
    %2355 = vmatprep.subr.mxu0 %v854
    %2356 = vmatpush1.msra.mxu0 %v853
    %2357 = vmatprep.subr.mxu0 %v857
    %2358 = vmatpush1.msra.mxu0 %v856
    %2359 = vmatprep.subr.mxu0 %v860
    %2360 = vmatpush1.msra.mxu0 %v859
    %2361 = vmatprep.subr.mxu0 %v863
    %2362 = vmatpush1.msra.mxu0 %v862
    %2363 = vmatprep.subr.mxu0 %v866
    %2364 = vmatpush1.msra.mxu0 %v865
    %2365 = vmatprep.subr.mxu0 0.0
    %2366 = vmatpush1.msra.mxu0 0.0
    %2367 = vmatprep.subr.mxu0 0.0
    %2368 = vmatpush1.msra.mxu0 0.0
    %2369 = vmatprep.subr.mxu0 0.0
    %2370 = vmatpush1.msra.mxu0 0.0
    %2371 = vmatprep.subr.mxu0 0.0
    %2372 = vmatpush1.msra.mxu0 0.0
    %2373 = vmatprep.subr.mxu0 0.0
    %2374 = vmatpush1.msra.mxu0 0.0
    %2375 = vmatprep.subr.mxu0 0.0
    %2376 = vmatpush1.msra.mxu0 0.0
    %2377 = vmatprep.subr.mxu0 0.0
    %2378 = vmatpush1.msra.mxu0 0.0
    %2379 = vmatprep.subr.mxu0 0.0
    %2380 = vmatpush1.msra.mxu0 0.0
    %2381 = vmatprep.subr.mxu0 0.0
    %2382 = vmatpush1.msra.mxu0 0.0
    %2383 = vmatprep.subr.mxu0 0.0
    %2384 = vmatpush1.msra.mxu0 0.0
    %2385 = vmatprep.subr.mxu0 0.0
    %2386 = vmatpush1.msra.mxu0 0.0
    %2387 = vmatprep.subr.mxu0 0.0
    %2388 = vmatpush1.msra.mxu0 0.0
    %2389 = vmatprep.subr.mxu0 0.0
    %2390 = vmatpush1.msra.mxu0 0.0
    %2391 = vmatprep.subr.mxu0 0.0
    %2392 = vmatpush1.msra.mxu0 0.0
    %2393 = vmatprep.subr.mxu0 0.0
    %2394 = vmatpush1.msra.mxu0 0.0
    %2395 = vmatprep.subr.mxu0 0.0
    %2396 = vmatpush1.msra.mxu0 0.0
    %2397 = vmatprep.mubr.f32.mxu0 0.0
    %2398 = vmatmul.mubr.f32.gmra.mrb[0].mxu0 %v2331
    %v2399 = vpop.f32.mrb[0].mxu0
    %v2400 = vadd.f32 %v876, %v2399
    %v2401 = vpop.f32.mrb[0].mxu0
    %v2402 = vadd.f32 %v880, %v2401
    %2403 = vdwg.mxu0
    %2404 = vmatprep.subr.mxu0 0.0
    %2405 = vmatpush1.msra.mxu0 %v822
    %2406 = vmatprep.subr.mxu0 0.0
    %2407 = vmatpush1.msra.mxu0 %v825
    %2408 = vmatprep.subr.mxu0 0.0
    %2409 = vmatpush1.msra.mxu0 %v828
    %2410 = vmatprep.subr.mxu0 0.0
    %2411 = vmatpush1.msra.mxu0 %v831
    %2412 = vmatprep.subr.mxu0 0.0
    %2413 = vmatpush1.msra.mxu0 %v834
    %2414 = vmatprep.subr.mxu0 0.0
    %2415 = vmatpush1.msra.mxu0 %v837
    %2416 = vmatprep.subr.mxu0 0.0
    %2417 = vmatpush1.msra.mxu0 %v840
    %2418 = vmatprep.subr.mxu0 0.0
    %2419 = vmatpush1.msra.mxu0 %v843
    %2420 = vmatprep.subr.mxu0 0.0
    %2421 = vmatpush1.msra.mxu0 %v846
    %2422 = vmatprep.subr.mxu0 0.0
    %2423 = vmatpush1.msra.mxu0 %v849
    %2424 = vmatprep.subr.mxu0 0.0
    %2425 = vmatpush1.msra.mxu0 %v852
    %2426 = vmatprep.subr.mxu0 0.0
    %2427 = vmatpush1.msra.mxu0 %v855
    %2428 = vmatprep.subr.mxu0 0.0
    %2429 = vmatpush1.msra.mxu0 %v858
    %2430 = vmatprep.subr.mxu0 0.0
    %2431 = vmatpush1.msra.mxu0 %v861
    %2432 = vmatprep.subr.mxu0 0.0
    %2433 = vmatpush1.msra.mxu0 %v864
    %2434 = vmatprep.subr.mxu0 0.0
    %2435 = vmatpush1.msra.mxu0 %v867
    %2436 = vmatprep.subr.mxu0 0.0
    %2437 = vmatpush1.msra.mxu0 0.0
    %2438 = vmatprep.subr.mxu0 0.0
    %2439 = vmatpush1.msra.mxu0 0.0
    %2440 = vmatprep.subr.mxu0 0.0
    %2441 = vmatpush1.msra.mxu0 0.0
    %2442 = vmatprep.subr.mxu0 0.0
    %2443 = vmatpush1.msra.mxu0 0.0
    %2444 = vmatprep.subr.mxu0 0.0
    %2445 = vmatpush1.msra.mxu0 0.0
    %2446 = vmatprep.subr.mxu0 0.0
    %2447 = vmatpush1.msra.mxu0 0.0
    %2448 = vmatprep.subr.mxu0 0.0
    %2449 = vmatpush1.msra.mxu0 0.0
    %2450 = vmatprep.subr.mxu0 0.0
    %2451 = vmatpush1.msra.mxu0 0.0
    %2452 = vmatprep.subr.mxu0 0.0
    %2453 = vmatpush1.msra.mxu0 0.0
    %2454 = vmatprep.subr.mxu0 0.0
    %2455 = vmatpush1.msra.mxu0 0.0
    %2456 = vmatprep.subr.mxu0 0.0
    %2457 = vmatpush1.msra.mxu0 0.0
    %2458 = vmatprep.subr.mxu0 0.0
    %2459 = vmatpush1.msra.mxu0 0.0
    %2460 = vmatprep.subr.mxu0 0.0
    %2461 = vmatpush1.msra.mxu0 0.0
    %2462 = vmatprep.subr.mxu0 0.0
    %2463 = vmatpush1.msra.mxu0 0.0
    %2464 = vmatprep.subr.mxu0 0.0
    %2465 = vmatpush1.msra.mxu0 0.0
    %2466 = vmatprep.subr.mxu0 0.0
    %2467 = vmatpush1.msra.mxu0 0.0
    %2468 = vmatprep.mubr.f32.mxu0 0.0
    %2469 = vmatmul.mubr.f32.gmra.mrb[0].mxu0 %v2331
    %v2470 = vpop.f32.mrb[0].mxu0
    %v2471 = vadd.f32 %v884, %v2470
    %v2472 = vpop.f32.mrb[0].mxu0
    %2473 = vdwg.mxu0
    %v2474 = vadd.f32 %v2327, %v2400
    %v2475 = vxor.u32 %v2474, 2147483648
    %v2476 = vmul.f32 %v2475, 1.442695
    %v2477 = vpow.pop %v2476
    %v2478 = vadd.f32 %v2477, 1.0
    %v2479 = vrcp.pop %v2478
    %v2480 = vmul.f32 1.0, %v2479
    %v2481 = vadd.f32 %v2328, %v2402
    %v2482 = vxor.u32 %v2481, 2147483648
    %v2483 = vmul.f32 %v2482, 1.442695
    %v2484 = vpow.pop %v2483
    %v2485 = vadd.f32 %v2484, 1.0
    %v2486 = vrcp.pop %v2485
    %v2487 = vmul.f32 1.0, %v2486
    %v2488 = vmul.f32 %v2480, %v2471
    %v2489 = vadd.f32 %v2329, %v2488
    %v2490 = vtanh.pop %v2489
    %v2491 = vsub.f32 1.0, %v2487
    %v2492 = vmul.f32 %v2491, %v2490
    %v2493 = vmul.f32 %v2487, %v2331
    %v2494 = vadd.f32 %v2492, %v2493
    %2495 = vst.msk [vmem:[%s2325] sm:$0x3] %vm1050, %v2494
    %2496 = vst.msk [vmem:[%s2323] sm:$0x3] %vm1053, %v2494
    %v2497 = vld [vmem:[#allocation2 + $0x30] sm:$0xc]
    %v2498 = vld [vmem:[#allocation2 + $0x38] sm:$0xc]
    %v2499 = vld [vmem:[#allocation2 + $0x40] sm:$0xc]
    %2500 = vmatprep.subr.mxu0 %v821
    %2501 = vmatpush1.msra.mxu0 %v820
    %2502 = vmatprep.subr.mxu0 %v824
    %2503 = vmatpush1.msra.mxu0 %v823
    %2504 = vmatprep.subr.mxu0 %v827
    %2505 = vmatpush1.msra.mxu0 %v826
    %2506 = vmatprep.subr.mxu0 %v830
    %2507 = vmatpush1.msra.mxu0 %v829
    %2508 = vmatprep.subr.mxu0 %v833
    %2509 = vmatpush1.msra.mxu0 %v832
    %2510 = vmatprep.subr.mxu0 %v836
    %2511 = vmatpush1.msra.mxu0 %v835
    %2512 = vmatprep.subr.mxu0 %v839
    %2513 = vmatpush1.msra.mxu0 %v838
    %2514 = vmatprep.subr.mxu0 %v842
    %2515 = vmatpush1.msra.mxu0 %v841
    %2516 = vmatprep.subr.mxu0 %v845
    %2517 = vmatpush1.msra.mxu0 %v844
    %2518 = vmatprep.subr.mxu0 %v848
    %2519 = vmatpush1.msra.mxu0 %v847
    %2520 = vmatprep.subr.mxu0 %v851
    %2521 = vmatpush1.msra.mxu0 %v850
    %2522 = vmatprep.subr.mxu0 %v854
    %2523 = vmatpush1.msra.mxu0 %v853
    %2524 = vmatprep.subr.mxu0 %v857
    %2525 = vmatpush1.msra.mxu0 %v856
    %2526 = vmatprep.subr.mxu0 %v860
    %2527 = vmatpush1.msra.mxu0 %v859
    %2528 = vmatprep.subr.mxu0 %v863
    %2529 = vmatpush1.msra.mxu0 %v862
    %2530 = vmatprep.subr.mxu0 %v866
    %2531 = vmatpush1.msra.mxu0 %v865
    %2532 = vmatprep.subr.mxu0 0.0
    %2533 = vmatpush1.msra.mxu0 0.0
    %2534 = vmatprep.subr.mxu0 0.0
    %2535 = vmatpush1.msra.mxu0 0.0
    %2536 = vmatprep.subr.mxu0 0.0
    %2537 = vmatpush1.msra.mxu0 0.0
    %2538 = vmatprep.subr.mxu0 0.0
    %2539 = vmatpush1.msra.mxu0 0.0
    %2540 = vmatprep.subr.mxu0 0.0
    %2541 = vmatpush1.msra.mxu0 0.0
    %2542 = vmatprep.subr.mxu0 0.0
    %2543 = vmatpush1.msra.mxu0 0.0
    %2544 = vmatprep.subr.mxu0 0.0
    %2545 = vmatpush1.msra.mxu0 0.0
    %2546 = vmatprep.subr.mxu0 0.0
    %2547 = vmatpush1.msra.mxu0 0.0
    %2548 = vmatprep.subr.mxu0 0.0
    %2549 = vmatpush1.msra.mxu0 0.0
    %2550 = vmatprep.subr.mxu0 0.0
    %2551 = vmatpush1.msra.mxu0 0.0
    %2552 = vmatprep.subr.mxu0 0.0
    %2553 = vmatpush1.msra.mxu0 0.0
    %2554 = vmatprep.subr.mxu0 0.0
    %2555 = vmatpush1.msra.mxu0 0.0
    %2556 = vmatprep.subr.mxu0 0.0
    %2557 = vmatpush1.msra.mxu0 0.0
    %2558 = vmatprep.subr.mxu0 0.0
    %2559 = vmatpush1.msra.mxu0 0.0
    %2560 = vmatprep.subr.mxu0 0.0
    %2561 = vmatpush1.msra.mxu0 0.0
    %2562 = vmatprep.subr.mxu0 0.0
    %2563 = vmatpush1.msra.mxu0 0.0
    %2564 = vmatprep.mubr.f32.mxu0 0.0
    %2565 = vmatmul.mubr.f32.gmra.mrb[0].mxu0 %v2494
    %v2566 = vpop.f32.mrb[0].mxu0
    %v2567 = vadd.f32 %v876, %v2566
    %v2568 = vpop.f32.mrb[0].mxu0
    %v2569 = vadd.f32 %v880, %v2568
    %2570 = vdwg.mxu0
    %2571 = vmatprep.subr.mxu0 0.0
    %2572 = vmatpush1.msra.mxu0 %v822
    %2573 = vmatprep.subr.mxu0 0.0
    %2574 = vmatpush1.msra.mxu0 %v825
    %2575 = vmatprep.subr.mxu0 0.0
    %2576 = vmatpush1.msra.mxu0 %v828
    %2577 = vmatprep.subr.mxu0 0.0
    %2578 = vmatpush1.msra.mxu0 %v831
    %2579 = vmatprep.subr.mxu0 0.0
    %2580 = vmatpush1.msra.mxu0 %v834
    %2581 = vmatprep.subr.mxu0 0.0
    %2582 = vmatpush1.msra.mxu0 %v837
    %2583 = vmatprep.subr.mxu0 0.0
    %2584 = vmatpush1.msra.mxu0 %v840
    %2585 = vmatprep.subr.mxu0 0.0
    %2586 = vmatpush1.msra.mxu0 %v843
    %2587 = vmatprep.subr.mxu0 0.0
    %2588 = vmatpush1.msra.mxu0 %v846
    %2589 = vmatprep.subr.mxu0 0.0
    %2590 = vmatpush1.msra.mxu0 %v849
    %2591 = vmatprep.subr.mxu0 0.0
    %2592 = vmatpush1.msra.mxu0 %v852
    %2593 = vmatprep.subr.mxu0 0.0
    %2594 = vmatpush1.msra.mxu0 %v855
    %2595 = vmatprep.subr.mxu0 0.0
    %2596 = vmatpush1.msra.mxu0 %v858
    %2597 = vmatprep.subr.mxu0 0.0
    %2598 = vmatpush1.msra.mxu0 %v861
    %2599 = vmatprep.subr.mxu0 0.0
    %2600 = vmatpush1.msra.mxu0 %v864
    %2601 = vmatprep.subr.mxu0 0.0
    %2602 = vmatpush1.msra.mxu0 %v867
    %2603 = vmatprep.subr.mxu0 0.0
    %2604 = vmatpush1.msra.mxu0 0.0
    %2605 = vmatprep.subr.mxu0 0.0
    %2606 = vmatpush1.msra.mxu0 0.0
    %2607 = vmatprep.subr.mxu0 0.0
    %2608 = vmatpush1.msra.mxu0 0.0
    %2609 = vmatprep.subr.mxu0 0.0
    %2610 = vmatpush1.msra.mxu0 0.0
    %2611 = vmatprep.subr.mxu0 0.0
    %2612 = vmatpush1.msra.mxu0 0.0
    %2613 = vmatprep.subr.mxu0 0.0
    %2614 = vmatpush1.msra.mxu0 0.0
    %2615 = vmatprep.subr.mxu0 0.0
    %2616 = vmatpush1.msra.mxu0 0.0
    %2617 = vmatprep.subr.mxu0 0.0
    %2618 = vmatpush1.msra.mxu0 0.0
    %2619 = vmatprep.subr.mxu0 0.0
    %2620 = vmatpush1.msra.mxu0 0.0
    %2621 = vmatprep.subr.mxu0 0.0
    %2622 = vmatpush1.msra.mxu0 0.0
    %2623 = vmatprep.subr.mxu0 0.0
    %2624 = vmatpush1.msra.mxu0 0.0
    %2625 = vmatprep.subr.mxu0 0.0
    %2626 = vmatpush1.msra.mxu0 0.0
    %2627 = vmatprep.subr.mxu0 0.0
    %2628 = vmatpush1.msra.mxu0 0.0
    %2629 = vmatprep.subr.mxu0 0.0
    %2630 = vmatpush1.msra.mxu0 0.0
    %2631 = vmatprep.subr.mxu0 0.0
    %2632 = vmatpush1.msra.mxu0 0.0
    %2633 = vmatprep.subr.mxu0 0.0
    %2634 = vmatpush1.msra.mxu0 0.0
    %2635 = vmatprep.mubr.f32.mxu0 0.0
    %2636 = vmatmul.mubr.f32.gmra.mrb[0].mxu0 %v2494
    %v2637 = vpop.f32.mrb[0].mxu0
    %v2638 = vadd.f32 %v884, %v2637
    %v2639 = vpop.f32.mrb[0].mxu0
    %2640 = vdwg.mxu0
    %v2642 = vrot.slane %v2567, 6
    %v2644 = vadd.f32 %v2497, %v2642
    %v2645 = vxor.u32 %v2644, 2147483648
    %v2646 = vmul.f32 %v2645, 1.442695
    %v2647 = vpow.pop %v2646
    %v2648 = vadd.f32 %v2647, 1.0
    %v2649 = vrcp.pop %v2648
    %v2650 = vmul.f32 1.0, %v2649
    %v2652 = vrot.slane %v2569, 6
    %v2654 = vadd.f32 %v2498, %v2652
    %v2655 = vxor.u32 %v2654, 2147483648
    %v2656 = vmul.f32 %v2655, 1.442695
    %v2657 = vpow.pop %v2656
    %v2658 = vadd.f32 %v2657, 1.0
    %v2659 = vrcp.pop %v2658
    %v2660 = vmul.f32 1.0, %v2659
    %v2662 = vrot.slane %v2638, 6
    %v2664 = vmul.f32 %v2650, %v2662
    %v2665 = vadd.f32 %v2499, %v2664
    %v2666 = vtanh.pop %v2665
    %v2667 = vsub.f32 1.0, %v2660
    %v2668 = vmul.f32 %v2667, %v2666
    %v2670 = vrot.slane %v2494, 6
    %v2672 = vmul.f32 %v2660, %v2670
    %v2673 = vadd.f32 %v2668, %v2672
    %2674 = vst.msk [vmem:[%s2142 - $0x2] sm:$0xc] %vm1233, %v2673
    %2675 = vst.msk [vmem:[%s2140 - $0x2] sm:$0xc] %vm1236, %v2673
    %v2676 = vld [vmem:[#allocation2 + $0x30] sm:$0x30]
    %v2677 = vld [vmem:[#allocation2 + $0x38] sm:$0x30]
    %v2678 = vld [vmem:[#allocation2 + $0x40] sm:$0x30]
    %v2680 = vrot.slane %v2673, 2
    %2682 = vmatprep.subr.mxu0 %v821
    %2683 = vmatpush1.msra.mxu0 %v820
    %2684 = vmatprep.subr.mxu0 %v824
    %2685 = vmatpush1.msra.mxu0 %v823
    %2686 = vmatprep.subr.mxu0 %v827
    %2687 = vmatpush1.msra.mxu0 %v826
    %2688 = vmatprep.subr.mxu0 %v830
    %2689 = vmatpush1.msra.mxu0 %v829
    %2690 = vmatprep.subr.mxu0 %v833
    %2691 = vmatpush1.msra.mxu0 %v832
    %2692 = vmatprep.subr.mxu0 %v836
    %2693 = vmatpush1.msra.mxu0 %v835
    %2694 = vmatprep.subr.mxu0 %v839
    %2695 = vmatpush1.msra.mxu0 %v838
    %2696 = vmatprep.subr.mxu0 %v842
    %2697 = vmatpush1.msra.mxu0 %v841
    %2698 = vmatprep.subr.mxu0 %v845
    %2699 = vmatpush1.msra.mxu0 %v844
    %2700 = vmatprep.subr.mxu0 %v848
    %2701 = vmatpush1.msra.mxu0 %v847
    %2702 = vmatprep.subr.mxu0 %v851
    %2703 = vmatpush1.msra.mxu0 %v850
    %2704 = vmatprep.subr.mxu0 %v854
    %2705 = vmatpush1.msra.mxu0 %v853
    %2706 = vmatprep.subr.mxu0 %v857
    %2707 = vmatpush1.msra.mxu0 %v856
    %2708 = vmatprep.subr.mxu0 %v860
    %2709 = vmatpush1.msra.mxu0 %v859
    %2710 = vmatprep.subr.mxu0 %v863
    %2711 = vmatpush1.msra.mxu0 %v862
    %2712 = vmatprep.subr.mxu0 %v866
    %2713 = vmatpush1.msra.mxu0 %v865
    %2714 = vmatprep.subr.mxu0 0.0
    %2715 = vmatpush1.msra.mxu0 0.0
    %2716 = vmatprep.subr.mxu0 0.0
    %2717 = vmatpush1.msra.mxu0 0.0
    %2718 = vmatprep.subr.mxu0 0.0
    %2719 = vmatpush1.msra.mxu0 0.0
    %2720 = vmatprep.subr.mxu0 0.0
    %2721 = vmatpush1.msra.mxu0 0.0
    %2722 = vmatprep.subr.mxu0 0.0
    %2723 = vmatpush1.msra.mxu0 0.0
    %2724 = vmatprep.subr.mxu0 0.0
    %2725 = vmatpush1.msra.mxu0 0.0
    %2726 = vmatprep.subr.mxu0 0.0
    %2727 = vmatpush1.msra.mxu0 0.0
    %2728 = vmatprep.subr.mxu0 0.0
    %2729 = vmatpush1.msra.mxu0 0.0
    %2730 = vmatprep.subr.mxu0 0.0
    %2731 = vmatpush1.msra.mxu0 0.0
    %2732 = vmatprep.subr.mxu0 0.0
    %2733 = vmatpush1.msra.mxu0 0.0
    %2734 = vmatprep.subr.mxu0 0.0
    %2735 = vmatpush1.msra.mxu0 0.0
    %2736 = vmatprep.subr.mxu0 0.0
    %2737 = vmatpush1.msra.mxu0 0.0
    %2738 = vmatprep.subr.mxu0 0.0
    %2739 = vmatpush1.msra.mxu0 0.0
    %2740 = vmatprep.subr.mxu0 0.0
    %2741 = vmatpush1.msra.mxu0 0.0
    %2742 = vmatprep.subr.mxu0 0.0
    %2743 = vmatpush1.msra.mxu0 0.0
    %2744 = vmatprep.subr.mxu0 0.0
    %2745 = vmatpush1.msra.mxu0 0.0
    %2746 = vmatprep.mubr.f32.mxu0 0.0
    %2747 = vmatmul.mubr.f32.gmra.mrb[0].mxu0 %v2680
    %v2748 = vpop.f32.mrb[0].mxu0
    %v2749 = vadd.f32 %v876, %v2748
    %v2750 = vpop.f32.mrb[0].mxu0
    %v2751 = vadd.f32 %v880, %v2750
    %2752 = vdwg.mxu0
    %2753 = vmatprep.subr.mxu0 0.0
    %2754 = vmatpush1.msra.mxu0 %v822
    %2755 = vmatprep.subr.mxu0 0.0
    %2756 = vmatpush1.msra.mxu0 %v825
    %2757 = vmatprep.subr.mxu0 0.0
    %2758 = vmatpush1.msra.mxu0 %v828
    %2759 = vmatprep.subr.mxu0 0.0
    %2760 = vmatpush1.msra.mxu0 %v831
    %2761 = vmatprep.subr.mxu0 0.0
    %2762 = vmatpush1.msra.mxu0 %v834
    %2763 = vmatprep.subr.mxu0 0.0
    %2764 = vmatpush1.msra.mxu0 %v837
    %2765 = vmatprep.subr.mxu0 0.0
    %2766 = vmatpush1.msra.mxu0 %v840
    %2767 = vmatprep.subr.mxu0 0.0
    %2768 = vmatpush1.msra.mxu0 %v843
    %2769 = vmatprep.subr.mxu0 0.0
    %2770 = vmatpush1.msra.mxu0 %v846
    %2771 = vmatprep.subr.mxu0 0.0
    %2772 = vmatpush1.msra.mxu0 %v849
    %2773 = vmatprep.subr.mxu0 0.0
    %2774 = vmatpush1.msra.mxu0 %v852
    %2775 = vmatprep.subr.mxu0 0.0
    %2776 = vmatpush1.msra.mxu0 %v855
    %2777 = vmatprep.subr.mxu0 0.0
    %2778 = vmatpush1.msra.mxu0 %v858
    %2779 = vmatprep.subr.mxu0 0.0
    %2780 = vmatpush1.msra.mxu0 %v861
    %2781 = vmatprep.subr.mxu0 0.0
    %2782 = vmatpush1.msra.mxu0 %v864
    %2783 = vmatprep.subr.mxu0 0.0
    %2784 = vmatpush1.msra.mxu0 %v867
    %2785 = vmatprep.subr.mxu0 0.0
    %2786 = vmatpush1.msra.mxu0 0.0
    %2787 = vmatprep.subr.mxu0 0.0
    %2788 = vmatpush1.msra.mxu0 0.0
    %2789 = vmatprep.subr.mxu0 0.0
    %2790 = vmatpush1.msra.mxu0 0.0
    %2791 = vmatprep.subr.mxu0 0.0
    %2792 = vmatpush1.msra.mxu0 0.0
    %2793 = vmatprep.subr.mxu0 0.0
    %2794 = vmatpush1.msra.mxu0 0.0
    %2795 = vmatprep.subr.mxu0 0.0
    %2796 = vmatpush1.msra.mxu0 0.0
    %2797 = vmatprep.subr.mxu0 0.0
    %2798 = vmatpush1.msra.mxu0 0.0
    %2799 = vmatprep.subr.mxu0 0.0
    %2800 = vmatpush1.msra.mxu0 0.0
    %2801 = vmatprep.subr.mxu0 0.0
    %2802 = vmatpush1.msra.mxu0 0.0
    %2803 = vmatprep.subr.mxu0 0.0
    %2804 = vmatpush1.msra.mxu0 0.0
    %2805 = vmatprep.subr.mxu0 0.0
    %2806 = vmatpush1.msra.mxu0 0.0
    %2807 = vmatprep.subr.mxu0 0.0
    %2808 = vmatpush1.msra.mxu0 0.0
    %2809 = vmatprep.subr.mxu0 0.0
    %2810 = vmatpush1.msra.mxu0 0.0
    %2811 = vmatprep.subr.mxu0 0.0
    %2812 = vmatpush1.msra.mxu0 0.0
    %2813 = vmatprep.subr.mxu0 0.0
    %2814 = vmatpush1.msra.mxu0 0.0
    %2815 = vmatprep.subr.mxu0 0.0
    %2816 = vmatpush1.msra.mxu0 0.0
    %2817 = vmatprep.mubr.f32.mxu0 0.0
    %2818 = vmatmul.mubr.f32.gmra.mrb[0].mxu0 %v2680
    %v2819 = vpop.f32.mrb[0].mxu0
    %v2820 = vadd.f32 %v884, %v2819
    %v2821 = vpop.f32.mrb[0].mxu0
    %2822 = vdwg.mxu0
    %v2824 = vrot.slane %v2749, 4
    %v2826 = vadd.f32 %v2676, %v2824
    %v2827 = vxor.u32 %v2826, 2147483648
    %v2828 = vmul.f32 %v2827, 1.442695
    %v2829 = vpow.pop %v2828
    %v2830 = vadd.f32 %v2829, 1.0
    %v2831 = vrcp.pop %v2830
    %v2832 = vmul.f32 1.0, %v2831
    %v2834 = vrot.slane %v2751, 4
    %v2836 = vadd.f32 %v2677, %v2834
    %v2837 = vxor.u32 %v2836, 2147483648
    %v2838 = vmul.f32 %v2837, 1.442695
    %v2839 = vpow.pop %v2838
    %v2840 = vadd.f32 %v2839, 1.0
    %v2841 = vrcp.pop %v2840
    %v2842 = vmul.f32 1.0, %v2841
    %v2844 = vrot.slane %v2820, 4
    %v2846 = vmul.f32 %v2832, %v2844
    %v2847 = vadd.f32 %v2678, %v2846
    %v2848 = vtanh.pop %v2847
    %v2849 = vsub.f32 1.0, %v2842
    %v2850 = vmul.f32 %v2849, %v2848
    %v2851 = vrot.slane %v2673, 6
    %v2853 = vmul.f32 %v2842, %v2851
    %v2854 = vadd.f32 %v2850, %v2853
    %2855 = vst.msk [vmem:[%s1959 - $0x4] sm:$0x30] %vm1418, %v2854
    %2856 = vst.msk [vmem:[%s1957 - $0x4] sm:$0x30] %vm1421, %v2854
    %v2857 = vld [vmem:[#allocation2 + $0x30] sm:$0xc0]
    %v2858 = vld [vmem:[#allocation2 + $0x38] sm:$0xc0]
    %v2859 = vld [vmem:[#allocation2 + $0x40] sm:$0xc0]
    %v2861 = vrot.slane %v2854, 4
    %2863 = vmatprep.subr.mxu0 %v821
    %2864 = vmatpush1.msra.mxu0 %v820
    %2865 = vmatprep.subr.mxu0 %v824
    %2866 = vmatpush1.msra.mxu0 %v823
    %2867 = vmatprep.subr.mxu0 %v827
    %2868 = vmatpush1.msra.mxu0 %v826
    %2869 = vmatprep.subr.mxu0 %v830
    %2870 = vmatpush1.msra.mxu0 %v829
    %2871 = vmatprep.subr.mxu0 %v833
    %2872 = vmatpush1.msra.mxu0 %v832
    %2873 = vmatprep.subr.mxu0 %v836
    %2874 = vmatpush1.msra.mxu0 %v835
    %2875 = vmatprep.subr.mxu0 %v839
    %2876 = vmatpush1.msra.mxu0 %v838
    %2877 = vmatprep.subr.mxu0 %v842
    %2878 = vmatpush1.msra.mxu0 %v841
    %2879 = vmatprep.subr.mxu0 %v845
    %2880 = vmatpush1.msra.mxu0 %v844
    %2881 = vmatprep.subr.mxu0 %v848
    %2882 = vmatpush1.msra.mxu0 %v847
    %2883 = vmatprep.subr.mxu0 %v851
    %2884 = vmatpush1.msra.mxu0 %v850
    %2885 = vmatprep.subr.mxu0 %v854
    %2886 = vmatpush1.msra.mxu0 %v853
    %2887 = vmatprep.subr.mxu0 %v857
    %2888 = vmatpush1.msra.mxu0 %v856
    %2889 = vmatprep.subr.mxu0 %v860
    %2890 = vmatpush1.msra.mxu0 %v859
    %2891 = vmatprep.subr.mxu0 %v863
    %2892 = vmatpush1.msra.mxu0 %v862
    %2893 = vmatprep.subr.mxu0 %v866
    %2894 = vmatpush1.msra.mxu0 %v865
    %2895 = vmatprep.subr.mxu0 0.0
    %2896 = vmatpush1.msra.mxu0 0.0
    %2897 = vmatprep.subr.mxu0 0.0
    %2898 = vmatpush1.msra.mxu0 0.0
    %2899 = vmatprep.subr.mxu0 0.0
    %2900 = vmatpush1.msra.mxu0 0.0
    %2901 = vmatprep.subr.mxu0 0.0
    %2902 = vmatpush1.msra.mxu0 0.0
    %2903 = vmatprep.subr.mxu0 0.0
    %2904 = vmatpush1.msra.mxu0 0.0
    %2905 = vmatprep.subr.mxu0 0.0
    %2906 = vmatpush1.msra.mxu0 0.0
    %2907 = vmatprep.subr.mxu0 0.0
    %2908 = vmatpush1.msra.mxu0 0.0
    %2909 = vmatprep.subr.mxu0 0.0
    %2910 = vmatpush1.msra.mxu0 0.0
    %2911 = vmatprep.subr.mxu0 0.0
    %2912 = vmatpush1.msra.mxu0 0.0
    %2913 = vmatprep.subr.mxu0 0.0
    %2914 = vmatpush1.msra.mxu0 0.0
    %2915 = vmatprep.subr.mxu0 0.0
    %2916 = vmatpush1.msra.mxu0 0.0
    %2917 = vmatprep.subr.mxu0 0.0
    %2918 = vmatpush1.msra.mxu0 0.0
    %2919 = vmatprep.subr.mxu0 0.0
    %2920 = vmatpush1.msra.mxu0 0.0
    %2921 = vmatprep.subr.mxu0 0.0
    %2922 = vmatpush1.msra.mxu0 0.0
    %2923 = vmatprep.subr.mxu0 0.0
    %2924 = vmatpush1.msra.mxu0 0.0
    %2925 = vmatprep.subr.mxu0 0.0
    %2926 = vmatpush1.msra.mxu0 0.0
    %2927 = vmatprep.mubr.f32.mxu0 0.0
    %2928 = vmatmul.mubr.f32.gmra.mrb[0].mxu0 %v2861
    %v2929 = vpop.f32.mrb[0].mxu0
    %v2930 = vadd.f32 %v876, %v2929
    %v2931 = vpop.f32.mrb[0].mxu0
    %v2932 = vadd.f32 %v880, %v2931
    %2933 = vdwg.mxu0
    %2934 = vmatprep.subr.mxu0 0.0
    %2935 = vmatpush1.msra.mxu0 %v822
    %2936 = vmatprep.subr.mxu0 0.0
    %2937 = vmatpush1.msra.mxu0 %v825
    %2938 = vmatprep.subr.mxu0 0.0
    %2939 = vmatpush1.msra.mxu0 %v828
    %2940 = vmatprep.subr.mxu0 0.0
    %2941 = vmatpush1.msra.mxu0 %v831
    %2942 = vmatprep.subr.mxu0 0.0
    %2943 = vmatpush1.msra.mxu0 %v834
    %2944 = vmatprep.subr.mxu0 0.0
    %2945 = vmatpush1.msra.mxu0 %v837
    %2946 = vmatprep.subr.mxu0 0.0
    %2947 = vmatpush1.msra.mxu0 %v840
    %2948 = vmatprep.subr.mxu0 0.0
    %2949 = vmatpush1.msra.mxu0 %v843
    %2950 = vmatprep.subr.mxu0 0.0
    %2951 = vmatpush1.msra.mxu0 %v846
    %2952 = vmatprep.subr.mxu0 0.0
    %2953 = vmatpush1.msra.mxu0 %v849
    %2954 = vmatprep.subr.mxu0 0.0
    %2955 = vmatpush1.msra.mxu0 %v852
    %2956 = vmatprep.subr.mxu0 0.0
    %2957 = vmatpush1.msra.mxu0 %v855
    %2958 = vmatprep.subr.mxu0 0.0
    %2959 = vmatpush1.msra.mxu0 %v858
    %2960 = vmatprep.subr.mxu0 0.0
    %2961 = vmatpush1.msra.mxu0 %v861
    %2962 = vmatprep.subr.mxu0 0.0
    %2963 = vmatpush1.msra.mxu0 %v864
    %2964 = vmatprep.subr.mxu0 0.0
    %2965 = vmatpush1.msra.mxu0 %v867
    %2966 = vmatprep.subr.mxu0 0.0
    %2967 = vmatpush1.msra.mxu0 0.0
    %2968 = vmatprep.subr.mxu0 0.0
    %2969 = vmatpush1.msra.mxu0 0.0
    %2970 = vmatprep.subr.mxu0 0.0
    %2971 = vmatpush1.msra.mxu0 0.0
    %2972 = vmatprep.subr.mxu0 0.0
    %2973 = vmatpush1.msra.mxu0 0.0
    %2974 = vmatprep.subr.mxu0 0.0
    %2975 = vmatpush1.msra.mxu0 0.0
    %2976 = vmatprep.subr.mxu0 0.0
    %2977 = vmatpush1.msra.mxu0 0.0
    %2978 = vmatprep.subr.mxu0 0.0
    %2979 = vmatpush1.msra.mxu0 0.0
    %2980 = vmatprep.subr.mxu0 0.0
    %2981 = vmatpush1.msra.mxu0 0.0
    %2982 = vmatprep.subr.mxu0 0.0
    %2983 = vmatpush1.msra.mxu0 0.0
    %2984 = vmatprep.subr.mxu0 0.0
    %2985 = vmatpush1.msra.mxu0 0.0
    %2986 = vmatprep.subr.mxu0 0.0
    %2987 = vmatpush1.msra.mxu0 0.0
    %2988 = vmatprep.subr.mxu0 0.0
    %2989 = vmatpush1.msra.mxu0 0.0
    %2990 = vmatprep.subr.mxu0 0.0
    %2991 = vmatpush1.msra.mxu0 0.0
    %2992 = vmatprep.subr.mxu0 0.0
    %2993 = vmatpush1.msra.mxu0 0.0
    %2994 = vmatprep.subr.mxu0 0.0
    %2995 = vmatpush1.msra.mxu0 0.0
    %2996 = vmatprep.subr.mxu0 0.0
    %2997 = vmatpush1.msra.mxu0 0.0
    %2998 = vmatprep.mubr.f32.mxu0 0.0
    %2999 = vmatmul.mubr.f32.gmra.mrb[0].mxu0 %v2861
    %v3000 = vpop.f32.mrb[0].mxu0
    %v3001 = vadd.f32 %v884, %v3000
    %v3002 = vpop.f32.mrb[0].mxu0
    %3003 = vdwg.mxu0
    %v3005 = vrot.slane %v2930, 2
    %v3007 = vadd.f32 %v2857, %v3005
    %v3008 = vxor.u32 %v3007, 2147483648
    %v3009 = vmul.f32 %v3008, 1.442695
    %v3010 = vpow.pop %v3009
    %v3011 = vadd.f32 %v3010, 1.0
    %v3012 = vrcp.pop %v3011
    %v3013 = vmul.f32 1.0, %v3012
    %v3015 = vrot.slane %v2932, 2
    %v3017 = vadd.f32 %v2858, %v3015
    %v3018 = vxor.u32 %v3017, 2147483648
    %v3019 = vmul.f32 %v3018, 1.442695
    %v3020 = vpow.pop %v3019
    %v3021 = vadd.f32 %v3020, 1.0
    %v3022 = vrcp.pop %v3021
    %v3023 = vmul.f32 1.0, %v3022
    %v3025 = vrot.slane %v3001, 2
    %v3027 = vmul.f32 %v3013, %v3025
    %v3028 = vadd.f32 %v2859, %v3027
    %v3029 = vtanh.pop %v3028
    %v3030 = vsub.f32 1.0, %v3023
    %v3031 = vmul.f32 %v3030, %v3029
    %v3032 = vrot.slane %v2854, 6
    %v3034 = vmul.f32 %v3023, %v3032
    %v3035 = vadd.f32 %v3031, %v3034
    %3036 = vst.msk [vmem:[%s1778 - $0x6] sm:$0xc0] %vm1603, %v3035
    %3037 = vst.msk [vmem:[%s1776 - $0x6] sm:$0xc0] %vm1606, %v3035
    %v3038 = vld [vmem:[#allocation2 + $0x48] sm:$0x3]
    %v3039 = vld [vmem:[#allocation2 + $0x50] sm:$0x3]
    %v3040 = vld [vmem:[#allocation2 + $0x58] sm:$0x3]
    %v3042 = vrot.slane %v3035, 6
    %3044 = vmatprep.subr.mxu0 %v821
    %3045 = vmatpush1.msra.mxu0 %v820
    %3046 = vmatprep.subr.mxu0 %v824
    %3047 = vmatpush1.msra.mxu0 %v823
    %3048 = vmatprep.subr.mxu0 %v827
    %3049 = vmatpush1.msra.mxu0 %v826
    %3050 = vmatprep.subr.mxu0 %v830
    %3051 = vmatpush1.msra.mxu0 %v829
    %3052 = vmatprep.subr.mxu0 %v833
    %3053 = vmatpush1.msra.mxu0 %v832
    %3054 = vmatprep.subr.mxu0 %v836
    %3055 = vmatpush1.msra.mxu0 %v835
    %3056 = vmatprep.subr.mxu0 %v839
    %3057 = vmatpush1.msra.mxu0 %v838
    %3058 = vmatprep.subr.mxu0 %v842
    %3059 = vmatpush1.msra.mxu0 %v841
    %3060 = vmatprep.subr.mxu0 %v845
    %3061 = vmatpush1.msra.mxu0 %v844
    %3062 = vmatprep.subr.mxu0 %v848
    %3063 = vmatpush1.msra.mxu0 %v847
    %3064 = vmatprep.subr.mxu0 %v851
    %3065 = vmatpush1.msra.mxu0 %v850
    %3066 = vmatprep.subr.mxu0 %v854
    %3067 = vmatpush1.msra.mxu0 %v853
    %3068 = vmatprep.subr.mxu0 %v857
    %3069 = vmatpush1.msra.mxu0 %v856
    %3070 = vmatprep.subr.mxu0 %v860
    %3071 = vmatpush1.msra.mxu0 %v859
    %3072 = vmatprep.subr.mxu0 %v863
    %3073 = vmatpush1.msra.mxu0 %v862
    %3074 = vmatprep.subr.mxu0 %v866
    %3075 = vmatpush1.msra.mxu0 %v865
    %3076 = vmatprep.subr.mxu0 0.0
    %3077 = vmatpush1.msra.mxu0 0.0
    %3078 = vmatprep.subr.mxu0 0.0
    %3079 = vmatpush1.msra.mxu0 0.0
    %3080 = vmatprep.subr.mxu0 0.0
    %3081 = vmatpush1.msra.mxu0 0.0
    %3082 = vmatprep.subr.mxu0 0.0
    %3083 = vmatpush1.msra.mxu0 0.0
    %3084 = vmatprep.subr.mxu0 0.0
    %3085 = vmatpush1.msra.mxu0 0.0
    %3086 = vmatprep.subr.mxu0 0.0
    %3087 = vmatpush1.msra.mxu0 0.0
    %3088 = vmatprep.subr.mxu0 0.0
    %3089 = vmatpush1.msra.mxu0 0.0
    %3090 = vmatprep.subr.mxu0 0.0
    %3091 = vmatpush1.msra.mxu0 0.0
    %3092 = vmatprep.subr.mxu0 0.0
    %3093 = vmatpush1.msra.mxu0 0.0
    %3094 = vmatprep.subr.mxu0 0.0
    %3095 = vmatpush1.msra.mxu0 0.0
    %3096 = vmatprep.subr.mxu0 0.0
    %3097 = vmatpush1.msra.mxu0 0.0
    %3098 = vmatprep.subr.mxu0 0.0
    %3099 = vmatpush1.msra.mxu0 0.0
    %3100 = vmatprep.subr.mxu0 0.0
    %3101 = vmatpush1.msra.mxu0 0.0
    %3102 = vmatprep.subr.mxu0 0.0
    %3103 = vmatpush1.msra.mxu0 0.0
    %3104 = vmatprep.subr.mxu0 0.0
    %3105 = vmatpush1.msra.mxu0 0.0
    %3106 = vmatprep.subr.mxu0 0.0
    %3107 = vmatpush1.msra.mxu0 0.0
    %3108 = vmatprep.mubr.f32.mxu0 0.0
    %3109 = vmatmul.mubr.f32.gmra.mrb[0].mxu0 %v3042
    %v3110 = vpop.f32.mrb[0].mxu0
    %v3111 = vadd.f32 %v876, %v3110
    %v3112 = vpop.f32.mrb[0].mxu0
    %v3113 = vadd.f32 %v880, %v3112
    %3114 = vdwg.mxu0
    %3115 = vmatprep.subr.mxu0 0.0
    %3116 = vmatpush1.msra.mxu0 %v822
    %3117 = vmatprep.subr.mxu0 0.0
    %3118 = vmatpush1.msra.mxu0 %v825
    %3119 = vmatprep.subr.mxu0 0.0
    %3120 = vmatpush1.msra.mxu0 %v828
    %3121 = vmatprep.subr.mxu0 0.0
    %3122 = vmatpush1.msra.mxu0 %v831
    %3123 = vmatprep.subr.mxu0 0.0
    %3124 = vmatpush1.msra.mxu0 %v834
    %3125 = vmatprep.subr.mxu0 0.0
    %3126 = vmatpush1.msra.mxu0 %v837
    %3127 = vmatprep.subr.mxu0 0.0
    %3128 = vmatpush1.msra.mxu0 %v840
    %3129 = vmatprep.subr.mxu0 0.0
    %3130 = vmatpush1.msra.mxu0 %v843
    %3131 = vmatprep.subr.mxu0 0.0
    %3132 = vmatpush1.msra.mxu0 %v846
    %3133 = vmatprep.subr.mxu0 0.0
    %3134 = vmatpush1.msra.mxu0 %v849
    %3135 = vmatprep.subr.mxu0 0.0
    %3136 = vmatpush1.msra.mxu0 %v852
    %3137 = vmatprep.subr.mxu0 0.0
    %3138 = vmatpush1.msra.mxu0 %v855
    %3139 = vmatprep.subr.mxu0 0.0
    %3140 = vmatpush1.msra.mxu0 %v858
    %3141 = vmatprep.subr.mxu0 0.0
    %3142 = vmatpush1.msra.mxu0 %v861
    %3143 = vmatprep.subr.mxu0 0.0
    %3144 = vmatpush1.msra.mxu0 %v864
    %3145 = vmatprep.subr.mxu0 0.0
    %3146 = vmatpush1.msra.mxu0 %v867
    %3147 = vmatprep.subr.mxu0 0.0
    %3148 = vmatpush1.msra.mxu0 0.0
    %3149 = vmatprep.subr.mxu0 0.0
    %3150 = vmatpush1.msra.mxu0 0.0
    %3151 = vmatprep.subr.mxu0 0.0
    %3152 = vmatpush1.msra.mxu0 0.0
    %3153 = vmatprep.subr.mxu0 0.0
    %3154 = vmatpush1.msra.mxu0 0.0
    %3155 = vmatprep.subr.mxu0 0.0
    %3156 = vmatpush1.msra.mxu0 0.0
    %3157 = vmatprep.subr.mxu0 0.0
    %3158 = vmatpush1.msra.mxu0 0.0
    %3159 = vmatprep.subr.mxu0 0.0
    %3160 = vmatpush1.msra.mxu0 0.0
    %3161 = vmatprep.subr.mxu0 0.0
    %3162 = vmatpush1.msra.mxu0 0.0
    %3163 = vmatprep.subr.mxu0 0.0
    %3164 = vmatpush1.msra.mxu0 0.0
    %3165 = vmatprep.subr.mxu0 0.0
    %3166 = vmatpush1.msra.mxu0 0.0
    %3167 = vmatprep.subr.mxu0 0.0
    %3168 = vmatpush1.msra.mxu0 0.0
    %3169 = vmatprep.subr.mxu0 0.0
    %3170 = vmatpush1.msra.mxu0 0.0
    %3171 = vmatprep.subr.mxu0 0.0
    %3172 = vmatpush1.msra.mxu0 0.0
    %3173 = vmatprep.subr.mxu0 0.0
    %3174 = vmatpush1.msra.mxu0 0.0
    %3175 = vmatprep.subr.mxu0 0.0
    %3176 = vmatpush1.msra.mxu0 0.0
    %3177 = vmatprep.subr.mxu0 0.0
    %3178 = vmatpush1.msra.mxu0 0.0
    %3179 = vmatprep.mubr.f32.mxu0 0.0
    %3180 = vmatmul.mubr.f32.gmra.mrb[0].mxu0 %v3042
    %v3181 = vpop.f32.mrb[0].mxu0
    %v3182 = vadd.f32 %v884, %v3181
    %v3183 = vpop.f32.mrb[0].mxu0
    %3184 = vdwg.mxu0
    %v3185 = vadd.f32 %v3038, %v3111
    %v3186 = vxor.u32 %v3185, 2147483648
    %v3187 = vmul.f32 %v3186, 1.442695
    %v3188 = vpow.pop %v3187
    %v3189 = vadd.f32 %v3188, 1.0
    %v3190 = vrcp.pop %v3189
    %v3191 = vmul.f32 1.0, %v3190
    %v3192 = vadd.f32 %v3039, %v3113
    %v3193 = vxor.u32 %v3192, 2147483648
    %v3194 = vmul.f32 %v3193, 1.442695
    %v3195 = vpow.pop %v3194
    %v3196 = vadd.f32 %v3195, 1.0
    %v3197 = vrcp.pop %v3196
    %v3198 = vmul.f32 1.0, %v3197
    %v3199 = vmul.f32 %v3191, %v3182
    %v3200 = vadd.f32 %v3040, %v3199
    %v3201 = vtanh.pop %v3200
    %v3202 = vsub.f32 1.0, %v3198
    %v3203 = vmul.f32 %v3202, %v3201
    %v3204 = vmul.f32 %v3198, %v3042
    %v3205 = vadd.f32 %v3203, %v3204
    %3206 = vst.msk [vmem:[%s1605] sm:$0x3] %vm1050, %v3205
    %3207 = vst.msk [vmem:[%s1602] sm:$0x3] %vm1053, %v3205
    %v3208 = vld [vmem:[#allocation2 + $0x48] sm:$0xc]
    %v3209 = vld [vmem:[#allocation2 + $0x50] sm:$0xc]
    %v3210 = vld [vmem:[#allocation2 + $0x58] sm:$0xc]
    %3211 = vmatprep.subr.mxu0 %v821
    %3212 = vmatpush1.msra.mxu0 %v820
    %3213 = vmatprep.subr.mxu0 %v824
    %3214 = vmatpush1.msra.mxu0 %v823
    %3215 = vmatprep.subr.mxu0 %v827
    %3216 = vmatpush1.msra.mxu0 %v826
    %3217 = vmatprep.subr.mxu0 %v830
    %3218 = vmatpush1.msra.mxu0 %v829
    %3219 = vmatprep.subr.mxu0 %v833
    %3220 = vmatpush1.msra.mxu0 %v832
    %3221 = vmatprep.subr.mxu0 %v836
    %3222 = vmatpush1.msra.mxu0 %v835
    %3223 = vmatprep.subr.mxu0 %v839
    %3224 = vmatpush1.msra.mxu0 %v838
    %3225 = vmatprep.subr.mxu0 %v842
    %3226 = vmatpush1.msra.mxu0 %v841
    %3227 = vmatprep.subr.mxu0 %v845
    %3228 = vmatpush1.msra.mxu0 %v844
    %3229 = vmatprep.subr.mxu0 %v848
    %3230 = vmatpush1.msra.mxu0 %v847
    %3231 = vmatprep.subr.mxu0 %v851
    %3232 = vmatpush1.msra.mxu0 %v850
    %3233 = vmatprep.subr.mxu0 %v854
    %3234 = vmatpush1.msra.mxu0 %v853
    %3235 = vmatprep.subr.mxu0 %v857
    %3236 = vmatpush1.msra.mxu0 %v856
    %3237 = vmatprep.subr.mxu0 %v860
    %3238 = vmatpush1.msra.mxu0 %v859
    %3239 = vmatprep.subr.mxu0 %v863
    %3240 = vmatpush1.msra.mxu0 %v862
    %3241 = vmatprep.subr.mxu0 %v866
    %3242 = vmatpush1.msra.mxu0 %v865
    %3243 = vmatprep.subr.mxu0 0.0
    %3244 = vmatpush1.msra.mxu0 0.0
    %3245 = vmatprep.subr.mxu0 0.0
    %3246 = vmatpush1.msra.mxu0 0.0
    %3247 = vmatprep.subr.mxu0 0.0
    %3248 = vmatpush1.msra.mxu0 0.0
    %3249 = vmatprep.subr.mxu0 0.0
    %3250 = vmatpush1.msra.mxu0 0.0
    %3251 = vmatprep.subr.mxu0 0.0
    %3252 = vmatpush1.msra.mxu0 0.0
    %3253 = vmatprep.subr.mxu0 0.0
    %3254 = vmatpush1.msra.mxu0 0.0
    %3255 = vmatprep.subr.mxu0 0.0
    %3256 = vmatpush1.msra.mxu0 0.0
    %3257 = vmatprep.subr.mxu0 0.0
    %3258 = vmatpush1.msra.mxu0 0.0
    %3259 = vmatprep.subr.mxu0 0.0
    %3260 = vmatpush1.msra.mxu0 0.0
    %3261 = vmatprep.subr.mxu0 0.0
    %3262 = vmatpush1.msra.mxu0 0.0
    %3263 = vmatprep.subr.mxu0 0.0
    %3264 = vmatpush1.msra.mxu0 0.0
    %3265 = vmatprep.subr.mxu0 0.0
    %3266 = vmatpush1.msra.mxu0 0.0
    %3267 = vmatprep.subr.mxu0 0.0
    %3268 = vmatpush1.msra.mxu0 0.0
    %3269 = vmatprep.subr.mxu0 0.0
    %3270 = vmatpush1.msra.mxu0 0.0
    %3271 = vmatprep.subr.mxu0 0.0
    %3272 = vmatpush1.msra.mxu0 0.0
    %3273 = vmatprep.subr.mxu0 0.0
    %3274 = vmatpush1.msra.mxu0 0.0
    %3275 = vmatprep.mubr.f32.mxu0 0.0
    %3276 = vmatmul.mubr.f32.gmra.mrb[0].mxu0 %v3205
    %v3277 = vpop.f32.mrb[0].mxu0
    %v3278 = vadd.f32 %v876, %v3277
    %v3279 = vpop.f32.mrb[0].mxu0
    %v3280 = vadd.f32 %v880, %v3279
    %3281 = vdwg.mxu0
    %3282 = vmatprep.subr.mxu0 0.0
    %3283 = vmatpush1.msra.mxu0 %v822
    %3284 = vmatprep.subr.mxu0 0.0
    %3285 = vmatpush1.msra.mxu0 %v825
    %3286 = vmatprep.subr.mxu0 0.0
    %3287 = vmatpush1.msra.mxu0 %v828
    %3288 = vmatprep.subr.mxu0 0.0
    %3289 = vmatpush1.msra.mxu0 %v831
    %3290 = vmatprep.subr.mxu0 0.0
    %3291 = vmatpush1.msra.mxu0 %v834
    %3292 = vmatprep.subr.mxu0 0.0
    %3293 = vmatpush1.msra.mxu0 %v837
    %3294 = vmatprep.subr.mxu0 0.0
    %3295 = vmatpush1.msra.mxu0 %v840
    %3296 = vmatprep.subr.mxu0 0.0
    %3297 = vmatpush1.msra.mxu0 %v843
    %3298 = vmatprep.subr.mxu0 0.0
    %3299 = vmatpush1.msra.mxu0 %v846
    %3300 = vmatprep.subr.mxu0 0.0
    %3301 = vmatpush1.msra.mxu0 %v849
    %3302 = vmatprep.subr.mxu0 0.0
    %3303 = vmatpush1.msra.mxu0 %v852
    %3304 = vmatprep.subr.mxu0 0.0
    %3305 = vmatpush1.msra.mxu0 %v855
    %3306 = vmatprep.subr.mxu0 0.0
    %3307 = vmatpush1.msra.mxu0 %v858
    %3308 = vmatprep.subr.mxu0 0.0
    %3309 = vmatpush1.msra.mxu0 %v861
    %3310 = vmatprep.subr.mxu0 0.0
    %3311 = vmatpush1.msra.mxu0 %v864
    %3312 = vmatprep.subr.mxu0 0.0
    %3313 = vmatpush1.msra.mxu0 %v867
    %3314 = vmatprep.subr.mxu0 0.0
    %3315 = vmatpush1.msra.mxu0 0.0
    %3316 = vmatprep.subr.mxu0 0.0
    %3317 = vmatpush1.msra.mxu0 0.0
    %3318 = vmatprep.subr.mxu0 0.0
    %3319 = vmatpush1.msra.mxu0 0.0
    %3320 = vmatprep.subr.mxu0 0.0
    %3321 = vmatpush1.msra.mxu0 0.0
    %3322 = vmatprep.subr.mxu0 0.0
    %3323 = vmatpush1.msra.mxu0 0.0
    %3324 = vmatprep.subr.mxu0 0.0
    %3325 = vmatpush1.msra.mxu0 0.0
    %3326 = vmatprep.subr.mxu0 0.0
    %3327 = vmatpush1.msra.mxu0 0.0
    %3328 = vmatprep.subr.mxu0 0.0
    %3329 = vmatpush1.msra.mxu0 0.0
    %3330 = vmatprep.subr.mxu0 0.0
    %3331 = vmatpush1.msra.mxu0 0.0
    %3332 = vmatprep.subr.mxu0 0.0
    %3333 = vmatpush1.msra.mxu0 0.0
    %3334 = vmatprep.subr.mxu0 0.0
    %3335 = vmatpush1.msra.mxu0 0.0
    %3336 = vmatprep.subr.mxu0 0.0
    %3337 = vmatpush1.msra.mxu0 0.0
    %3338 = vmatprep.subr.mxu0 0.0
    %3339 = vmatpush1.msra.mxu0 0.0
    %3340 = vmatprep.subr.mxu0 0.0
    %3341 = vmatpush1.msra.mxu0 0.0
    %3342 = vmatprep.subr.mxu0 0.0
    %3343 = vmatpush1.msra.mxu0 0.0
    %3344 = vmatprep.subr.mxu0 0.0
    %3345 = vmatpush1.msra.mxu0 0.0
    %3346 = vmatprep.mubr.f32.mxu0 0.0
    %3347 = vmatmul.mubr.f32.gmra.mrb[0].mxu0 %v3205
    %v3348 = vpop.f32.mrb[0].mxu0
    %v3349 = vadd.f32 %v884, %v3348
    %v3350 = vpop.f32.mrb[0].mxu0
    %3351 = vdwg.mxu0
    %v3353 = vrot.slane %v3278, 6
    %v3355 = vadd.f32 %v3208, %v3353
    %v3356 = vxor.u32 %v3355, 2147483648
    %v3357 = vmul.f32 %v3356, 1.442695
    %v3358 = vpow.pop %v3357
    %v3359 = vadd.f32 %v3358, 1.0
    %v3360 = vrcp.pop %v3359
    %v3361 = vmul.f32 1.0, %v3360
    %v3363 = vrot.slane %v3280, 6
    %v3365 = vadd.f32 %v3209, %v3363
    %v3366 = vxor.u32 %v3365, 2147483648
    %v3367 = vmul.f32 %v3366, 1.442695
    %v3368 = vpow.pop %v3367
    %v3369 = vadd.f32 %v3368, 1.0
    %v3370 = vrcp.pop %v3369
    %v3371 = vmul.f32 1.0, %v3370
    %v3373 = vrot.slane %v3349, 6
    %v3375 = vmul.f32 %v3361, %v3373
    %v3376 = vadd.f32 %v3210, %v3375
    %v3377 = vtanh.pop %v3376
    %v3378 = vsub.f32 1.0, %v3371
    %v3379 = vmul.f32 %v3378, %v3377
    %v3381 = vrot.slane %v3205, 6
    %v3383 = vmul.f32 %v3371, %v3381
    %v3384 = vadd.f32 %v3379, %v3383
    %3385 = vst.msk [vmem:[%s1420 - $0x2] sm:$0xc] %vm1233, %v3384
    %3386 = vst.msk [vmem:[%s1417 - $0x2] sm:$0xc] %vm1236, %v3384
    %v3387 = vld [vmem:[#allocation2 + $0x48] sm:$0x30]
    %v3388 = vld [vmem:[#allocation2 + $0x50] sm:$0x30]
    %v3389 = vld [vmem:[#allocation2 + $0x58] sm:$0x30]
    %v3391 = vrot.slane %v3384, 2
    %3393 = vmatprep.subr.mxu0 %v821
    %3394 = vmatpush1.msra.mxu0 %v820
    %3395 = vmatprep.subr.mxu0 %v824
    %3396 = vmatpush1.msra.mxu0 %v823
    %3397 = vmatprep.subr.mxu0 %v827
    %3398 = vmatpush1.msra.mxu0 %v826
    %3399 = vmatprep.subr.mxu0 %v830
    %3400 = vmatpush1.msra.mxu0 %v829
    %3401 = vmatprep.subr.mxu0 %v833
    %3402 = vmatpush1.msra.mxu0 %v832
    %3403 = vmatprep.subr.mxu0 %v836
    %3404 = vmatpush1.msra.mxu0 %v835
    %3405 = vmatprep.subr.mxu0 %v839
    %3406 = vmatpush1.msra.mxu0 %v838
    %3407 = vmatprep.subr.mxu0 %v842
    %3408 = vmatpush1.msra.mxu0 %v841
    %3409 = vmatprep.subr.mxu0 %v845
    %3410 = vmatpush1.msra.mxu0 %v844
    %3411 = vmatprep.subr.mxu0 %v848
    %3412 = vmatpush1.msra.mxu0 %v847
    %3413 = vmatprep.subr.mxu0 %v851
    %3414 = vmatpush1.msra.mxu0 %v850
    %3415 = vmatprep.subr.mxu0 %v854
    %3416 = vmatpush1.msra.mxu0 %v853
    %3417 = vmatprep.subr.mxu0 %v857
    %3418 = vmatpush1.msra.mxu0 %v856
    %3419 = vmatprep.subr.mxu0 %v860
    %3420 = vmatpush1.msra.mxu0 %v859
    %3421 = vmatprep.subr.mxu0 %v863
    %3422 = vmatpush1.msra.mxu0 %v862
    %3423 = vmatprep.subr.mxu0 %v866
    %3424 = vmatpush1.msra.mxu0 %v865
    %3425 = vmatprep.subr.mxu0 0.0
    %3426 = vmatpush1.msra.mxu0 0.0
    %3427 = vmatprep.subr.mxu0 0.0
    %3428 = vmatpush1.msra.mxu0 0.0
    %3429 = vmatprep.subr.mxu0 0.0
    %3430 = vmatpush1.msra.mxu0 0.0
    %3431 = vmatprep.subr.mxu0 0.0
    %3432 = vmatpush1.msra.mxu0 0.0
    %3433 = vmatprep.subr.mxu0 0.0
    %3434 = vmatpush1.msra.mxu0 0.0
    %3435 = vmatprep.subr.mxu0 0.0
    %3436 = vmatpush1.msra.mxu0 0.0
    %3437 = vmatprep.subr.mxu0 0.0
    %3438 = vmatpush1.msra.mxu0 0.0
    %3439 = vmatprep.subr.mxu0 0.0
    %3440 = vmatpush1.msra.mxu0 0.0
    %3441 = vmatprep.subr.mxu0 0.0
    %3442 = vmatpush1.msra.mxu0 0.0
    %3443 = vmatprep.subr.mxu0 0.0
    %3444 = vmatpush1.msra.mxu0 0.0
    %3445 = vmatprep.subr.mxu0 0.0
    %3446 = vmatpush1.msra.mxu0 0.0
    %3447 = vmatprep.subr.mxu0 0.0
    %3448 = vmatpush1.msra.mxu0 0.0
    %3449 = vmatprep.subr.mxu0 0.0
    %3450 = vmatpush1.msra.mxu0 0.0
    %3451 = vmatprep.subr.mxu0 0.0
    %3452 = vmatpush1.msra.mxu0 0.0
    %3453 = vmatprep.subr.mxu0 0.0
    %3454 = vmatpush1.msra.mxu0 0.0
    %3455 = vmatprep.subr.mxu0 0.0
    %3456 = vmatpush1.msra.mxu0 0.0
    %3457 = vmatprep.mubr.f32.mxu0 0.0
    %3458 = vmatmul.mubr.f32.gmra.mrb[0].mxu0 %v3391
    %v3459 = vpop.f32.mrb[0].mxu0
    %v3460 = vadd.f32 %v876, %v3459
    %v3461 = vpop.f32.mrb[0].mxu0
    %v3462 = vadd.f32 %v880, %v3461
    %3463 = vdwg.mxu0
    %3464 = vmatprep.subr.mxu0 0.0
    %3465 = vmatpush1.msra.mxu0 %v822
    %3466 = vmatprep.subr.mxu0 0.0
    %3467 = vmatpush1.msra.mxu0 %v825
    %3468 = vmatprep.subr.mxu0 0.0
    %3469 = vmatpush1.msra.mxu0 %v828
    %3470 = vmatprep.subr.mxu0 0.0
    %3471 = vmatpush1.msra.mxu0 %v831
    %3472 = vmatprep.subr.mxu0 0.0
    %3473 = vmatpush1.msra.mxu0 %v834
    %3474 = vmatprep.subr.mxu0 0.0
    %3475 = vmatpush1.msra.mxu0 %v837
    %3476 = vmatprep.subr.mxu0 0.0
    %3477 = vmatpush1.msra.mxu0 %v840
    %3478 = vmatprep.subr.mxu0 0.0
    %3479 = vmatpush1.msra.mxu0 %v843
    %3480 = vmatprep.subr.mxu0 0.0
    %3481 = vmatpush1.msra.mxu0 %v846
    %3482 = vmatprep.subr.mxu0 0.0
    %3483 = vmatpush1.msra.mxu0 %v849
    %3484 = vmatprep.subr.mxu0 0.0
    %3485 = vmatpush1.msra.mxu0 %v852
    %3486 = vmatprep.subr.mxu0 0.0
    %3487 = vmatpush1.msra.mxu0 %v855
    %3488 = vmatprep.subr.mxu0 0.0
    %3489 = vmatpush1.msra.mxu0 %v858
    %3490 = vmatprep.subr.mxu0 0.0
    %3491 = vmatpush1.msra.mxu0 %v861
    %3492 = vmatprep.subr.mxu0 0.0
    %3493 = vmatpush1.msra.mxu0 %v864
    %3494 = vmatprep.subr.mxu0 0.0
    %3495 = vmatpush1.msra.mxu0 %v867
    %3496 = vmatprep.subr.mxu0 0.0
    %3497 = vmatpush1.msra.mxu0 0.0
    %3498 = vmatprep.subr.mxu0 0.0
    %3499 = vmatpush1.msra.mxu0 0.0
    %3500 = vmatprep.subr.mxu0 0.0
    %3501 = vmatpush1.msra.mxu0 0.0
    %3502 = vmatprep.subr.mxu0 0.0
    %3503 = vmatpush1.msra.mxu0 0.0
    %3504 = vmatprep.subr.mxu0 0.0
    %3505 = vmatpush1.msra.mxu0 0.0
    %3506 = vmatprep.subr.mxu0 0.0
    %3507 = vmatpush1.msra.mxu0 0.0
    %3508 = vmatprep.subr.mxu0 0.0
    %3509 = vmatpush1.msra.mxu0 0.0
    %3510 = vmatprep.subr.mxu0 0.0
    %3511 = vmatpush1.msra.mxu0 0.0
    %3512 = vmatprep.subr.mxu0 0.0
    %3513 = vmatpush1.msra.mxu0 0.0
    %3514 = vmatprep.subr.mxu0 0.0
    %3515 = vmatpush1.msra.mxu0 0.0
    %3516 = vmatprep.subr.mxu0 0.0
    %3517 = vmatpush1.msra.mxu0 0.0
    %3518 = vmatprep.subr.mxu0 0.0
    %3519 = vmatpush1.msra.mxu0 0.0
    %3520 = vmatprep.subr.mxu0 0.0
    %3521 = vmatpush1.msra.mxu0 0.0
    %3522 = vmatprep.subr.mxu0 0.0
    %3523 = vmatpush1.msra.mxu0 0.0
    %3524 = vmatprep.subr.mxu0 0.0
    %3525 = vmatpush1.msra.mxu0 0.0
    %3526 = vmatprep.subr.mxu0 0.0
    %3527 = vmatpush1.msra.mxu0 0.0
    %3528 = vmatprep.mubr.f32.mxu0 0.0
    %3529 = vmatmul.mubr.f32.gmra.mrb[0].mxu0 %v3391
    %v3530 = vpop.f32.mrb[0].mxu0
    %v3531 = vadd.f32 %v884, %v3530
    %v3532 = vpop.f32.mrb[0].mxu0
    %3533 = vdwg.mxu0
    %v3535 = vrot.slane %v3460, 4
    %v3537 = vadd.f32 %v3387, %v3535
    %v3538 = vxor.u32 %v3537, 2147483648
    %v3539 = vmul.f32 %v3538, 1.442695
    %v3540 = vpow.pop %v3539
    %v3541 = vadd.f32 %v3540, 1.0
    %v3542 = vrcp.pop %v3541
    %v3543 = vmul.f32 1.0, %v3542
    %v3545 = vrot.slane %v3462, 4
    %v3547 = vadd.f32 %v3388, %v3545
    %v3548 = vxor.u32 %v3547, 2147483648
    %v3549 = vmul.f32 %v3548, 1.442695
    %v3550 = vpow.pop %v3549
    %v3551 = vadd.f32 %v3550, 1.0
    %v3552 = vrcp.pop %v3551
    %v3553 = vmul.f32 1.0, %v3552
    %v3555 = vrot.slane %v3531, 4
    %v3557 = vmul.f32 %v3543, %v3555
    %v3558 = vadd.f32 %v3389, %v3557
    %v3559 = vtanh.pop %v3558
    %v3560 = vsub.f32 1.0, %v3553
    %v3561 = vmul.f32 %v3560, %v3559
    %v3562 = vrot.slane %v3384, 6
    %v3564 = vmul.f32 %v3553, %v3562
    %v3565 = vadd.f32 %v3561, %v3564
    %3566 = vst.msk [vmem:[%s1235 - $0x4] sm:$0x30] %vm1418, %v3565
    %3567 = vst.msk [vmem:[%s1232 - $0x4] sm:$0x30] %vm1421, %v3565
    %v3568 = vld [vmem:[#allocation2 + $0x48] sm:$0xc0]
    %v3569 = vld [vmem:[#allocation2 + $0x50] sm:$0xc0]
    %v3570 = vld [vmem:[#allocation2 + $0x58] sm:$0xc0]
    %v3572 = vrot.slane %v3565, 4
    %3574 = vmatprep.subr.mxu0 %v821
    %3575 = vmatpush1.msra.mxu0 %v820
    %3576 = vmatprep.subr.mxu0 %v824
    %3577 = vmatpush1.msra.mxu0 %v823
    %3578 = vmatprep.subr.mxu0 %v827
    %3579 = vmatpush1.msra.mxu0 %v826
    %3580 = vmatprep.subr.mxu0 %v830
    %3581 = vmatpush1.msra.mxu0 %v829
    %3582 = vmatprep.subr.mxu0 %v833
    %3583 = vmatpush1.msra.mxu0 %v832
    %3584 = vmatprep.subr.mxu0 %v836
    %3585 = vmatpush1.msra.mxu0 %v835
    %3586 = vmatprep.subr.mxu0 %v839
    %3587 = vmatpush1.msra.mxu0 %v838
    %3588 = vmatprep.subr.mxu0 %v842
    %3589 = vmatpush1.msra.mxu0 %v841
    %3590 = vmatprep.subr.mxu0 %v845
    %3591 = vmatpush1.msra.mxu0 %v844
    %3592 = vmatprep.subr.mxu0 %v848
    %3593 = vmatpush1.msra.mxu0 %v847
    %3594 = vmatprep.subr.mxu0 %v851
    %3595 = vmatpush1.msra.mxu0 %v850
    %3596 = vmatprep.subr.mxu0 %v854
    %3597 = vmatpush1.msra.mxu0 %v853
    %3598 = vmatprep.subr.mxu0 %v857
    %3599 = vmatpush1.msra.mxu0 %v856
    %3600 = vmatprep.subr.mxu0 %v860
    %3601 = vmatpush1.msra.mxu0 %v859
    %3602 = vmatprep.subr.mxu0 %v863
    %3603 = vmatpush1.msra.mxu0 %v862
    %3604 = vmatprep.subr.mxu0 %v866
    %3605 = vmatpush1.msra.mxu0 %v865
    %3606 = vmatprep.subr.mxu0 0.0
    %3607 = vmatpush1.msra.mxu0 0.0
    %3608 = vmatprep.subr.mxu0 0.0
    %3609 = vmatpush1.msra.mxu0 0.0
    %3610 = vmatprep.subr.mxu0 0.0
    %3611 = vmatpush1.msra.mxu0 0.0
    %3612 = vmatprep.subr.mxu0 0.0
    %3613 = vmatpush1.msra.mxu0 0.0
    %3614 = vmatprep.subr.mxu0 0.0
    %3615 = vmatpush1.msra.mxu0 0.0
    %3616 = vmatprep.subr.mxu0 0.0
    %3617 = vmatpush1.msra.mxu0 0.0
    %3618 = vmatprep.subr.mxu0 0.0
    %3619 = vmatpush1.msra.mxu0 0.0
    %3620 = vmatprep.subr.mxu0 0.0
    %3621 = vmatpush1.msra.mxu0 0.0
    %3622 = vmatprep.subr.mxu0 0.0
    %3623 = vmatpush1.msra.mxu0 0.0
    %3624 = vmatprep.subr.mxu0 0.0
    %3625 = vmatpush1.msra.mxu0 0.0
    %3626 = vmatprep.subr.mxu0 0.0
    %3627 = vmatpush1.msra.mxu0 0.0
    %3628 = vmatprep.subr.mxu0 0.0
    %3629 = vmatpush1.msra.mxu0 0.0
    %3630 = vmatprep.subr.mxu0 0.0
    %3631 = vmatpush1.msra.mxu0 0.0
    %3632 = vmatprep.subr.mxu0 0.0
    %3633 = vmatpush1.msra.mxu0 0.0
    %3634 = vmatprep.subr.mxu0 0.0
    %3635 = vmatpush1.msra.mxu0 0.0
    %3636 = vmatprep.subr.mxu0 0.0
    %3637 = vmatpush1.msra.mxu0 0.0
    %3638 = vmatprep.mubr.f32.mxu0 0.0
    %3639 = vmatmul.mubr.f32.gmra.mrb[0].mxu0 %v3572
    %v3640 = vpop.f32.mrb[0].mxu0
    %v3641 = vadd.f32 %v876, %v3640
    %v3642 = vpop.f32.mrb[0].mxu0
    %v3643 = vadd.f32 %v880, %v3642
    %3644 = vdwg.mxu0
    %3645 = vmatprep.subr.mxu0 0.0
    %3646 = vmatpush1.msra.mxu0 %v822
    %3647 = vmatprep.subr.mxu0 0.0
    %3648 = vmatpush1.msra.mxu0 %v825
    %3649 = vmatprep.subr.mxu0 0.0
    %3650 = vmatpush1.msra.mxu0 %v828
    %3651 = vmatprep.subr.mxu0 0.0
    %3652 = vmatpush1.msra.mxu0 %v831
    %3653 = vmatprep.subr.mxu0 0.0
    %3654 = vmatpush1.msra.mxu0 %v834
    %3655 = vmatprep.subr.mxu0 0.0
    %3656 = vmatpush1.msra.mxu0 %v837
    %3657 = vmatprep.subr.mxu0 0.0
    %3658 = vmatpush1.msra.mxu0 %v840
    %3659 = vmatprep.subr.mxu0 0.0
    %3660 = vmatpush1.msra.mxu0 %v843
    %3661 = vmatprep.subr.mxu0 0.0
    %3662 = vmatpush1.msra.mxu0 %v846
    %3663 = vmatprep.subr.mxu0 0.0
    %3664 = vmatpush1.msra.mxu0 %v849
    %3665 = vmatprep.subr.mxu0 0.0
    %3666 = vmatpush1.msra.mxu0 %v852
    %3667 = vmatprep.subr.mxu0 0.0
    %3668 = vmatpush1.msra.mxu0 %v855
    %3669 = vmatprep.subr.mxu0 0.0
    %3670 = vmatpush1.msra.mxu0 %v858
    %3671 = vmatprep.subr.mxu0 0.0
    %3672 = vmatpush1.msra.mxu0 %v861
    %3673 = vmatprep.subr.mxu0 0.0
    %3674 = vmatpush1.msra.mxu0 %v864
    %3675 = vmatprep.subr.mxu0 0.0
    %3676 = vmatpush1.msra.mxu0 %v867
    %3677 = vmatprep.subr.mxu0 0.0
    %3678 = vmatpush1.msra.mxu0 0.0
    %3679 = vmatprep.subr.mxu0 0.0
    %3680 = vmatpush1.msra.mxu0 0.0
    %3681 = vmatprep.subr.mxu0 0.0
    %3682 = vmatpush1.msra.mxu0 0.0
    %3683 = vmatprep.subr.mxu0 0.0
    %3684 = vmatpush1.msra.mxu0 0.0
    %3685 = vmatprep.subr.mxu0 0.0
    %3686 = vmatpush1.msra.mxu0 0.0
    %3687 = vmatprep.subr.mxu0 0.0
    %3688 = vmatpush1.msra.mxu0 0.0
    %3689 = vmatprep.subr.mxu0 0.0
    %3690 = vmatpush1.msra.mxu0 0.0
    %3691 = vmatprep.subr.mxu0 0.0
    %3692 = vmatpush1.msra.mxu0 0.0
    %3693 = vmatprep.subr.mxu0 0.0
    %3694 = vmatpush1.msra.mxu0 0.0
    %3695 = vmatprep.subr.mxu0 0.0
    %3696 = vmatpush1.msra.mxu0 0.0
    %3697 = vmatprep.subr.mxu0 0.0
    %3698 = vmatpush1.msra.mxu0 0.0
    %3699 = vmatprep.subr.mxu0 0.0
    %3700 = vmatpush1.msra.mxu0 0.0
    %3701 = vmatprep.subr.mxu0 0.0
    %3702 = vmatpush1.msra.mxu0 0.0
    %3703 = vmatprep.subr.mxu0 0.0
    %3704 = vmatpush1.msra.mxu0 0.0
    %3705 = vmatprep.subr.mxu0 0.0
    %3706 = vmatpush1.msra.mxu0 0.0
    %3707 = vmatprep.subr.mxu0 0.0
    %3708 = vmatpush1.msra.mxu0 0.0
    %3709 = vmatprep.mubr.f32.mxu0 0.0
    %3710 = vmatmul.mubr.f32.gmra.mrb[0].mxu0 %v3572
    %v3711 = vpop.f32.mrb[0].mxu0
    %v3712 = vadd.f32 %v884, %v3711
    %v3713 = vpop.f32.mrb[0].mxu0
    %3714 = vdwg.mxu0
    %v3716 = vrot.slane %v3641, 2
    %v3718 = vadd.f32 %v3568, %v3716
    %v3719 = vxor.u32 %v3718, 2147483648
    %v3720 = vmul.f32 %v3719, 1.442695
    %v3721 = vpow.pop %v3720
    %v3722 = vadd.f32 %v3721, 1.0
    %v3723 = vrcp.pop %v3722
    %v3724 = vmul.f32 1.0, %v3723
    %v3726 = vrot.slane %v3643, 2
    %v3728 = vadd.f32 %v3569, %v3726
    %v3729 = vxor.u32 %v3728, 2147483648
    %v3730 = vmul.f32 %v3729, 1.442695
    %v3731 = vpow.pop %v3730
    %v3732 = vadd.f32 %v3731, 1.0
    %v3733 = vrcp.pop %v3732
    %v3734 = vmul.f32 1.0, %v3733
    %v3736 = vrot.slane %v3712, 2
    %v3738 = vmul.f32 %v3724, %v3736
    %v3739 = vadd.f32 %v3570, %v3738
    %v3740 = vtanh.pop %v3739
    %v3741 = vsub.f32 1.0, %v3734
    %v3742 = vmul.f32 %v3741, %v3740
    %v3743 = vrot.slane %v3565, 6
    %v3745 = vmul.f32 %v3734, %v3743
    %v3746 = vadd.f32 %v3742, %v3745
    %3747 = vst.msk [vmem:[%s1052 - $0x6] sm:$0xc0] %vm1603, %v3746
    %3748 = vst.msk [vmem:[#allocation9 - $0x6] sm:$0xc0] %vm1606, %v3746
    // Predicated region
    $region46: #{tpu_custom_call.1} parent=1 // pred_check
      _
    $region47: #{tpu_custom_call.1} parent=1 // pred_check_branch
      %3750 = sbr.rel (0) target = $region49
    $region48: #{tpu_custom_call.1} parent=1 // pred_region
      %s3752 = ssub.s32 512, 512
      %3753 = vsyncadd [#allocation5], %s3752
      %s3754 = sshll.u32 [#allocation9], 4
      %s3755 = int_to_ptr.vmem [resolvable:$true] %s3754
      %3760 = dma.vmem_to_hbm [thread:$0]  %s3755, 512, %s8, [#allocation5], 32, 32, 2
    $region49: #{tpu_custom_call.1} parent=1 // pred_fallthru
      _
    // Predicated region
    $region50: #{tpu_custom_call.1} parent=1 // pred_check
      _
    $region51: #{tpu_custom_call.1} parent=1 // pred_check_branch
      %3762 = sbr.rel (0) target = $region53
    $region52: #{tpu_custom_call.1} parent=1 // pred_region
      %3763 = dma.done [#allocation5], 512
    $region53: #{tpu_custom_call.1} parent=1 // pred_fallthru
      _
    %3764 = vsyncpa [#allocation4], 1
    %3765 = vsyncpa [#allocation7], 1
    %3766 = vsyncpa [#allocation5], 1

</llo_original>
